<compile_context>
chip_gen: v6e
topology: v6e:2x2x1
jax: 0.10.0
libtpu: 0.0.40
codegen_flags: <defaults>
</compile_context>

<pallas_src>
import functools

import numpy as np
import jax
import jax.numpy as jnp
from jax import lax
from jax.experimental import pallas as pl
from jax.experimental.pallas import tpu as pltpu

TAU = 2.0 * np.pi


def _round_up(x, m):
    return (x + m - 1) // m * m


def _cdiv(a, b):
    return -(-a // b)


# ----------------------------------------------------------------------------
# Kernel 1: pitch-adaptive windowing + zero-mean correction + power spectrum
# ----------------------------------------------------------------------------
def _window_power_kernel(frames_ref, f0_ref, base_ref, alt_ref, basis_ref,
                         ps_ref, nyq_ref, *,
                         sample_rate, window_length_ratio, k_pad, compute_dtype):
    frames = frames_ref[...].astype(jnp.float32)                     # (TR, L)
    f0 = f0_ref[...]                                                 # (TR, 1)
    base = base_ref[...]                                             # (1, L) centered index
    alt = alt_ref[...]                                               # (1, L) (-1)^n

    half_len = jnp.round(0.5 * window_length_ratio * sample_rate / f0)     # (TR, 1)
    position = base * (1.0 / (0.5 * window_length_ratio * sample_rate))    # (1, L)

    # pitch-adaptive Hanning window (WORLD CheapTrick GetWindowedWaveform)
    window = 0.5 * jnp.cos(jnp.pi * position * f0) + 0.5              # (TR, L)
    window = jnp.where(jnp.abs(base) <= half_len, window, 0.0)
    # normalize_window=True -> unit-energy window
    window = window * lax.rsqrt(jnp.sum(window * window, axis=1, keepdims=True))

    wav = frames * window
    # TODO(synk): reference adds randn()*1e-12 safeguard noise here (stochastic, omitted).
    coef = jnp.sum(wav, axis=1, keepdims=True) / jnp.sum(window, axis=1, keepdims=True)
    wav = wav - window * coef                                         # zero-mean under window

    # Fused rfft (cos | sin) matmul over bins 0..Kp-1: bf16 inputs, f32 accumulate.
    cs = jnp.dot(wav.astype(compute_dtype), basis_ref[...],
                 preferred_element_type=jnp.float32)                  # (TR, 2*Kp)
    re = cs[:, :k_pad]
    im = cs[:, k_pad:]
    ps_ref[...] = re * re + im * im                                   # bins 0..Kp-1 (sin k=0 col is 0)

    # Nyquist bin (k = L/2): real part is sum_n wav[n]*(-1)^n, imag part is 0.
    nyq_re = jnp.sum(wav * alt, axis=1, keepdims=True)                # (TR, 1)
    nyq_ref[...] = nyq_re * nyq_re


# ----------------------------------------------------------------------------
# Kernel 2: log -> cepstrum (irfft matmul) -> lifters -> hfft matmul
#           (Nyquist input/output handled via rank-1 terms / lane reductions)
# ----------------------------------------------------------------------------
def _cheaptrick_lifter_kernel(sp_ref, spn_ref, f0_ref, quef_ref, alt_ref, wkalt_ref,
                              c_irfft_ref, c_hfft_ref, out_ref, onyq_ref, *,
                              q1, eps, inv_l, nyq_quef, nyq_sign, compute_dtype):
    # TODO(synk): reference adds abs(randn)*finfo.eps noise; deterministic eps floor here.
    lp = jnp.log(jnp.maximum(sp_ref[...], 0.0) + eps)                # (TR, Kp)
    lpn = jnp.log(jnp.maximum(spn_ref[...], 0.0) + eps)              # (TR, 1)  Nyquist bin
    alt = alt_ref[...]                                               # (1, Kp) (-1)^n (n < Km)
    wkalt = wkalt_ref[...]                                           # (1, Kp) wk[n]*(-1)^n

    # irfft: cepstrum n = 0..Km-1 via matmul + rank-1 Nyquist-input correction.
    cep = jnp.dot(lp.astype(compute_dtype), c_irfft_ref[...],
                  preferred_element_type=jnp.float32)                # (TR, Kp)
    cep = cep + (lpn * inv_l) * alt
    # cepstrum n = Km (lane reduction + Nyquist input).
    cep_n = (jnp.sum(lp * wkalt, axis=1, keepdims=True) + nyq_sign * lpn) * inv_l

    f0 = f0_ref[...]                                                 # (TR, 1)
    q = quef_ref[...]                                                # (1, Kp) quefrency n/sr
    pz = jnp.pi * (f0 * q)
    s = jnp.sin(pz)
    smoothing_lifter = jnp.where(q == 0.0, 1.0, s / jnp.where(q == 0.0, 1.0, pz))
    # (1 - 2*q1) + 2*q1*cos(2*pi*z) == 1 - 4*q1*sin(pi*z)**2  (reuses s; no extra cos)
    compensation_lifter = 1.0 - 4.0 * q1 * (s * s)
    pzn = jnp.pi * (f0 * nyq_quef)
    sn = jnp.sin(pzn)
    sl_n = sn / pzn
    cl_n = 1.0 - 4.0 * q1 * (sn * sn)

    lift = cep * smoothing_lifter * compensation_lifter              # (TR, Kp)
    lift_n = cep_n * sl_n * cl_n                                     # (TR, 1)

    # hfft: output bins 0..Km-1 via matmul + rank-1 term from cepstrum bin Km.
    out = jnp.dot(lift.astype(compute_dtype), c_hfft_ref[...],
                  preferred_element_type=jnp.float32)
    out_ref[...] = out + lift_n * alt
    # hfft output bin Km (lane reduction).
    onyq_ref[...] = jnp.sum(lift * wkalt, axis=1, keepdims=True) + nyq_sign * lift_n


# ----------------------------------------------------------------------------
# Plain-JAX glue: WORLD DCCorrection / LinearSmoothing (fractional-index interp)
# ----------------------------------------------------------------------------
def _dc_correction(ps, f0, sample_rate, fft_length):
    # ps holds bins 0..Kp-1 only; DC correction never reaches the Nyquist bin
    # for any physical f0 (< sample_rate/2).
    Kp = ps.shape[-1]
    rate = sample_rate / fft_length
    k = jnp.arange(Kp, dtype=ps.dtype)[None, :]                       # (1, Kp)
    p = f0 / rate - k                                                 # fractional index at f0 - f_k
    i0 = jnp.clip(jnp.floor(p), 0, Kp - 2).astype(jnp.int32)
    frac = p - i0.astype(ps.dtype)
    y0 = jnp.take_along_axis(ps, i0, axis=-1)
    y1 = jnp.take_along_axis(ps, i0 + 1, axis=-1)
    replica = y0 + (y1 - y0) * frac
    # TODO(synk): verify WORLD/diffsptk boundary handling at k*rate == f0 (strict <).
    mask = (k * rate) < f0
    return jnp.where(mask, ps + replica, ps)


def _linear_smoothing(ps_main, ps_nyq, width, sample_rate, fft_length, k_main, mirror):
    # ps_main: (Rp, Kp) bins 0..k_main-1 (lane-dense), ps_nyq: (Rp, 1) bin k_main.
    rate = sample_rate / fft_length
    K = k_main + 1
    M = mirror
    j = np.arange(K + 2 * M)
    src = np.abs(j - M)
    src = np.where(src > K - 1, 2 * (K - 1) - src, src)               # reflect at both ends
    is_nyq = jnp.asarray((src == k_main)[None, :])
    src_main = jnp.asarray(np.minimum(src, k_main - 1))
    mirr = jnp.where(is_nyq, ps_nyq, ps_main[:, src_main])            # (Rp, K + 2M)

    # Remove a per-row baseline before the cumsum (cancellation fix); exact under
    # linear interpolation, added back at the end.
    base = jnp.mean(mirr, axis=-1, keepdims=True)
    seg = jnp.cumsum((mirr - base) * rate, axis=-1)                   # cumulative integral
    origin = -(M - 0.5) * rate

    def interp(freq):
        p = (freq - origin) / rate
        i0 = jnp.clip(jnp.floor(p), 0, seg.shape[-1] - 2).astype(jnp.int32)
        frac = p - i0.astype(ps_main.dtype)
        y0 = jnp.take_along_axis(seg, i0, axis=-1)
        y1 = jnp.take_along_axis(seg, i0 + 1, axis=-1)
        return y0 + (y1 - y0) * frac

    fk = jnp.arange(ps_main.shape[-1], dtype=ps_main.dtype)[None, :] * rate
    low = interp(fk - width / 2.0)
    high = interp(fk - width / 2.0 + width)
    out_main = (high - low) / width + base

    f_nyq = jnp.full((1, 1), k_main * rate, ps_main.dtype)
    low_n = interp(f_nyq - width / 2.0)
    high_n = interp(f_nyq - width / 2.0 + width)
    out_nyq = (high_n - low_n) / width + base
    return out_main, out_nyq


# ----------------------------------------------------------------------------
# Module wrapper
# ----------------------------------------------------------------------------
class SpectrumExtractionByCheapTrick:
    def __init__(self, frame_period, sample_rate, fft_length, *,
                 default_f0=500.0, q1=-0.15, use_bf16=True):
        self.frame_period = frame_period
        self.sample_rate = sample_rate
        self.fft_length = fft_length
        self.f_min = 3 * sample_rate / (fft_length - 3)
        if default_f0 < self.f_min:
            raise ValueError(f"default_f0 must be at least {self.f_min}.")
        min_fft_length = 2 ** (1 + int(np.log(3 * sample_rate / self.f_min + 1) / np.log(2)))
        if fft_length < min_fft_length:
            raise ValueError(f"fft_length must be at least {min_fft_length}.")
        assert fft_length % 2 == 0, "fft_length must be even."
        self.q1 = q1
        self.default_f0 = default_f0

        self.io_dtype = jnp.bfloat16 if use_bf16 else jnp.float32
        self.compute_dtype = jnp.bfloat16 if use_bf16 else jnp.float32

        L = fft_length
        K = L // 2 + 1                              # one-sided length (output bins)
        Km = L // 2                                 # bins handled by the matmuls
        Kp = _round_up(Km, 128)                     # lane-dense width (== Km for power-of-2 L)
        self.k_out, self.k_main, self.k_pad = K, Km, Kp

        # Fused rfft basis (L, 2*Kp): [cos | sin] for bins 0..Km-1 (no Nyquist column).
        n = np.arange(L)[:, None].astype(np.float64)
        k = np.arange(Km)[None, :].astype(np.float64)
        ang = TAU * n * k / L
        basis = np.zeros((L, 2 * Kp), np.float64)
        basis[:, :Km] = np.cos(ang)
        basis[:, Kp:Kp + Km] = np.sin(ang)
        self.rfft_basis = jnp.asarray(basis, self.compute_dtype)

        # irfft / hfft cosine bases over bins/quefrencies 0..Km-1 (Nyquist is rank-1).
        wk = np.ones(Km, np.float64)
        wk[1:] = 2.0
        kk = np.arange(Km)[:, None].astype(np.float64)
        nn = np.arange(Km)[None, :].astype(np.float64)
        cosmat = np.cos(TAU * kk * nn / L)
        c_irfft = np.zeros((Kp, Kp), np.float64)
        c_irfft[:Km, :Km] = wk[:, None] * cosmat / L                  # log-spec -> cepstrum
        c_hfft = np.zeros((Kp, Kp), np.float64)
        c_hfft[:Km, :Km] = wk[:, None] * cosmat                       # cepstrum -> hfft
        self.c_irfft = jnp.asarray(c_irfft, self.compute_dtype)
        self.c_hfft = jnp.asarray(c_hfft, self.compute_dtype)

        # Hoisted iota-derived constant rows.
        self.base_row = jnp.asarray((np.arange(L) - L // 2)[None, :], jnp.float32)
        self.alt_time = jnp.asarray(((-1.0) ** np.arange(L))[None, :], jnp.float32)
        self.quef_row = jnp.asarray((np.arange(Kp) / sample_rate)[None, :], jnp.float32)
        alt_s = np.zeros((1, Kp), np.float64)
        alt_s[0, :Km] = (-1.0) ** np.arange(Km)
        self.alt_spec = jnp.asarray(alt_s, jnp.float32)
        wkalt = np.zeros((1, Kp), np.float64)
        wkalt[0, :Km] = wk * ((-1.0) ** np.arange(Km))
        self.wkalt_spec = jnp.asarray(wkalt, jnp.float32)

        self.nyq_quef = float(Km) / sample_rate
        self.nyq_sign = 1.0 if (Km % 2 == 0) else -1.0                # cos(pi * Km)

        # Shrunk mirror margin for linear smoothing.
        # TODO(synk): margin assumes f0 <= max(default_f0, sample_rate/4); higher f0
        # clamps the smoothing window at the spectrum edges.
        rate = sample_rate / L
        f0_cap = max(default_f0, sample_rate / 4.0)
        self.mirror = int(min(K - 1, int(np.ceil((2.0 / 3.0) * f0_cap / (2.0 * rate))) + 2))

    # ------------------------------------------------------------------
    def _row_tiling(self, R):
        if R <= 256:
            return _round_up(max(R, 16), 16), 1
        steps = _cdiv(R, 256)
        if steps % 2:                          # even step count -> v7x 2-TC sharding
            steps += 1
        TR = _round_up(_cdiv(R, steps), 16)
        steps = _cdiv(R, TR)
        if steps % 2:
            steps += 1
        return TR, steps

    # ------------------------------------------------------------------
    def __call__(self, x, f0):
        B, T = x.shape
        _, N = f0.shape
        L = self.fft_length
        K, Km, Kp = self.k_out, self.k_main, self.k_pad
        sr = self.sample_rate
        cbytes = jnp.dtype(self.compute_dtype).itemsize

        f0 = jnp.where(f0 <= self.f_min, self.default_f0, f0).astype(jnp.float32)
        f0r = f0.reshape(B * N, 1)

        # Framing (glue: pure data movement, static indices), gathered in bf16.
        # TODO(synk): could stream frames straight from x with per-row-tile DMA to
        # avoid materializing this ~(L/frame_period)x expanded array in HBM.
        base_index = np.arange(L) - L // 2
        origin = np.arange(N) * self.frame_period
        safe_idx = np.clip(origin[:, None] + base_index[None, :], 0, T - 1)
        frames = jnp.take(x.astype(self.io_dtype), jnp.asarray(safe_idx), axis=1)  # (B, N, L)
        frames = frames.reshape(B * N, L)

        R = B * N
        TR, steps = self._row_tiling(R)
        Rp = TR * steps
        grid = (steps,)

        if Rp != R:
            frames = jnp.pad(frames, ((0, Rp - R), (0, 0)))
            f0p = jnp.pad(f0r, ((0, Rp - R), (0, 0)), constant_values=self.default_f0)
        else:
            f0p = f0r

        params = pltpu.CompilerParams(
            dimension_semantics=("parallel",),
            vmem_limit_bytes=32 * 1024 * 1024,
        )

        # ---- Kernel 1: window + power spectrum -------------------------------
        cost1 = pl.CostEstimate(
            flops=4 * Rp * L * Kp + 20 * Rp * L,
            transcendentals=Rp * L,
            bytes_accessed=Rp * L * jnp.dtype(self.io_dtype).itemsize
            + L * 2 * Kp * cbytes + Rp * Kp * 4 + Rp * 12,
        )
        ps_main, ps_nyq = pl.pallas_call(
            functools.partial(_window_power_kernel, sample_rate=sr,
                              window_length_ratio=3.0, k_pad=Kp,
                              compute_dtype=self.compute_dtype),
            out_shape=(jax.ShapeDtypeStruct((Rp, Kp), jnp.float32),
                       jax.ShapeDtypeStruct((Rp, 1), jnp.float32)),
            grid=grid,
            in_specs=[
                pl.BlockSpec((TR, L), lambda i: (i, 0)),
                pl.BlockSpec((TR, 1), lambda i: (i, 0)),
                pl.BlockSpec((1, L), lambda i: (0, 0)),
                pl.BlockSpec((1, L), lambda i: (0, 0)),
                pl.BlockSpec((L, 2 * Kp), lambda i: (0, 0)),
            ],
            out_specs=[
                pl.BlockSpec((TR, Kp), lambda i: (i, 0)),
                pl.BlockSpec((TR, 1), lambda i: (i, 0)),
            ],
            compiler_params=params,
            cost_estimate=cost1,
        )(frames, f0p, self.base_row, self.alt_time, self.rfft_basis)

        # ---- XLA glue on lane-dense (Rp, Kp) slabs (no slice/re-pad) ---------
        ps_main = _dc_correction(ps_main, f0p, sr, L)
        sp_main, sp_nyq = _linear_smoothing(ps_main, ps_nyq, f0p * (2.0 / 3.0),
                                            sr, L, Km, self.mirror)
        if Kp != Km:
            lane = jnp.arange(Kp)[None, :]
            sp_main = jnp.where(lane < Km, sp_main, 1.0)   # keep pad lanes benign

        # ---- Kernel 2: log -> cepstrum -> lifters -> log spectrum ------------
        eps = float(np.finfo(np.float32).eps)
        cost2 = pl.CostEstimate(
            flops=4 * Rp * Kp * Kp + 40 * Rp * Kp,
            transcendentals=2 * Rp * Kp,
            bytes_accessed=8 * Rp * Kp + 2 * Kp * Kp * cbytes + Rp * 16,
        )
        lps_main, lps_nyq = pl.pallas_call(
            functools.partial(_cheaptrick_lifter_kernel, q1=self.q1, eps=eps,
                              inv_l=1.0 / L, nyq_quef=self.nyq_quef,
                              nyq_sign=self.nyq_sign,
                              compute_dtype=self.compute_dtype),
            out_shape=(jax.ShapeDtypeStruct((Rp, Kp), jnp.float32),
                       jax.ShapeDtypeStruct((Rp, 1), jnp.float32)),
            grid=grid,
            in_specs=[
                pl.BlockSpec((TR, Kp), lambda i: (i, 0)),
                pl.BlockSpec((TR, 1), lambda i: (i, 0)),
                pl.BlockSpec((TR, 1), lambda i: (i, 0)),
                pl.BlockSpec((1, Kp), lambda i: (0, 0)),
                pl.BlockSpec((1, Kp), lambda i: (0, 0)),
                pl.BlockSpec((1, Kp), lambda i: (0, 0)),
                pl.BlockSpec((Kp, Kp), lambda i: (0, 0)),
                pl.BlockSpec((Kp, Kp), lambda i: (0, 0)),
            ],
            out_specs=[
                pl.BlockSpec((TR, Kp), lambda i: (i, 0)),
                pl.BlockSpec((TR, 1), lambda i: (i, 0)),
            ],
            compiler_params=params,
            cost_estimate=cost2,
        )(sp_main, sp_nyq, f0p, self.quef_row, self.alt_spec, self.wkalt_spec,
          self.c_irfft, self.c_hfft)

        out = jnp.concatenate([lps_main[:R, :Km], lps_nyq[:R]], axis=-1)
        return out.reshape(B, N, K)


if __name__ == "__main__":
    key = jax.random.PRNGKey(0)
    sample_rate = 8000
    frame_period = 80          # samples per frame hop
    fft_length = 512
    B, N = 2, 8
    T = frame_period * (N - 1) + fft_length   # 1072 samples

    kx, kf = jax.random.split(key)
    x = 0.1 * jax.random.normal(kx, (B, T), dtype=jnp.float32)
    f0 = jax.random.uniform(kf, (B, N), minval=100.0, maxval=400.0, dtype=jnp.float32)
    f0 = f0.at[:, 0].set(0.0)  # unvoiced frame -> replaced by default_f0

    module = SpectrumExtractionByCheapTrick(frame_period, sample_rate, fft_length)
    out = jax.block_until_ready(jax.jit(module.__call__)(x, f0))

    assert out.shape == (B, N, fft_length // 2 + 1), out.shape
    assert bool(jnp.all(jnp.isfinite(out)))
    print("KERNEL_OK")
</pallas_src>

<mosaic_0001>
module attributes {stable_mosaic.version = 11 : i64} {
  func.func @_window_power_kernel(%arg0: i32, %arg1: memref<16x512xbf16, #tpu.memory_space<vmem>>, %arg2: memref<16x1xf32, #tpu.memory_space<vmem>>, %arg3: memref<1x512xf32, #tpu.memory_space<vmem>>, %arg4: memref<1x512xf32, #tpu.memory_space<vmem>>, %arg5: memref<512x512xbf16, #tpu.memory_space<vmem>>, %arg6: memref<16x256xf32, #tpu.memory_space<vmem>>, %arg7: memref<16x1xf32, #tpu.memory_space<vmem>>) attributes {dimension_semantics = [#tpu.dimension_semantics<parallel>], iteration_bounds = array<i64: 1>, scalar_prefetch = 0 : i64, scratch_operands = 0 : i64, tpu.core_type = #tpu.core_type<tc>, window_params = [{transform_indices = @transform_0, window_bounds = array<i64: 16, 512>}, {transform_indices = @transform_1, window_bounds = array<i64: 16, 1>}, {pipeline_mode = #tpu.pipeline_mode<synchronous>, transform_indices = @transform_2, window_bounds = array<i64: 1, 512>}, {pipeline_mode = #tpu.pipeline_mode<synchronous>, transform_indices = @transform_3, window_bounds = array<i64: 1, 512>}, {pipeline_mode = #tpu.pipeline_mode<synchronous>, transform_indices = @transform_4, window_bounds = array<i64: 512, 512>}, {transform_indices = @transform_5, window_bounds = array<i64: 16, 256>}, {transform_indices = @transform_6, window_bounds = array<i64: 16, 1>}]} {
    %c0 = arith.constant 0 : index
    %c0_0 = arith.constant 0 : index
    %0 = vector.load %arg1[%c0, %c0_0] : memref<16x512xbf16, #tpu.memory_space<vmem>>, vector<16x512xbf16>
    %1 = arith.extf %0 : vector<16x512xbf16> to vector<16x512xf32>
    %c0_1 = arith.constant 0 : index
    %c0_2 = arith.constant 0 : index
    %2 = vector.load %arg2[%c0_1, %c0_2] : memref<16x1xf32, #tpu.memory_space<vmem>>, vector<16x1xf32>
    %c0_3 = arith.constant 0 : index
    %c0_4 = arith.constant 0 : index
    %3 = vector.load %arg3[%c0_3, %c0_4] : memref<1x512xf32, #tpu.memory_space<vmem>>, vector<1x512xf32>
    %c0_5 = arith.constant 0 : index
    %c0_6 = arith.constant 0 : index
    %4 = vector.load %arg4[%c0_5, %c0_6] : memref<1x512xf32, #tpu.memory_space<vmem>>, vector<1x512xf32>
    %cst = arith.constant 1.200000e+04 : f32
    %5 = vector.broadcast %cst : f32 to vector<16x1xf32>
    %6 = arith.divf %5, %2 : vector<16x1xf32>
    %7 = math.roundeven %6 : vector<16x1xf32>
    %cst_7 = arith.constant 8.33333324E-5 : f32
    %8 = vector.broadcast %cst_7 : f32 to vector<1x512xf32>
    %9 = arith.mulf %3, %8 : vector<1x512xf32>
    %cst_8 = arith.constant 3.14159274 : f32
    %10 = vector.broadcast %cst_8 : f32 to vector<1x512xf32>
    %11 = arith.mulf %10, %9 : vector<1x512xf32>
    %12 = vector.broadcast %11 : vector<1x512xf32> to vector<16x512xf32>
    %13 = vector.broadcast %2 : vector<16x1xf32> to vector<16x512xf32>
    %14 = arith.mulf %12, %13 : vector<16x512xf32>
    %15 = math.cos %14 : vector<16x512xf32>
    %cst_9 = arith.constant 5.000000e-01 : f32
    %16 = vector.broadcast %cst_9 : f32 to vector<16x512xf32>
    %17 = arith.mulf %16, %15 : vector<16x512xf32>
    %cst_10 = arith.constant 5.000000e-01 : f32
    %18 = vector.broadcast %cst_10 : f32 to vector<16x512xf32>
    %19 = arith.addf %17, %18 : vector<16x512xf32>
    %20 = math.absf %3 : vector<1x512xf32>
    %21 = vector.broadcast %20 : vector<1x512xf32> to vector<16x512xf32>
    %22 = vector.broadcast %7 : vector<16x1xf32> to vector<16x512xf32>
    %23 = arith.cmpf ole, %21, %22 : vector<16x512xf32>
    %cst_11 = arith.constant 0.000000e+00 : f32
    %24 = vector.broadcast %cst_11 : f32 to vector<16x512xf32>
    %25 = arith.select %23, %19, %24 : vector<16x512xi1>, vector<16x512xf32>
    %26 = arith.mulf %25, %25 : vector<16x512xf32>
    %cst_12 = arith.constant dense<0.000000e+00> : vector<16xf32>
    %27 = vector.multi_reduction <add>, %26, %cst_12 [1] : vector<16x512xf32> to vector<16xf32>
    %28 = vector.shape_cast %27 : vector<16xf32> to vector<16x1xf32>
    %29 = math.rsqrt %28 : vector<16x1xf32>
    %30 = vector.broadcast %29 : vector<16x1xf32> to vector<16x512xf32>
    %31 = arith.mulf %25, %30 : vector<16x512xf32>
    %32 = arith.mulf %1, %31 : vector<16x512xf32>
    %cst_13 = arith.constant dense<0.000000e+00> : vector<16xf32>
    %33 = vector.multi_reduction <add>, %32, %cst_13 [1] : vector<16x512xf32> to vector<16xf32>
    %34 = vector.shape_cast %33 : vector<16xf32> to vector<16x1xf32>
    %cst_14 = arith.constant dense<0.000000e+00> : vector<16xf32>
    %35 = vector.multi_reduction <add>, %31, %cst_14 [1] : vector<16x512xf32> to vector<16xf32>
    %36 = vector.shape_cast %35 : vector<16xf32> to vector<16x1xf32>
    %37 = arith.divf %34, %36 : vector<16x1xf32>
    %38 = vector.broadcast %37 : vector<16x1xf32> to vector<16x512xf32>
    %39 = arith.mulf %31, %38 : vector<16x512xf32>
    %40 = arith.subf %32, %39 : vector<16x512xf32>
    %41 = arith.truncf %40 : vector<16x512xf32> to vector<16x512xbf16>
    %c0_15 = arith.constant 0 : index
    %c0_16 = arith.constant 0 : index
    %42 = vector.load %arg5[%c0_15, %c0_16] : memref<512x512xbf16, #tpu.memory_space<vmem>>, vector<512x512xbf16>
    %cst_17 = arith.constant dense<0.000000e+00> : vector<16x512xf32>
    %43 = tpu.matmul %41, %42, %cst_17 {dimension_numbers = #tpu.dot_dimension_numbers<[1], [0], [0], [1], [0, 0, 1, 1], [], []>} : vector<16x512xbf16>, vector<512x512xbf16>, vector<16x512xf32> -> vector<16x512xf32>
    %44 = vector.extract_strided_slice %43 {offsets = [0, 0], sizes = [16, 256], strides = [1, 1]} : vector<16x512xf32> to vector<16x256xf32>
    %45 = vector.extract_strided_slice %43 {offsets = [0, 256], sizes = [16, 256], strides = [1, 1]} : vector<16x512xf32> to vector<16x256xf32>
    %46 = arith.mulf %44, %44 : vector<16x256xf32>
    %47 = arith.mulf %45, %45 : vector<16x256xf32>
    %48 = arith.addf %46, %47 : vector<16x256xf32>
    %c0_18 = arith.constant 0 : index
    %c0_19 = arith.constant 0 : index
    %49 = vector.load %arg6[%c0_18, %c0_19] : memref<16x256xf32, #tpu.memory_space<vmem>>, vector<16x256xf32>
    tpu.vector_store %arg6[%c0_18, %c0_19], %48 {strides = array<i32>} : memref<16x256xf32, #tpu.memory_space<vmem>>, vector<16x256xf32>,
    %50 = vector.broadcast %4 : vector<1x512xf32> to vector<16x512xf32>
    %51 = arith.mulf %40, %50 : vector<16x512xf32>
    %cst_20 = arith.constant dense<0.000000e+00> : vector<16xf32>
    %52 = vector.multi_reduction <add>, %51, %cst_20 [1] : vector<16x512xf32> to vector<16xf32>
    %53 = vector.shape_cast %52 : vector<16xf32> to vector<16x1xf32>
    %54 = arith.mulf %53, %53 : vector<16x1xf32>
    %c0_21 = arith.constant 0 : index
    %c0_22 = arith.constant 0 : index
    %55 = vector.load %arg7[%c0_21, %c0_22] : memref<16x1xf32, #tpu.memory_space<vmem>>, vector<16x1xf32>
    tpu.vector_store %arg7[%c0_21, %c0_22], %54 {strides = array<i32>} : memref<16x1xf32, #tpu.memory_space<vmem>>, vector<16x1xf32>,
    return
  }
  func.func @transform_0(%arg0: i32) -> (i32, i32) {
    %c0_i32 = arith.constant 0 : i32
    %c0_i32_0 = arith.constant 0 : i32
    return %arg0, %c0_i32 : i32, i32
  }
  func.func @transform_1(%arg0: i32) -> (i32, i32) {
    %c0_i32 = arith.constant 0 : i32
    %c0_i32_0 = arith.constant 0 : i32
    return %arg0, %c0_i32 : i32, i32
  }
  func.func @transform_2(%arg0: i32) -> (i32, i32) {
    %c0_i32 = arith.constant 0 : i32
    %c0_i32_0 = arith.constant 0 : i32
    %c0_i32_1 = arith.constant 0 : i32
    return %c0_i32, %c0_i32_0 : i32, i32
  }
  func.func @transform_3(%arg0: i32) -> (i32, i32) {
    %c0_i32 = arith.constant 0 : i32
    %c0_i32_0 = arith.constant 0 : i32
    %c0_i32_1 = arith.constant 0 : i32
    return %c0_i32, %c0_i32_0 : i32, i32
  }
  func.func @transform_4(%arg0: i32) -> (i32, i32) {
    %c0_i32 = arith.constant 0 : i32
    %c0_i32_0 = arith.constant 0 : i32
    %c0_i32_1 = arith.constant 0 : i32
    return %c0_i32, %c0_i32_0 : i32, i32
  }
  func.func @transform_5(%arg0: i32) -> (i32, i32) {
    %c0_i32 = arith.constant 0 : i32
    %c0_i32_0 = arith.constant 0 : i32
    return %arg0, %c0_i32 : i32, i32
  }
  func.func @transform_6(%arg0: i32) -> (i32, i32) {
    %c0_i32 = arith.constant 0 : i32
    %c0_i32_0 = arith.constant 0 : i32
    return %arg0, %c0_i32 : i32, i32
  }
}

module attributes {stable_mosaic.version = 11 : i64} {
  func.func @_cheaptrick_lifter_kernel(%arg0: i32, %arg1: memref<16x256xf32, #tpu.memory_space<vmem>>, %arg2: memref<16x1xf32, #tpu.memory_space<vmem>>, %arg3: memref<16x1xf32, #tpu.memory_space<vmem>>, %arg4: memref<1x256xf32, #tpu.memory_space<vmem>>, %arg5: memref<1x256xf32, #tpu.memory_space<vmem>>, %arg6: memref<1x256xf32, #tpu.memory_space<vmem>>, %arg7: memref<256x256xbf16, #tpu.memory_space<vmem>>, %arg8: memref<256x256xbf16, #tpu.memory_space<vmem>>, %arg9: memref<16x256xf32, #tpu.memory_space<vmem>>, %arg10: memref<16x1xf32, #tpu.memory_space<vmem>>) attributes {dimension_semantics = [#tpu.dimension_semantics<parallel>], iteration_bounds = array<i64: 1>, scalar_prefetch = 0 : i64, scratch_operands = 0 : i64, tpu.core_type = #tpu.core_type<tc>, window_params = [{transform_indices = @transform_0, window_bounds = array<i64: 16, 256>}, {transform_indices = @transform_1, window_bounds = array<i64: 16, 1>}, {transform_indices = @transform_2, window_bounds = array<i64: 16, 1>}, {pipeline_mode = #tpu.pipeline_mode<synchronous>, transform_indices = @transform_3, window_bounds = array<i64: 1, 256>}, {pipeline_mode = #tpu.pipeline_mode<synchronous>, transform_indices = @transform_4, window_bounds = array<i64: 1, 256>}, {pipeline_mode = #tpu.pipeline_mode<synchronous>, transform_indices = @transform_5, window_bounds = array<i64: 1, 256>}, {pipeline_mode = #tpu.pipeline_mode<synchronous>, transform_indices = @transform_6, window_bounds = array<i64: 256, 256>}, {pipeline_mode = #tpu.pipeline_mode<synchronous>, transform_indices = @transform_7, window_bounds = array<i64: 256, 256>}, {transform_indices = @transform_8, window_bounds = array<i64: 16, 256>}, {transform_indices = @transform_9, window_bounds = array<i64: 16, 1>}]} {
    %c0 = arith.constant 0 : index
    %c0_0 = arith.constant 0 : index
    %0 = vector.load %arg1[%c0, %c0_0] : memref<16x256xf32, #tpu.memory_space<vmem>>, vector<16x256xf32>
    %cst = arith.constant 0.000000e+00 : f32
    %1 = vector.broadcast %cst : f32 to vector<16x256xf32>
    %2 = arith.maximumf %0, %1 : vector<16x256xf32>
    %cst_1 = arith.constant 1.1920929E-7 : f32
    %3 = vector.broadcast %cst_1 : f32 to vector<16x256xf32>
    %4 = arith.addf %2, %3 : vector<16x256xf32>
    %5 = math.log %4 : vector<16x256xf32>
    %c0_2 = arith.constant 0 : index
    %c0_3 = arith.constant 0 : index
    %6 = vector.load %arg2[%c0_2, %c0_3] : memref<16x1xf32, #tpu.memory_space<vmem>>, vector<16x1xf32>
    %cst_4 = arith.constant 0.000000e+00 : f32
    %7 = vector.broadcast %cst_4 : f32 to vector<16x1xf32>
    %8 = arith.maximumf %6, %7 : vector<16x1xf32>
    %cst_5 = arith.constant 1.1920929E-7 : f32
    %9 = vector.broadcast %cst_5 : f32 to vector<16x1xf32>
    %10 = arith.addf %8, %9 : vector<16x1xf32>
    %11 = math.log %10 : vector<16x1xf32>
    %c0_6 = arith.constant 0 : index
    %c0_7 = arith.constant 0 : index
    %12 = vector.load %arg5[%c0_6, %c0_7] : memref<1x256xf32, #tpu.memory_space<vmem>>, vector<1x256xf32>
    %c0_8 = arith.constant 0 : index
    %c0_9 = arith.constant 0 : index
    %13 = vector.load %arg6[%c0_8, %c0_9] : memref<1x256xf32, #tpu.memory_space<vmem>>, vector<1x256xf32>
    %14 = arith.truncf %5 : vector<16x256xf32> to vector<16x256xbf16>
    %c0_10 = arith.constant 0 : index
    %c0_11 = arith.constant 0 : index
    %15 = vector.load %arg7[%c0_10, %c0_11] : memref<256x256xbf16, #tpu.memory_space<vmem>>, vector<256x256xbf16>
    %cst_12 = arith.constant dense<0.000000e+00> : vector<16x256xf32>
    %16 = tpu.matmul %14, %15, %cst_12 {dimension_numbers = #tpu.dot_dimension_numbers<[1], [0], [0], [1], [0, 0, 1, 1], [], []>} : vector<16x256xbf16>, vector<256x256xbf16>, vector<16x256xf32> -> vector<16x256xf32>
    %cst_13 = arith.constant 0.001953125 : f32
    %17 = vector.broadcast %cst_13 : f32 to vector<16x1xf32>
    %18 = arith.mulf %11, %17 : vector<16x1xf32>
    %19 = vector.broadcast %18 : vector<16x1xf32> to vector<16x256xf32>
    %20 = vector.broadcast %12 : vector<1x256xf32> to vector<16x256xf32>
    %21 = arith.mulf %19, %20 : vector<16x256xf32>
    %22 = arith.addf %16, %21 : vector<16x256xf32>
    %23 = vector.broadcast %13 : vector<1x256xf32> to vector<16x256xf32>
    %24 = arith.mulf %5, %23 : vector<16x256xf32>
    %cst_14 = arith.constant dense<0.000000e+00> : vector<16xf32>
    %25 = vector.multi_reduction <add>, %24, %cst_14 [1] : vector<16x256xf32> to vector<16xf32>
    %26 = vector.shape_cast %25 : vector<16xf32> to vector<16x1xf32>
    %cst_15 = arith.constant 1.000000e+00 : f32
    %27 = vector.broadcast %cst_15 : f32 to vector<16x1xf32>
    %28 = arith.mulf %27, %11 : vector<16x1xf32>
    %29 = arith.addf %26, %28 : vector<16x1xf32>
    %cst_16 = arith.constant 0.001953125 : f32
    %30 = vector.broadcast %cst_16 : f32 to vector<16x1xf32>
    %31 = arith.mulf %29, %30 : vector<16x1xf32>
    %c0_17 = arith.constant 0 : index
    %c0_18 = arith.constant 0 : index
    %32 = vector.load %arg3[%c0_17, %c0_18] : memref<16x1xf32, #tpu.memory_space<vmem>>, vector<16x1xf32>
    %c0_19 = arith.constant 0 : index
    %c0_20 = arith.constant 0 : index
    %33 = vector.load %arg4[%c0_19, %c0_20] : memref<1x256xf32, #tpu.memory_space<vmem>>, vector<1x256xf32>
    %34 = vector.broadcast %32 : vector<16x1xf32> to vector<16x256xf32>
    %35 = vector.broadcast %33 : vector<1x256xf32> to vector<16x256xf32>
    %36 = arith.mulf %34, %35 : vector<16x256xf32>
    %cst_21 = arith.constant 3.14159274 : f32
    %37 = vector.broadcast %cst_21 : f32 to vector<16x256xf32>
    %38 = arith.mulf %37, %36 : vector<16x256xf32>
    %39 = math.sin %38 : vector<16x256xf32>
    %cst_22 = arith.constant 0.000000e+00 : f32
    %40 = vector.broadcast %cst_22 : f32 to vector<1x256xf32>
    %41 = arith.cmpf oeq, %33, %40 : vector<1x256xf32>
    %cst_23 = arith.constant 0.000000e+00 : f32
    %42 = vector.broadcast %cst_23 : f32 to vector<1x256xf32>
    %43 = arith.cmpf oeq, %33, %42 : vector<1x256xf32>
    %cst_24 = arith.constant 1.000000e+00 : f32
    %44 = vector.shape_cast %43 : vector<1x256xi1> to vector<1x256xi1>
    %45 = vector.broadcast %44 : vector<1x256xi1> to vector<16x256xi1>
    %46 = vector.broadcast %cst_24 : f32 to vector<16x256xf32>
    %47 = arith.select %45, %46, %38 : vector<16x256xi1>, vector<16x256xf32>
    %48 = arith.divf %39, %47 : vector<16x256xf32>
    %cst_25 = arith.constant 1.000000e+00 : f32
    %49 = vector.shape_cast %41 : vector<1x256xi1> to vector<1x256xi1>
    %50 = vector.broadcast %49 : vector<1x256xi1> to vector<16x256xi1>
    %51 = vector.broadcast %cst_25 : f32 to vector<16x256xf32>
    %52 = arith.select %50, %51, %48 : vector<16x256xi1>, vector<16x256xf32>
    %53 = arith.mulf %39, %39 : vector<16x256xf32>
    %cst_26 = arith.constant -6.000000e-01 : f32
    %54 = vector.broadcast %cst_26 : f32 to vector<16x256xf32>
    %55 = arith.mulf %54, %53 : vector<16x256xf32>
    %cst_27 = arith.constant 1.000000e+00 : f32
    %56 = vector.broadcast %cst_27 : f32 to vector<16x256xf32>
    %57 = arith.subf %56, %55 : vector<16x256xf32>
    %cst_28 = arith.constant 3.200000e-02 : f32
    %58 = vector.broadcast %cst_28 : f32 to vector<16x1xf32>
    %59 = arith.mulf %32, %58 : vector<16x1xf32>
    %cst_29 = arith.constant 3.14159274 : f32
    %60 = vector.broadcast %cst_29 : f32 to vector<16x1xf32>
    %61 = arith.mulf %60, %59 : vector<16x1xf32>
    %62 = math.sin %61 : vector<16x1xf32>
    %63 = arith.divf %62, %61 : vector<16x1xf32>
    %64 = arith.mulf %62, %62 : vector<16x1xf32>
    %cst_30 = arith.constant -6.000000e-01 : f32
    %65 = vector.broadcast %cst_30 : f32 to vector<16x1xf32>
    %66 = arith.mulf %65, %64 : vector<16x1xf32>
    %cst_31 = arith.constant 1.000000e+00 : f32
    %67 = vector.broadcast %cst_31 : f32 to vector<16x1xf32>
    %68 = arith.subf %67, %66 : vector<16x1xf32>
    %69 = arith.mulf %22, %52 : vector<16x256xf32>
    %70 = arith.mulf %69, %57 : vector<16x256xf32>
    %71 = arith.mulf %31, %63 : vector<16x1xf32>
    %72 = arith.mulf %71, %68 : vector<16x1xf32>
    %73 = arith.truncf %70 : vector<16x256xf32> to vector<16x256xbf16>
    %c0_32 = arith.constant 0 : index
    %c0_33 = arith.constant 0 : index
    %74 = vector.load %arg8[%c0_32, %c0_33] : memref<256x256xbf16, #tpu.memory_space<vmem>>, vector<256x256xbf16>
    %cst_34 = arith.constant dense<0.000000e+00> : vector<16x256xf32>
    %75 = tpu.matmul %73, %74, %cst_34 {dimension_numbers = #tpu.dot_dimension_numbers<[1], [0], [0], [1], [0, 0, 1, 1], [], []>} : vector<16x256xbf16>, vector<256x256xbf16>, vector<16x256xf32> -> vector<16x256xf32>
    %76 = vector.broadcast %72 : vector<16x1xf32> to vector<16x256xf32>
    %77 = vector.broadcast %12 : vector<1x256xf32> to vector<16x256xf32>
    %78 = arith.mulf %76, %77 : vector<16x256xf32>
    %79 = arith.addf %75, %78 : vector<16x256xf32>
    %c0_35 = arith.constant 0 : index
    %c0_36 = arith.constant 0 : index
    %80 = vector.load %arg9[%c0_35, %c0_36] : memref<16x256xf32, #tpu.memory_space<vmem>>, vector<16x256xf32>
    tpu.vector_store %arg9[%c0_35, %c0_36], %79 {strides = array<i32>} : memref<16x256xf32, #tpu.memory_space<vmem>>, vector<16x256xf32>,
    %81 = vector.broadcast %13 : vector<1x256xf32> to vector<16x256xf32>
    %82 = arith.mulf %70, %81 : vector<16x256xf32>
    %cst_37 = arith.constant dense<0.000000e+00> : vector<16xf32>
    %83 = vector.multi_reduction <add>, %82, %cst_37 [1] : vector<16x256xf32> to vector<16xf32>
    %84 = vector.shape_cast %83 : vector<16xf32> to vector<16x1xf32>
    %cst_38 = arith.constant 1.000000e+00 : f32
    %85 = vector.broadcast %cst_38 : f32 to vector<16x1xf32>
    %86 = arith.mulf %85, %72 : vector<16x1xf32>
    %87 = arith.addf %84, %86 : vector<16x1xf32>
    %c0_39 = arith.constant 0 : index
    %c0_40 = arith.constant 0 : index
    %88 = vector.load %arg10[%c0_39, %c0_40] : memref<16x1xf32, #tpu.memory_space<vmem>>, vector<16x1xf32>
    tpu.vector_store %arg10[%c0_39, %c0_40], %87 {strides = array<i32>} : memref<16x1xf32, #tpu.memory_space<vmem>>, vector<16x1xf32>,
    return
  }
  func.func @transform_0(%arg0: i32) -> (i32, i32) {
    %c0_i32 = arith.constant 0 : i32
    %c0_i32_0 = arith.constant 0 : i32
    return %arg0, %c0_i32 : i32, i32
  }
  func.func @transform_1(%arg0: i32) -> (i32, i32) {
    %c0_i32 = arith.constant 0 : i32
    %c0_i32_0 = arith.constant 0 : i32
    return %arg0, %c0_i32 : i32, i32
  }
  func.func @transform_2(%arg0: i32) -> (i32, i32) {
    %c0_i32 = arith.constant 0 : i32
    %c0_i32_0 = arith.constant 0 : i32
    return %arg0, %c0_i32 : i32, i32
  }
  func.func @transform_3(%arg0: i32) -> (i32, i32) {
    %c0_i32 = arith.constant 0 : i32
    %c0_i32_0 = arith.constant 0 : i32
    %c0_i32_1 = arith.constant 0 : i32
    return %c0_i32, %c0_i32_0 : i32, i32
  }
  func.func @transform_4(%arg0: i32) -> (i32, i32) {
    %c0_i32 = arith.constant 0 : i32
    %c0_i32_0 = arith.constant 0 : i32
    %c0_i32_1 = arith.constant 0 : i32
    return %c0_i32, %c0_i32_0 : i32, i32
  }
  func.func @transform_5(%arg0: i32) -> (i32, i32) {
    %c0_i32 = arith.constant 0 : i32
    %c0_i32_0 = arith.constant 0 : i32
    %c0_i32_1 = arith.constant 0 : i32
    return %c0_i32, %c0_i32_0 : i32, i32
  }
  func.func @transform_6(%arg0: i32) -> (i32, i32) {
    %c0_i32 = arith.constant 0 : i32
    %c0_i32_0 = arith.constant 0 : i32
    %c0_i32_1 = arith.constant 0 : i32
    return %c0_i32, %c0_i32_0 : i32, i32
  }
  func.func @transform_7(%arg0: i32) -> (i32, i32) {
    %c0_i32 = arith.constant 0 : i32
    %c0_i32_0 = arith.constant 0 : i32
    %c0_i32_1 = arith.constant 0 : i32
    return %c0_i32, %c0_i32_0 : i32, i32
  }
  func.func @transform_8(%arg0: i32) -> (i32, i32) {
    %c0_i32 = arith.constant 0 : i32
    %c0_i32_0 = arith.constant 0 : i32
    return %arg0, %c0_i32 : i32, i32
  }
  func.func @transform_9(%arg0: i32) -> (i32, i32) {
    %c0_i32 = arith.constant 0 : i32
    %c0_i32_0 = arith.constant 0 : i32
    return %arg0, %c0_i32 : i32, i32
  }
}

</mosaic_0001>

<llo_original>
// kernel: lt.25
$region0: #{lt.25}
  %s0 = inlined_call_operand.vmem [shape: f32[2,8], index: 0, kind: input, shape index: {}]
  %s1 = inlined_call_operand.vmem [shape: f32[16], index: 1, kind: output, shape index: {}]
  $region1: #{lt.25} parent=0
    #allocation0 [shape = 'u8[4096]{0}', space=vmem, size = 0x1000, scoped, tag = 'scoped mem for output reshape']
    #allocation1 [shape = 'u8[4096]{0}', space=vmem, size = 0x1000, scoped, tag = 'scoped mem for input reshape']
    %s3 = sshll.u32 1, 2
    %s4 = ssub.s32 %s3, 1
    %v5 = vld [vmem:[%s0] sm:%s4]
    %6 = vst [vmem:[#allocation1] sm:%s4] %v5
    %v7 = vld [vmem:[#allocation1] sm:$0x1]
    %vm8 = vcmask 64512
    %9 = vst.msk [vmem:[#allocation0] sm:$0x1] %vm8, %v7
    %s10 = scalar_lea.vmem [#allocation1], 1
    %v11 = vld [vmem:[%s10] sm:$0x1]
    %12 = vrot.lane.b32.xlu0 %v11, 8
    %v13 = vpop.permute.xlu0 %12
    %vm14 = vcmask 130112
    %15 = vst.msk [vmem:[#allocation0] sm:$0x1] %vm14, %v13
    %s17 = sshll.u32 1, 1
    %s18 = ssub.s32 %s17, 1
    %v20 = vld [vmem:[#allocation0] sm:%s18]
    %s21 = sshll.u32 1, 1
    %s22 = ssub.s32 %s21, 1
    %23 = vst [vmem:[%s1] sm:%s22] %v20

// kernel: a_call__.2
$region0: #{a_call__.2}
  #allocation0 [shape = 'u32[]', space=smem, size = 0x4, offset = 0x4, fixed_abs, tag = 'smem constant byte address 0x4 - core index']
  #allocation1 [shape = 'u32[144,128]{1,0:T(1,128)}', space=vmem, size = 0x12000, scoped, tag = 'internal scratch']
  %s0 = inlined_call_operand.vmem [shape: bf16[16,512], index: 0, kind: input, shape index: {}]
  %s1 = inlined_call_operand.vmem [shape: f32[16,1], index: 1, kind: input, shape index: {}]
  %s2 = inlined_call_operand.vmem [shape: f32[1,512], index: 2, kind: input, shape index: {}]
  %s3 = inlined_call_operand.vmem [shape: f32[1,512], index: 3, kind: input, shape index: {}]
  %s4 = inlined_call_operand.vmem [shape: bf16[512,512], index: 4, kind: input, shape index: {}]
  %s5 = inlined_call_operand.vmem [shape: f32[16,256], index: 5, kind: output, shape index: {0}]
  %s6 = inlined_call_operand.vmem [shape: f32[16,1], index: 6, kind: output, shape index: {1}]
  %7 = xla_tuple %s5, %s6
  %s8 = sld [smem:[#allocation0]]
  $region38: #{a_call__.2} parent=0
    _
  %s10 = ssub.s32 1, %s8
  %s11 = scalar_select 0, %s10, %s8
  // Predicated region
  $region2: #{a_call__.2} parent=0 // pred_check
    _
  $region3: #{a_call__.2} parent=0 // pred_check_branch
    %13 = sbr.rel (0) target = $region5
  $region4: #{a_call__.2} parent=0 // pred_region
    _
  $region5: #{a_call__.2} parent=0 // pred_fallthru
    _
  // Predicated region
  $region6: #{a_call__.2} parent=0 // pred_check
    _
  $region7: #{a_call__.2} parent=0 // pred_check_branch
    %15 = sbr.rel (0) target = $region9
  $region8: #{a_call__.2} parent=0 // pred_region
    _
  $region9: #{a_call__.2} parent=0 // pred_fallthru
    _
  // Predicated region
  $region10: #{a_call__.2} parent=0 // pred_check
    _
  $region11: #{a_call__.2} parent=0 // pred_check_branch
    %17 = sbr.rel (0) target = $region13
  $region12: #{a_call__.2} parent=0 // pred_region
    _
  $region13: #{a_call__.2} parent=0 // pred_fallthru
    _
  // Predicated region
  $region14: #{a_call__.2} parent=0 // pred_check
    _
  $region15: #{a_call__.2} parent=0 // pred_check_branch
    %19 = sbr.rel (0) target = $region17
  $region16: #{a_call__.2} parent=0 // pred_region
    _
  $region17: #{a_call__.2} parent=0 // pred_fallthru
    _
  // Predicated region
  $region18: #{a_call__.2} parent=0 // pred_check
    _
  $region19: #{a_call__.2} parent=0 // pred_check_branch
    %21 = sbr.rel (0) target = $region21
  $region20: #{a_call__.2} parent=0 // pred_region
    _
  $region21: #{a_call__.2} parent=0 // pred_fallthru
    _
  %v22 = vld [vmem:[%s0] sm:$0xff]
  %v23 = vld [vmem:[%s0 + $0x8] sm:$0xff]
  %v24 = vld [vmem:[%s0 + $0x10] sm:$0xff]
  %v25 = vld [vmem:[%s0 + $0x18] sm:$0xff]
  %v26 = vunpack.c.l.bf16 %v22
  %v27 = vunpack.c.h.bf16 %v22
  %v28 = vunpack.c.l.bf16 %v23
  %v29 = vunpack.c.h.bf16 %v23
  %v30 = vunpack.c.l.bf16 %v24
  %v31 = vunpack.c.h.bf16 %v24
  %v32 = vunpack.c.l.bf16 %v25
  %v33 = vunpack.c.h.bf16 %v25
  %v34 = vld [vmem:[%s1] sm:$0xff]
  %v35 = vld [vmem:[%s1 + $0x8] sm:$0xff]
  %v36 = vld [vmem:[%s2] sm:$0xf]
  %v37 = vld [vmem:[%s3] sm:$0xf]
  %v38 = vrcp.pop %v34
  %v39 = vmul.f32 12000.0, %v38
  %v40 = vrcp.pop %v35
  %v41 = vmul.f32 12000.0, %v40
  %v42 = vround.ne.pseudo %v39
  %v43 = vround.ne.pseudo %v41
  %v44 = vmul.f32 %v36, 8.333333e-05
  %v45 = vmul.f32 %v44, 3.1415927
  %v47 = vlaneseq
  %v48 = vshrl.u32 %v47, 7
  %v49 = vsub.s32 0, %v48
  %v50 = vrot.slane %v45, %v49
  %v51 = vlaneseq
  %v52 = vshrl.u32 %v51, 7
  %v53 = vsub.s32 1, %v52
  %v54 = vrot.slane %v45, %v53
  %v55 = vlaneseq
  %v56 = vshrl.u32 %v55, 7
  %v57 = vsub.s32 2, %v56
  %v58 = vrot.slane %v45, %v57
  %v59 = vlaneseq
  %v60 = vshrl.u32 %v59, 7
  %v61 = vsub.s32 3, %v60
  %v62 = vrot.slane %v45, %v61
  %68 = vset.pattern.permute.xlu0 0
  %69 = vperm.xlu0 %68, %v34
  %v70 = vpop.permute.xlu0 %69
  %73 = vset.pattern.permute.xlu0 0
  %74 = vperm.xlu0 %73, %v35
  %v75 = vpop.permute.xlu0 %74
  %v77 = vmul.f32 %v50, %v70
  %v78 = vmul.f32 %v54, %v70
  %v79 = vmul.f32 %v58, %v70
  %v80 = vmul.f32 %v62, %v70
  %v81 = vmul.f32 %v50, %v75
  %v82 = vmul.f32 %v54, %v75
  %v83 = vmul.f32 %v58, %v75
  %v84 = vmul.f32 %v62, %v75
  %v85 = vand.u32 2147483647, %v77
  %vm86 = vcmp.le.f32.partialorder %v85, 0.7853982
  %vm87 = vcmp.lt.s32.totalorder %v77, 0
  %v88 = vand.u32 %v77, 2139095040
  %v89 = vshrl.u32 %v88, 23
  %v90 = vsub.s32 %v89, 127
  %v91 = vand.u32 2147483647, %v77
  %v92 = vand.u32 %v91, 8388607
  %v93 = vor.u32 %v92, 8388608
  %v94 = vsub.s32 0, %v93
  %v95 = vadd.s32 %v90, 1
  %vm96 = vcmp.gt.s32.totalorder %v95, 0
  %v97 = vsel %vm96, %v95, 0
  %v98 = vshrl.u32 %v97, 5
  %v99 = vand.u32 %v97, 31
  %v100 = vsub.s32 32, %v99
  %v101 = vshrl.u32 683565275, %v100
  %v102 = vshll.u32 683565275, %v99
  %v103 = vshrl.u32 2475754826, %v100
  %v104 = vor.u32 %v102, %v103
  %v105 = vshll.u32 2475754826, %v99
  %v106 = vshrl.u32 2131351028, %v100
  %v107 = vor.u32 %v105, %v106
  %v108 = vshll.u32 2131351028, %v99
  %v109 = vshrl.u32 2102212464, %v100
  %v110 = vor.u32 %v108, %v109
  %v111 = vshll.u32 2102212464, %v99
  %v112 = vshrl.u32 920167782, %v100
  %v113 = vor.u32 %v111, %v112
  %v114 = vshll.u32 920167782, %v99
  %v115 = vshrl.u32 1326507024, %v100
  %v116 = vor.u32 %v114, %v115
  %vm117 = vcmp.lt.s32.totalorder %v98, 1
  %vm118 = vcmp.lt.s32.totalorder %v98, 2
  %vm119 = vcmp.lt.s32.totalorder %v98, 3
  %vm120 = vcmp.lt.s32.totalorder %v98, 4
  %v121 = vsel %vm117, %v101, %v104
  %v122 = vsel %vm120, %v110, 2102212464
  %v123 = vsel %vm119, %v107, %v122
  %v124 = vsel %vm118, %v121, %v123
  %v125 = vsel %vm117, %v104, %v107
  %v126 = vsel %vm120, %v113, 920167782
  %v127 = vsel %vm119, %v110, %v126
  %v128 = vsel %vm118, %v125, %v127
  %v129 = vsel %vm117, %v107, %v110
  %v130 = vsel %vm120, %v116, 1326507024
  %v131 = vsel %vm119, %v113, %v130
  %v132 = vsel %vm118, %v129, %v131
  %v133 = vshll.u32 %v93, 8
  %v134 = vmul.u32.u64.compose %v133, %v132
  %v135 = vextract.low.u32 %v134
  %v136 = vextract.high.u32 %v134
  %v137 = vmul.u32.u64.compose %v133, %v128
  %v138 = vextract.low.u32 %v137
  %v139 = vextract.high.u32 %v137
  %v140 = vmul.u32 %v133, %v124
  %v141 = vadd.s32 %v136, %v138
  %vm142 = vc.u32 %v136, %v138
  %v143 = vadd.s32 %v139, 1
  %v144 = vsel %vm142, %v143, %v139
  %v145 = vadd.s32 %v140, %v144
  %v146 = vadd.s32 %v145, 536870912
  %v147 = vshrl.u32 %v146, 30
  %v148 = vshll.u32 %v147, 30
  %v149 = vsub.s32 %v145, %v148
  %vm150 = vcmp.lt.s32.totalorder %v149, 0
  %v151 = vsub.s32 0, %v149
  %v152 = vsel %vm150, %v151, %v149
  %v153 = vclz %v152
  %v154 = vsub.s32 %v153, 2
  %vm155 = vcmp.gt.s32.totalorder 0, %v154
  %v156 = vsel %vm155, 0, %v154
  %v157 = vsub.s32 32, %v156
  %v158 = vshll.u32 %v149, %v156
  %v159 = vshrl.u32 %v141, %v157
  %v160 = vor.u32 %v158, %v159
  %v161 = vsub.s32 4294967266, %v156
  %v162 = vadd.s32 %v161, 127
  %v163 = vshll.u32 %v162, 23
  %v164 = vor.u32 4788187, %v163
  %v165 = vand.u32 2147483647, %v164
  %v167 = vcvt.s32.f32 %v160
  %v168 = vmul.f32 %v167, %v165
  %v169 = vxor.u32 %v168, 2147483648
  %v170 = vsel %vm87, %v169, %v168
  %v171 = vsub.s32 4, %v147
  %v172 = vsel %vm87, %v171, %v147
  %v173 = vsel %vm86, %v77, %v170
  %v174 = vsel %vm86, 0, %v172
  %v175 = vcosq.f32.pop %v173
  %v176 = vsinq.f32.pop %v173
  %vm177 = vweird.f32 %v77
  %v178 = vand.u32 %v174, 3
  %vm179 = vcmp.lt.s32.totalorder %v178, 2
  %vm180 = vcmp.eq.s32.totalorder %v178, 0
  %v181 = vxor.u32 %v176, 2147483648
  %v182 = vsel %vm180, %v175, %v181
  %vm183 = vcmp.eq.s32.totalorder %v178, 2
  %v184 = vxor.u32 %v175, 2147483648
  %v185 = vsel %vm183, %v184, %v176
  %v186 = vsel %vm179, %v182, %v185
  %v187 = vsel %vm177, nan, %v186
  %v188 = vand.u32 2147483647, %v78
  %vm189 = vcmp.le.f32.partialorder %v188, 0.7853982
  %vm190 = vcmp.lt.s32.totalorder %v78, 0
  %v191 = vand.u32 %v78, 2139095040
  %v192 = vshrl.u32 %v191, 23
  %v193 = vsub.s32 %v192, 127
  %v194 = vand.u32 2147483647, %v78
  %v195 = vand.u32 %v194, 8388607
  %v196 = vor.u32 %v195, 8388608
  %v197 = vsub.s32 0, %v196
  %v198 = vadd.s32 %v193, 1
  %vm199 = vcmp.gt.s32.totalorder %v198, 0
  %v200 = vsel %vm199, %v198, 0
  %v201 = vshrl.u32 %v200, 5
  %v202 = vand.u32 %v200, 31
  %v203 = vsub.s32 32, %v202
  %v204 = vshrl.u32 683565275, %v203
  %v205 = vshll.u32 683565275, %v202
  %v206 = vshrl.u32 2475754826, %v203
  %v207 = vor.u32 %v205, %v206
  %v208 = vshll.u32 2475754826, %v202
  %v209 = vshrl.u32 2131351028, %v203
  %v210 = vor.u32 %v208, %v209
  %v211 = vshll.u32 2131351028, %v202
  %v212 = vshrl.u32 2102212464, %v203
  %v213 = vor.u32 %v211, %v212
  %v214 = vshll.u32 2102212464, %v202
  %v215 = vshrl.u32 920167782, %v203
  %v216 = vor.u32 %v214, %v215
  %v217 = vshll.u32 920167782, %v202
  %v218 = vshrl.u32 1326507024, %v203
  %v219 = vor.u32 %v217, %v218
  %vm220 = vcmp.lt.s32.totalorder %v201, 1
  %vm221 = vcmp.lt.s32.totalorder %v201, 2
  %vm222 = vcmp.lt.s32.totalorder %v201, 3
  %vm223 = vcmp.lt.s32.totalorder %v201, 4
  %v224 = vsel %vm220, %v204, %v207
  %v225 = vsel %vm223, %v213, 2102212464
  %v226 = vsel %vm222, %v210, %v225
  %v227 = vsel %vm221, %v224, %v226
  %v228 = vsel %vm220, %v207, %v210
  %v229 = vsel %vm223, %v216, 920167782
  %v230 = vsel %vm222, %v213, %v229
  %v231 = vsel %vm221, %v228, %v230
  %v232 = vsel %vm220, %v210, %v213
  %v233 = vsel %vm223, %v219, 1326507024
  %v234 = vsel %vm222, %v216, %v233
  %v235 = vsel %vm221, %v232, %v234
  %v236 = vshll.u32 %v196, 8
  %v237 = vmul.u32.u64.compose %v236, %v235
  %v238 = vextract.low.u32 %v237
  %v239 = vextract.high.u32 %v237
  %v240 = vmul.u32.u64.compose %v236, %v231
  %v241 = vextract.low.u32 %v240
  %v242 = vextract.high.u32 %v240
  %v243 = vmul.u32 %v236, %v227
  %v244 = vadd.s32 %v239, %v241
  %vm245 = vc.u32 %v239, %v241
  %v246 = vadd.s32 %v242, 1
  %v247 = vsel %vm245, %v246, %v242
  %v248 = vadd.s32 %v243, %v247
  %v249 = vadd.s32 %v248, 536870912
  %v250 = vshrl.u32 %v249, 30
  %v251 = vshll.u32 %v250, 30
  %v252 = vsub.s32 %v248, %v251
  %vm253 = vcmp.lt.s32.totalorder %v252, 0
  %v254 = vsub.s32 0, %v252
  %v255 = vsel %vm253, %v254, %v252
  %v256 = vclz %v255
  %v257 = vsub.s32 %v256, 2
  %vm258 = vcmp.gt.s32.totalorder 0, %v257
  %v259 = vsel %vm258, 0, %v257
  %v260 = vsub.s32 32, %v259
  %v261 = vshll.u32 %v252, %v259
  %v262 = vshrl.u32 %v244, %v260
  %v263 = vor.u32 %v261, %v262
  %v264 = vsub.s32 4294967266, %v259
  %v265 = vadd.s32 %v264, 127
  %v266 = vshll.u32 %v265, 23
  %v267 = vor.u32 4788187, %v266
  %v268 = vand.u32 2147483647, %v267
  %v270 = vcvt.s32.f32 %v263
  %v271 = vmul.f32 %v270, %v268
  %v272 = vxor.u32 %v271, 2147483648
  %v273 = vsel %vm190, %v272, %v271
  %v274 = vsub.s32 4, %v250
  %v275 = vsel %vm190, %v274, %v250
  %v276 = vsel %vm189, %v78, %v273
  %v277 = vsel %vm189, 0, %v275
  %v278 = vcosq.f32.pop %v276
  %v279 = vsinq.f32.pop %v276
  %vm280 = vweird.f32 %v78
  %v281 = vand.u32 %v277, 3
  %vm282 = vcmp.lt.s32.totalorder %v281, 2
  %vm283 = vcmp.eq.s32.totalorder %v281, 0
  %v284 = vxor.u32 %v279, 2147483648
  %v285 = vsel %vm283, %v278, %v284
  %vm286 = vcmp.eq.s32.totalorder %v281, 2
  %v287 = vxor.u32 %v278, 2147483648
  %v288 = vsel %vm286, %v287, %v279
  %v289 = vsel %vm282, %v285, %v288
  %v290 = vsel %vm280, nan, %v289
  %v291 = vand.u32 2147483647, %v79
  %vm292 = vcmp.le.f32.partialorder %v291, 0.7853982
  %vm293 = vcmp.lt.s32.totalorder %v79, 0
  %v294 = vand.u32 %v79, 2139095040
  %v295 = vshrl.u32 %v294, 23
  %v296 = vsub.s32 %v295, 127
  %v297 = vand.u32 2147483647, %v79
  %v298 = vand.u32 %v297, 8388607
  %v299 = vor.u32 %v298, 8388608
  %v300 = vsub.s32 0, %v299
  %v301 = vadd.s32 %v296, 1
  %vm302 = vcmp.gt.s32.totalorder %v301, 0
  %v303 = vsel %vm302, %v301, 0
  %v304 = vshrl.u32 %v303, 5
  %v305 = vand.u32 %v303, 31
  %v306 = vsub.s32 32, %v305
  %v307 = vshrl.u32 683565275, %v306
  %v308 = vshll.u32 683565275, %v305
  %v309 = vshrl.u32 2475754826, %v306
  %v310 = vor.u32 %v308, %v309
  %v311 = vshll.u32 2475754826, %v305
  %v312 = vshrl.u32 2131351028, %v306
  %v313 = vor.u32 %v311, %v312
  %v314 = vshll.u32 2131351028, %v305
  %v315 = vshrl.u32 2102212464, %v306
  %v316 = vor.u32 %v314, %v315
  %v317 = vshll.u32 2102212464, %v305
  %v318 = vshrl.u32 920167782, %v306
  %v319 = vor.u32 %v317, %v318
  %v320 = vshll.u32 920167782, %v305
  %v321 = vshrl.u32 1326507024, %v306
  %v322 = vor.u32 %v320, %v321
  %vm323 = vcmp.lt.s32.totalorder %v304, 1
  %vm324 = vcmp.lt.s32.totalorder %v304, 2
  %vm325 = vcmp.lt.s32.totalorder %v304, 3
  %vm326 = vcmp.lt.s32.totalorder %v304, 4
  %v327 = vsel %vm323, %v307, %v310
  %v328 = vsel %vm326, %v316, 2102212464
  %v329 = vsel %vm325, %v313, %v328
  %v330 = vsel %vm324, %v327, %v329
  %v331 = vsel %vm323, %v310, %v313
  %v332 = vsel %vm326, %v319, 920167782
  %v333 = vsel %vm325, %v316, %v332
  %v334 = vsel %vm324, %v331, %v333
  %v335 = vsel %vm323, %v313, %v316
  %v336 = vsel %vm326, %v322, 1326507024
  %v337 = vsel %vm325, %v319, %v336
  %v338 = vsel %vm324, %v335, %v337
  %v339 = vshll.u32 %v299, 8
  %v340 = vmul.u32.u64.compose %v339, %v338
  %v341 = vextract.low.u32 %v340
  %v342 = vextract.high.u32 %v340
  %v343 = vmul.u32.u64.compose %v339, %v334
  %v344 = vextract.low.u32 %v343
  %v345 = vextract.high.u32 %v343
  %v346 = vmul.u32 %v339, %v330
  %v347 = vadd.s32 %v342, %v344
  %vm348 = vc.u32 %v342, %v344
  %v349 = vadd.s32 %v345, 1
  %v350 = vsel %vm348, %v349, %v345
  %v351 = vadd.s32 %v346, %v350
  %v352 = vadd.s32 %v351, 536870912
  %v353 = vshrl.u32 %v352, 30
  %v354 = vshll.u32 %v353, 30
  %v355 = vsub.s32 %v351, %v354
  %vm356 = vcmp.lt.s32.totalorder %v355, 0
  %v357 = vsub.s32 0, %v355
  %v358 = vsel %vm356, %v357, %v355
  %v359 = vclz %v358
  %v360 = vsub.s32 %v359, 2
  %vm361 = vcmp.gt.s32.totalorder 0, %v360
  %v362 = vsel %vm361, 0, %v360
  %v363 = vsub.s32 32, %v362
  %v364 = vshll.u32 %v355, %v362
  %v365 = vshrl.u32 %v347, %v363
  %v366 = vor.u32 %v364, %v365
  %v367 = vsub.s32 4294967266, %v362
  %v368 = vadd.s32 %v367, 127
  %v369 = vshll.u32 %v368, 23
  %v370 = vor.u32 4788187, %v369
  %v371 = vand.u32 2147483647, %v370
  %v373 = vcvt.s32.f32 %v366
  %v374 = vmul.f32 %v373, %v371
  %v375 = vxor.u32 %v374, 2147483648
  %v376 = vsel %vm293, %v375, %v374
  %v377 = vsub.s32 4, %v353
  %v378 = vsel %vm293, %v377, %v353
  %v379 = vsel %vm292, %v79, %v376
  %v380 = vsel %vm292, 0, %v378
  %v381 = vcosq.f32.pop %v379
  %v382 = vsinq.f32.pop %v379
  %vm383 = vweird.f32 %v79
  %v384 = vand.u32 %v380, 3
  %vm385 = vcmp.lt.s32.totalorder %v384, 2
  %vm386 = vcmp.eq.s32.totalorder %v384, 0
  %v387 = vxor.u32 %v382, 2147483648
  %v388 = vsel %vm386, %v381, %v387
  %vm389 = vcmp.eq.s32.totalorder %v384, 2
  %v390 = vxor.u32 %v381, 2147483648
  %v391 = vsel %vm389, %v390, %v382
  %v392 = vsel %vm385, %v388, %v391
  %v393 = vsel %vm383, nan, %v392
  %v394 = vand.u32 2147483647, %v80
  %vm395 = vcmp.le.f32.partialorder %v394, 0.7853982
  %vm396 = vcmp.lt.s32.totalorder %v80, 0
  %v397 = vand.u32 %v80, 2139095040
  %v398 = vshrl.u32 %v397, 23
  %v399 = vsub.s32 %v398, 127
  %v400 = vand.u32 2147483647, %v80
  %v401 = vand.u32 %v400, 8388607
  %v402 = vor.u32 %v401, 8388608
  %v403 = vsub.s32 0, %v402
  %v404 = vadd.s32 %v399, 1
  %vm405 = vcmp.gt.s32.totalorder %v404, 0
  %v406 = vsel %vm405, %v404, 0
  %v407 = vshrl.u32 %v406, 5
  %v408 = vand.u32 %v406, 31
  %v409 = vsub.s32 32, %v408
  %v410 = vshrl.u32 683565275, %v409
  %v411 = vshll.u32 683565275, %v408
  %v412 = vshrl.u32 2475754826, %v409
  %v413 = vor.u32 %v411, %v412
  %v414 = vshll.u32 2475754826, %v408
  %v415 = vshrl.u32 2131351028, %v409
  %v416 = vor.u32 %v414, %v415
  %v417 = vshll.u32 2131351028, %v408
  %v418 = vshrl.u32 2102212464, %v409
  %v419 = vor.u32 %v417, %v418
  %v420 = vshll.u32 2102212464, %v408
  %v421 = vshrl.u32 920167782, %v409
  %v422 = vor.u32 %v420, %v421
  %v423 = vshll.u32 920167782, %v408
  %v424 = vshrl.u32 1326507024, %v409
  %v425 = vor.u32 %v423, %v424
  %vm426 = vcmp.lt.s32.totalorder %v407, 1
  %vm427 = vcmp.lt.s32.totalorder %v407, 2
  %vm428 = vcmp.lt.s32.totalorder %v407, 3
  %vm429 = vcmp.lt.s32.totalorder %v407, 4
  %v430 = vsel %vm426, %v410, %v413
  %v431 = vsel %vm429, %v419, 2102212464
  %v432 = vsel %vm428, %v416, %v431
  %v433 = vsel %vm427, %v430, %v432
  %v434 = vsel %vm426, %v413, %v416
  %v435 = vsel %vm429, %v422, 920167782
  %v436 = vsel %vm428, %v419, %v435
  %v437 = vsel %vm427, %v434, %v436
  %v438 = vsel %vm426, %v416, %v419
  %v439 = vsel %vm429, %v425, 1326507024
  %v440 = vsel %vm428, %v422, %v439
  %v441 = vsel %vm427, %v438, %v440
  %v442 = vshll.u32 %v402, 8
  %v443 = vmul.u32.u64.compose %v442, %v441
  %v444 = vextract.low.u32 %v443
  %v445 = vextract.high.u32 %v443
  %v446 = vmul.u32.u64.compose %v442, %v437
  %v447 = vextract.low.u32 %v446
  %v448 = vextract.high.u32 %v446
  %v449 = vmul.u32 %v442, %v433
  %v450 = vadd.s32 %v445, %v447
  %vm451 = vc.u32 %v445, %v447
  %v452 = vadd.s32 %v448, 1
  %v453 = vsel %vm451, %v452, %v448
  %v454 = vadd.s32 %v449, %v453
  %v455 = vadd.s32 %v454, 536870912
  %v456 = vshrl.u32 %v455, 30
  %v457 = vshll.u32 %v456, 30
  %v458 = vsub.s32 %v454, %v457
  %vm459 = vcmp.lt.s32.totalorder %v458, 0
  %v460 = vsub.s32 0, %v458
  %v461 = vsel %vm459, %v460, %v458
  %v462 = vclz %v461
  %v463 = vsub.s32 %v462, 2
  %vm464 = vcmp.gt.s32.totalorder 0, %v463
  %v465 = vsel %vm464, 0, %v463
  %v466 = vsub.s32 32, %v465
  %v467 = vshll.u32 %v458, %v465
  %v468 = vshrl.u32 %v450, %v466
  %v469 = vor.u32 %v467, %v468
  %v470 = vsub.s32 4294967266, %v465
  %v471 = vadd.s32 %v470, 127
  %v472 = vshll.u32 %v471, 23
  %v473 = vor.u32 4788187, %v472
  %v474 = vand.u32 2147483647, %v473
  %v476 = vcvt.s32.f32 %v469
  %v477 = vmul.f32 %v476, %v474
  %v478 = vxor.u32 %v477, 2147483648
  %v479 = vsel %vm396, %v478, %v477
  %v480 = vsub.s32 4, %v456
  %v481 = vsel %vm396, %v480, %v456
  %v482 = vsel %vm395, %v80, %v479
  %v483 = vsel %vm395, 0, %v481
  %v484 = vcosq.f32.pop %v482
  %v485 = vsinq.f32.pop %v482
  %vm486 = vweird.f32 %v80
  %v487 = vand.u32 %v483, 3
  %vm488 = vcmp.lt.s32.totalorder %v487, 2
  %vm489 = vcmp.eq.s32.totalorder %v487, 0
  %v490 = vxor.u32 %v485, 2147483648
  %v491 = vsel %vm489, %v484, %v490
  %vm492 = vcmp.eq.s32.totalorder %v487, 2
  %v493 = vxor.u32 %v484, 2147483648
  %v494 = vsel %vm492, %v493, %v485
  %v495 = vsel %vm488, %v491, %v494
  %v496 = vsel %vm486, nan, %v495
  %v497 = vand.u32 2147483647, %v81
  %vm498 = vcmp.le.f32.partialorder %v497, 0.7853982
  %vm499 = vcmp.lt.s32.totalorder %v81, 0
  %v500 = vand.u32 %v81, 2139095040
  %v501 = vshrl.u32 %v500, 23
  %v502 = vsub.s32 %v501, 127
  %v503 = vand.u32 2147483647, %v81
  %v504 = vand.u32 %v503, 8388607
  %v505 = vor.u32 %v504, 8388608
  %v506 = vsub.s32 0, %v505
  %v507 = vadd.s32 %v502, 1
  %vm508 = vcmp.gt.s32.totalorder %v507, 0
  %v509 = vsel %vm508, %v507, 0
  %v510 = vshrl.u32 %v509, 5
  %v511 = vand.u32 %v509, 31
  %v512 = vsub.s32 32, %v511
  %v513 = vshrl.u32 683565275, %v512
  %v514 = vshll.u32 683565275, %v511
  %v515 = vshrl.u32 2475754826, %v512
  %v516 = vor.u32 %v514, %v515
  %v517 = vshll.u32 2475754826, %v511
  %v518 = vshrl.u32 2131351028, %v512
  %v519 = vor.u32 %v517, %v518
  %v520 = vshll.u32 2131351028, %v511
  %v521 = vshrl.u32 2102212464, %v512
  %v522 = vor.u32 %v520, %v521
  %v523 = vshll.u32 2102212464, %v511
  %v524 = vshrl.u32 920167782, %v512
  %v525 = vor.u32 %v523, %v524
  %v526 = vshll.u32 920167782, %v511
  %v527 = vshrl.u32 1326507024, %v512
  %v528 = vor.u32 %v526, %v527
  %vm529 = vcmp.lt.s32.totalorder %v510, 1
  %vm530 = vcmp.lt.s32.totalorder %v510, 2
  %vm531 = vcmp.lt.s32.totalorder %v510, 3
  %vm532 = vcmp.lt.s32.totalorder %v510, 4
  %v533 = vsel %vm529, %v513, %v516
  %v534 = vsel %vm532, %v522, 2102212464
  %v535 = vsel %vm531, %v519, %v534
  %v536 = vsel %vm530, %v533, %v535
  %v537 = vsel %vm529, %v516, %v519
  %v538 = vsel %vm532, %v525, 920167782
  %v539 = vsel %vm531, %v522, %v538
  %v540 = vsel %vm530, %v537, %v539
  %v541 = vsel %vm529, %v519, %v522
  %v542 = vsel %vm532, %v528, 1326507024
  %v543 = vsel %vm531, %v525, %v542
  %v544 = vsel %vm530, %v541, %v543
  %v545 = vshll.u32 %v505, 8
  %v546 = vmul.u32.u64.compose %v545, %v544
  %v547 = vextract.low.u32 %v546
  %v548 = vextract.high.u32 %v546
  %v549 = vmul.u32.u64.compose %v545, %v540
  %v550 = vextract.low.u32 %v549
  %v551 = vextract.high.u32 %v549
  %v552 = vmul.u32 %v545, %v536
  %v553 = vadd.s32 %v548, %v550
  %vm554 = vc.u32 %v548, %v550
  %v555 = vadd.s32 %v551, 1
  %v556 = vsel %vm554, %v555, %v551
  %v557 = vadd.s32 %v552, %v556
  %v558 = vadd.s32 %v557, 536870912
  %v559 = vshrl.u32 %v558, 30
  %v560 = vshll.u32 %v559, 30
  %v561 = vsub.s32 %v557, %v560
  %vm562 = vcmp.lt.s32.totalorder %v561, 0
  %v563 = vsub.s32 0, %v561
  %v564 = vsel %vm562, %v563, %v561
  %v565 = vclz %v564
  %v566 = vsub.s32 %v565, 2
  %vm567 = vcmp.gt.s32.totalorder 0, %v566
  %v568 = vsel %vm567, 0, %v566
  %v569 = vsub.s32 32, %v568
  %v570 = vshll.u32 %v561, %v568
  %v571 = vshrl.u32 %v553, %v569
  %v572 = vor.u32 %v570, %v571
  %v573 = vsub.s32 4294967266, %v568
  %v574 = vadd.s32 %v573, 127
  %v575 = vshll.u32 %v574, 23
  %v576 = vor.u32 4788187, %v575
  %v577 = vand.u32 2147483647, %v576
  %v579 = vcvt.s32.f32 %v572
  %v580 = vmul.f32 %v579, %v577
  %v581 = vxor.u32 %v580, 2147483648
  %v582 = vsel %vm499, %v581, %v580
  %v583 = vsub.s32 4, %v559
  %v584 = vsel %vm499, %v583, %v559
  %v585 = vsel %vm498, %v81, %v582
  %v586 = vsel %vm498, 0, %v584
  %v587 = vcosq.f32.pop %v585
  %v588 = vsinq.f32.pop %v585
  %vm589 = vweird.f32 %v81
  %v590 = vand.u32 %v586, 3
  %vm591 = vcmp.lt.s32.totalorder %v590, 2
  %vm592 = vcmp.eq.s32.totalorder %v590, 0
  %v593 = vxor.u32 %v588, 2147483648
  %v594 = vsel %vm592, %v587, %v593
  %vm595 = vcmp.eq.s32.totalorder %v590, 2
  %v596 = vxor.u32 %v587, 2147483648
  %v597 = vsel %vm595, %v596, %v588
  %v598 = vsel %vm591, %v594, %v597
  %v599 = vsel %vm589, nan, %v598
  %v600 = vand.u32 2147483647, %v82
  %vm601 = vcmp.le.f32.partialorder %v600, 0.7853982
  %vm602 = vcmp.lt.s32.totalorder %v82, 0
  %v603 = vand.u32 %v82, 2139095040
  %v604 = vshrl.u32 %v603, 23
  %v605 = vsub.s32 %v604, 127
  %v606 = vand.u32 2147483647, %v82
  %v607 = vand.u32 %v606, 8388607
  %v608 = vor.u32 %v607, 8388608
  %v609 = vsub.s32 0, %v608
  %v610 = vadd.s32 %v605, 1
  %vm611 = vcmp.gt.s32.totalorder %v610, 0
  %v612 = vsel %vm611, %v610, 0
  %v613 = vshrl.u32 %v612, 5
  %v614 = vand.u32 %v612, 31
  %v615 = vsub.s32 32, %v614
  %v616 = vshrl.u32 683565275, %v615
  %v617 = vshll.u32 683565275, %v614
  %v618 = vshrl.u32 2475754826, %v615
  %v619 = vor.u32 %v617, %v618
  %v620 = vshll.u32 2475754826, %v614
  %v621 = vshrl.u32 2131351028, %v615
  %v622 = vor.u32 %v620, %v621
  %v623 = vshll.u32 2131351028, %v614
  %v624 = vshrl.u32 2102212464, %v615
  %v625 = vor.u32 %v623, %v624
  %v626 = vshll.u32 2102212464, %v614
  %v627 = vshrl.u32 920167782, %v615
  %v628 = vor.u32 %v626, %v627
  %v629 = vshll.u32 920167782, %v614
  %v630 = vshrl.u32 1326507024, %v615
  %v631 = vor.u32 %v629, %v630
  %vm632 = vcmp.lt.s32.totalorder %v613, 1
  %vm633 = vcmp.lt.s32.totalorder %v613, 2
  %vm634 = vcmp.lt.s32.totalorder %v613, 3
  %vm635 = vcmp.lt.s32.totalorder %v613, 4
  %v636 = vsel %vm632, %v616, %v619
  %v637 = vsel %vm635, %v625, 2102212464
  %v638 = vsel %vm634, %v622, %v637
  %v639 = vsel %vm633, %v636, %v638
  %v640 = vsel %vm632, %v619, %v622
  %v641 = vsel %vm635, %v628, 920167782
  %v642 = vsel %vm634, %v625, %v641
  %v643 = vsel %vm633, %v640, %v642
  %v644 = vsel %vm632, %v622, %v625
  %v645 = vsel %vm635, %v631, 1326507024
  %v646 = vsel %vm634, %v628, %v645
  %v647 = vsel %vm633, %v644, %v646
  %v648 = vshll.u32 %v608, 8
  %v649 = vmul.u32.u64.compose %v648, %v647
  %v650 = vextract.low.u32 %v649
  %v651 = vextract.high.u32 %v649
  %v652 = vmul.u32.u64.compose %v648, %v643
  %v653 = vextract.low.u32 %v652
  %v654 = vextract.high.u32 %v652
  %v655 = vmul.u32 %v648, %v639
  %v656 = vadd.s32 %v651, %v653
  %vm657 = vc.u32 %v651, %v653
  %v658 = vadd.s32 %v654, 1
  %v659 = vsel %vm657, %v658, %v654
  %v660 = vadd.s32 %v655, %v659
  %v661 = vadd.s32 %v660, 536870912
  %v662 = vshrl.u32 %v661, 30
  %v663 = vshll.u32 %v662, 30
  %v664 = vsub.s32 %v660, %v663
  %vm665 = vcmp.lt.s32.totalorder %v664, 0
  %v666 = vsub.s32 0, %v664
  %v667 = vsel %vm665, %v666, %v664
  %v668 = vclz %v667
  %v669 = vsub.s32 %v668, 2
  %vm670 = vcmp.gt.s32.totalorder 0, %v669
  %v671 = vsel %vm670, 0, %v669
  %v672 = vsub.s32 32, %v671
  %v673 = vshll.u32 %v664, %v671
  %v674 = vshrl.u32 %v656, %v672
  %v675 = vor.u32 %v673, %v674
  %v676 = vsub.s32 4294967266, %v671
  %v677 = vadd.s32 %v676, 127
  %v678 = vshll.u32 %v677, 23
  %v679 = vor.u32 4788187, %v678
  %v680 = vand.u32 2147483647, %v679
  %v682 = vcvt.s32.f32 %v675
  %v683 = vmul.f32 %v682, %v680
  %v684 = vxor.u32 %v683, 2147483648
  %v685 = vsel %vm602, %v684, %v683
  %v686 = vsub.s32 4, %v662
  %v687 = vsel %vm602, %v686, %v662
  %v688 = vsel %vm601, %v82, %v685
  %v689 = vsel %vm601, 0, %v687
  %v690 = vcosq.f32.pop %v688
  %v691 = vsinq.f32.pop %v688
  %vm692 = vweird.f32 %v82
  %v693 = vand.u32 %v689, 3
  %vm694 = vcmp.lt.s32.totalorder %v693, 2
  %vm695 = vcmp.eq.s32.totalorder %v693, 0
  %v696 = vxor.u32 %v691, 2147483648
  %v697 = vsel %vm695, %v690, %v696
  %vm698 = vcmp.eq.s32.totalorder %v693, 2
  %v699 = vxor.u32 %v690, 2147483648
  %v700 = vsel %vm698, %v699, %v691
  %v701 = vsel %vm694, %v697, %v700
  %v702 = vsel %vm692, nan, %v701
  %v703 = vand.u32 2147483647, %v83
  %vm704 = vcmp.le.f32.partialorder %v703, 0.7853982
  %vm705 = vcmp.lt.s32.totalorder %v83, 0
  %v706 = vand.u32 %v83, 2139095040
  %v707 = vshrl.u32 %v706, 23
  %v708 = vsub.s32 %v707, 127
  %v709 = vand.u32 2147483647, %v83
  %v710 = vand.u32 %v709, 8388607
  %v711 = vor.u32 %v710, 8388608
  %v712 = vsub.s32 0, %v711
  %v713 = vadd.s32 %v708, 1
  %vm714 = vcmp.gt.s32.totalorder %v713, 0
  %v715 = vsel %vm714, %v713, 0
  %v716 = vshrl.u32 %v715, 5
  %v717 = vand.u32 %v715, 31
  %v718 = vsub.s32 32, %v717
  %v719 = vshrl.u32 683565275, %v718
  %v720 = vshll.u32 683565275, %v717
  %v721 = vshrl.u32 2475754826, %v718
  %v722 = vor.u32 %v720, %v721
  %v723 = vshll.u32 2475754826, %v717
  %v724 = vshrl.u32 2131351028, %v718
  %v725 = vor.u32 %v723, %v724
  %v726 = vshll.u32 2131351028, %v717
  %v727 = vshrl.u32 2102212464, %v718
  %v728 = vor.u32 %v726, %v727
  %v729 = vshll.u32 2102212464, %v717
  %v730 = vshrl.u32 920167782, %v718
  %v731 = vor.u32 %v729, %v730
  %v732 = vshll.u32 920167782, %v717
  %v733 = vshrl.u32 1326507024, %v718
  %v734 = vor.u32 %v732, %v733
  %vm735 = vcmp.lt.s32.totalorder %v716, 1
  %vm736 = vcmp.lt.s32.totalorder %v716, 2
  %vm737 = vcmp.lt.s32.totalorder %v716, 3
  %vm738 = vcmp.lt.s32.totalorder %v716, 4
  %v739 = vsel %vm735, %v719, %v722
  %v740 = vsel %vm738, %v728, 2102212464
  %v741 = vsel %vm737, %v725, %v740
  %v742 = vsel %vm736, %v739, %v741
  %v743 = vsel %vm735, %v722, %v725
  %v744 = vsel %vm738, %v731, 920167782
  %v745 = vsel %vm737, %v728, %v744
  %v746 = vsel %vm736, %v743, %v745
  %v747 = vsel %vm735, %v725, %v728
  %v748 = vsel %vm738, %v734, 1326507024
  %v749 = vsel %vm737, %v731, %v748
  %v750 = vsel %vm736, %v747, %v749
  %v751 = vshll.u32 %v711, 8
  %v752 = vmul.u32.u64.compose %v751, %v750
  %v753 = vextract.low.u32 %v752
  %v754 = vextract.high.u32 %v752
  %v755 = vmul.u32.u64.compose %v751, %v746
  %v756 = vextract.low.u32 %v755
  %v757 = vextract.high.u32 %v755
  %v758 = vmul.u32 %v751, %v742
  %v759 = vadd.s32 %v754, %v756
  %vm760 = vc.u32 %v754, %v756
  %v761 = vadd.s32 %v757, 1
  %v762 = vsel %vm760, %v761, %v757
  %v763 = vadd.s32 %v758, %v762
  %v764 = vadd.s32 %v763, 536870912
  %v765 = vshrl.u32 %v764, 30
  %v766 = vshll.u32 %v765, 30
  %v767 = vsub.s32 %v763, %v766
  %vm768 = vcmp.lt.s32.totalorder %v767, 0
  %v769 = vsub.s32 0, %v767
  %v770 = vsel %vm768, %v769, %v767
  %v771 = vclz %v770
  %v772 = vsub.s32 %v771, 2
  %vm773 = vcmp.gt.s32.totalorder 0, %v772
  %v774 = vsel %vm773, 0, %v772
  %v775 = vsub.s32 32, %v774
  %v776 = vshll.u32 %v767, %v774
  %v777 = vshrl.u32 %v759, %v775
  %v778 = vor.u32 %v776, %v777
  %v779 = vsub.s32 4294967266, %v774
  %v780 = vadd.s32 %v779, 127
  %v781 = vshll.u32 %v780, 23
  %v782 = vor.u32 4788187, %v781
  %v783 = vand.u32 2147483647, %v782
  %v785 = vcvt.s32.f32 %v778
  %v786 = vmul.f32 %v785, %v783
  %v787 = vxor.u32 %v786, 2147483648
  %v788 = vsel %vm705, %v787, %v786
  %v789 = vsub.s32 4, %v765
  %v790 = vsel %vm705, %v789, %v765
  %v791 = vsel %vm704, %v83, %v788
  %v792 = vsel %vm704, 0, %v790
  %v793 = vcosq.f32.pop %v791
  %v794 = vsinq.f32.pop %v791
  %vm795 = vweird.f32 %v83
  %v796 = vand.u32 %v792, 3
  %vm797 = vcmp.lt.s32.totalorder %v796, 2
  %vm798 = vcmp.eq.s32.totalorder %v796, 0
  %v799 = vxor.u32 %v794, 2147483648
  %v800 = vsel %vm798, %v793, %v799
  %vm801 = vcmp.eq.s32.totalorder %v796, 2
  %v802 = vxor.u32 %v793, 2147483648
  %v803 = vsel %vm801, %v802, %v794
  %v804 = vsel %vm797, %v800, %v803
  %v805 = vsel %vm795, nan, %v804
  %v806 = vand.u32 2147483647, %v84
  %vm807 = vcmp.le.f32.partialorder %v806, 0.7853982
  %vm808 = vcmp.lt.s32.totalorder %v84, 0
  %v809 = vand.u32 %v84, 2139095040
  %v810 = vshrl.u32 %v809, 23
  %v811 = vsub.s32 %v810, 127
  %v812 = vand.u32 2147483647, %v84
  %v813 = vand.u32 %v812, 8388607
  %v814 = vor.u32 %v813, 8388608
  %v815 = vsub.s32 0, %v814
  %v816 = vadd.s32 %v811, 1
  %vm817 = vcmp.gt.s32.totalorder %v816, 0
  %v818 = vsel %vm817, %v816, 0
  %v819 = vshrl.u32 %v818, 5
  %v820 = vand.u32 %v818, 31
  %v821 = vsub.s32 32, %v820
  %v822 = vshrl.u32 683565275, %v821
  %v823 = vshll.u32 683565275, %v820
  %v824 = vshrl.u32 2475754826, %v821
  %v825 = vor.u32 %v823, %v824
  %v826 = vshll.u32 2475754826, %v820
  %v827 = vshrl.u32 2131351028, %v821
  %v828 = vor.u32 %v826, %v827
  %v829 = vshll.u32 2131351028, %v820
  %v830 = vshrl.u32 2102212464, %v821
  %v831 = vor.u32 %v829, %v830
  %v832 = vshll.u32 2102212464, %v820
  %v833 = vshrl.u32 920167782, %v821
  %v834 = vor.u32 %v832, %v833
  %v835 = vshll.u32 920167782, %v820
  %v836 = vshrl.u32 1326507024, %v821
  %v837 = vor.u32 %v835, %v836
  %vm838 = vcmp.lt.s32.totalorder %v819, 1
  %vm839 = vcmp.lt.s32.totalorder %v819, 2
  %vm840 = vcmp.lt.s32.totalorder %v819, 3
  %vm841 = vcmp.lt.s32.totalorder %v819, 4
  %v842 = vsel %vm838, %v822, %v825
  %v843 = vsel %vm841, %v831, 2102212464
  %v844 = vsel %vm840, %v828, %v843
  %v845 = vsel %vm839, %v842, %v844
  %v846 = vsel %vm838, %v825, %v828
  %v847 = vsel %vm841, %v834, 920167782
  %v848 = vsel %vm840, %v831, %v847
  %v849 = vsel %vm839, %v846, %v848
  %v850 = vsel %vm838, %v828, %v831
  %v851 = vsel %vm841, %v837, 1326507024
  %v852 = vsel %vm840, %v834, %v851
  %v853 = vsel %vm839, %v850, %v852
  %v854 = vshll.u32 %v814, 8
  %v855 = vmul.u32.u64.compose %v854, %v853
  %v856 = vextract.low.u32 %v855
  %v857 = vextract.high.u32 %v855
  %v858 = vmul.u32.u64.compose %v854, %v849
  %v859 = vextract.low.u32 %v858
  %v860 = vextract.high.u32 %v858
  %v861 = vmul.u32 %v854, %v845
  %v862 = vadd.s32 %v857, %v859
  %vm863 = vc.u32 %v857, %v859
  %v864 = vadd.s32 %v860, 1
  %v865 = vsel %vm863, %v864, %v860
  %v866 = vadd.s32 %v861, %v865
  %v867 = vadd.s32 %v866, 536870912
  %v868 = vshrl.u32 %v867, 30
  %v869 = vshll.u32 %v868, 30
  %v870 = vsub.s32 %v866, %v869
  %vm871 = vcmp.lt.s32.totalorder %v870, 0
  %v872 = vsub.s32 0, %v870
  %v873 = vsel %vm871, %v872, %v870
  %v874 = vclz %v873
  %v875 = vsub.s32 %v874, 2
  %vm876 = vcmp.gt.s32.totalorder 0, %v875
  %v877 = vsel %vm876, 0, %v875
  %v878 = vsub.s32 32, %v877
  %v879 = vshll.u32 %v870, %v877
  %v880 = vshrl.u32 %v862, %v878
  %v881 = vor.u32 %v879, %v880
  %v882 = vsub.s32 4294967266, %v877
  %v883 = vadd.s32 %v882, 127
  %v884 = vshll.u32 %v883, 23
  %v885 = vor.u32 4788187, %v884
  %v886 = vand.u32 2147483647, %v885
  %v888 = vcvt.s32.f32 %v881
  %v889 = vmul.f32 %v888, %v886
  %v890 = vxor.u32 %v889, 2147483648
  %v891 = vsel %vm808, %v890, %v889
  %v892 = vsub.s32 4, %v868
  %v893 = vsel %vm808, %v892, %v868
  %v894 = vsel %vm807, %v84, %v891
  %v895 = vsel %vm807, 0, %v893
  %v896 = vcosq.f32.pop %v894
  %v897 = vsinq.f32.pop %v894
  %vm898 = vweird.f32 %v84
  %v899 = vand.u32 %v895, 3
  %vm900 = vcmp.lt.s32.totalorder %v899, 2
  %vm901 = vcmp.eq.s32.totalorder %v899, 0
  %v902 = vxor.u32 %v897, 2147483648
  %v903 = vsel %vm901, %v896, %v902
  %vm904 = vcmp.eq.s32.totalorder %v899, 2
  %v905 = vxor.u32 %v896, 2147483648
  %v906 = vsel %vm904, %v905, %v897
  %v907 = vsel %vm900, %v903, %v906
  %v908 = vsel %vm898, nan, %v907
  %v909 = vmul.f32 %v187, 0.5
  %v910 = vmul.f32 %v290, 0.5
  %v911 = vmul.f32 %v393, 0.5
  %v912 = vmul.f32 %v496, 0.5
  %v913 = vmul.f32 %v599, 0.5
  %v914 = vmul.f32 %v702, 0.5
  %v915 = vmul.f32 %v805, 0.5
  %v916 = vmul.f32 %v908, 0.5
  %v917 = vadd.f32 %v909, 0.5
  %v918 = vadd.f32 %v910, 0.5
  %v919 = vadd.f32 %v911, 0.5
  %v920 = vadd.f32 %v912, 0.5
  %v921 = vadd.f32 %v913, 0.5
  %v922 = vadd.f32 %v914, 0.5
  %v923 = vadd.f32 %v915, 0.5
  %v924 = vadd.f32 %v916, 0.5
  %v925 = vand.u32 2147483647, %v36
  %v927 = vlaneseq
  %v928 = vshrl.u32 %v927, 7
  %v929 = vsub.s32 0, %v928
  %v930 = vrot.slane %v925, %v929
  %v931 = vlaneseq
  %v932 = vshrl.u32 %v931, 7
  %v933 = vsub.s32 1, %v932
  %v934 = vrot.slane %v925, %v933
  %v935 = vlaneseq
  %v936 = vshrl.u32 %v935, 7
  %v937 = vsub.s32 2, %v936
  %v938 = vrot.slane %v925, %v937
  %v939 = vlaneseq
  %v940 = vshrl.u32 %v939, 7
  %v941 = vsub.s32 3, %v940
  %v942 = vrot.slane %v925, %v941
  %948 = vset.pattern.permute.xlu0 0
  %949 = vperm.xlu0 %948, %v42
  %v950 = vpop.permute.xlu0 %949
  %953 = vset.pattern.permute.xlu0 0
  %954 = vperm.xlu0 %953, %v43
  %v955 = vpop.permute.xlu0 %954
  %vm957 = vcmp.le.f32.partialorder %v930, %v950
  %vm958 = vcmp.le.f32.partialorder %v934, %v950
  %vm959 = vcmp.le.f32.partialorder %v938, %v950
  %vm960 = vcmp.le.f32.partialorder %v942, %v950
  %vm961 = vcmp.le.f32.partialorder %v930, %v955
  %vm962 = vcmp.le.f32.partialorder %v934, %v955
  %vm963 = vcmp.le.f32.partialorder %v938, %v955
  %vm964 = vcmp.le.f32.partialorder %v942, %v955
  %v965 = vsel %vm957, %v917, 0.0
  %v966 = vsel %vm958, %v918, 0.0
  %v967 = vsel %vm959, %v919, 0.0
  %v968 = vsel %vm960, %v920, 0.0
  %v969 = vsel %vm961, %v921, 0.0
  %v970 = vsel %vm962, %v922, 0.0
  %v971 = vsel %vm963, %v923, 0.0
  %v972 = vsel %vm964, %v924, 0.0
  %v973 = vmul.f32 %v965, %v965
  %v974 = vmul.f32 %v966, %v966
  %v975 = vmul.f32 %v967, %v967
  %v976 = vmul.f32 %v968, %v968
  %v977 = vmul.f32 %v969, %v969
  %v978 = vmul.f32 %v970, %v970
  %v979 = vmul.f32 %v971, %v971
  %v980 = vmul.f32 %v972, %v972
  %v981 = vadd.f32 %v973, %v974
  %v982 = vadd.f32 %v981, %v975
  %v983 = vadd.f32 %v982, %v976
  %984 = vadd.xlane.f32.xlu0 %v983
  %v985 = vpop.xlane.xlu0 %984
  %v986 = vadd.f32 %v977, %v978
  %v987 = vadd.f32 %v986, %v979
  %v988 = vadd.f32 %v987, %v980
  %989 = vadd.xlane.f32.xlu0 %v988
  %v990 = vpop.xlane.xlu0 %989
  %v991 = vrsqrt.pop %v985
  %v992 = vrsqrt.pop %v990
  %v993 = vmul.f32 %v965, %v991
  %v994 = vmul.f32 %v966, %v991
  %v995 = vmul.f32 %v967, %v991
  %v996 = vmul.f32 %v968, %v991
  %v997 = vmul.f32 %v969, %v992
  %v998 = vmul.f32 %v970, %v992
  %v999 = vmul.f32 %v971, %v992
  %v1000 = vmul.f32 %v972, %v992
  %v1001 = vmul.f32 %v26, %v993
  %v1002 = vmul.f32 %v27, %v994
  %v1003 = vmul.f32 %v28, %v995
  %v1004 = vmul.f32 %v29, %v996
  %v1005 = vmul.f32 %v30, %v997
  %v1006 = vmul.f32 %v31, %v998
  %v1007 = vmul.f32 %v32, %v999
  %v1008 = vmul.f32 %v33, %v1000
  %v1009 = vadd.f32 %v1001, %v1002
  %v1010 = vadd.f32 %v1009, %v1003
  %v1011 = vadd.f32 %v1010, %v1004
  %1012 = vadd.xlane.f32.xlu0 %v1011
  %v1013 = vpop.xlane.xlu0 %1012
  %v1014 = vadd.f32 %v1005, %v1006
  %v1015 = vadd.f32 %v1014, %v1007
  %v1016 = vadd.f32 %v1015, %v1008
  %1017 = vadd.xlane.f32.xlu0 %v1016
  %v1018 = vpop.xlane.xlu0 %1017
  %v1019 = vadd.f32 %v993, %v994
  %v1020 = vadd.f32 %v1019, %v995
  %v1021 = vadd.f32 %v1020, %v996
  %1022 = vadd.xlane.f32.xlu0 %v1021
  %v1023 = vpop.xlane.xlu0 %1022
  %v1024 = vadd.f32 %v997, %v998
  %v1025 = vadd.f32 %v1024, %v999
  %v1026 = vadd.f32 %v1025, %v1000
  %1027 = vadd.xlane.f32.xlu0 %v1026
  %v1028 = vpop.xlane.xlu0 %1027
  %v1029 = vrcp.pop %v1023
  %v1030 = vmul.f32 %v1013, %v1029
  %v1031 = vrcp.pop %v1028
  %v1032 = vmul.f32 %v1018, %v1031
  %v1033 = vmul.f32 %v993, %v1030
  %v1034 = vmul.f32 %v994, %v1030
  %v1035 = vmul.f32 %v995, %v1030
  %v1036 = vmul.f32 %v996, %v1030
  %v1037 = vmul.f32 %v997, %v1032
  %v1038 = vmul.f32 %v998, %v1032
  %v1039 = vmul.f32 %v999, %v1032
  %v1040 = vmul.f32 %v1000, %v1032
  %v1041 = vsub.f32 %v1001, %v1033
  %v1042 = vsub.f32 %v1002, %v1034
  %v1043 = vsub.f32 %v1003, %v1035
  %v1044 = vsub.f32 %v1004, %v1036
  %v1045 = vsub.f32 %v1005, %v1037
  %v1046 = vsub.f32 %v1006, %v1038
  %v1047 = vsub.f32 %v1007, %v1039
  %v1048 = vsub.f32 %v1008, %v1040
  %v1049 = vpack.c.bf16 %v1045, %v1041
  %v1050 = vpack.c.bf16 %v1046, %v1042
  %v1051 = vpack.c.bf16 %v1047, %v1043
  %v1052 = vpack.c.bf16 %v1048, %v1044
  %v1053 = vld [vmem:[%s4] sm:$0xff]
  %v1054 = vld [vmem:[%s4 + $0x8] sm:$0xff]
  %v1055 = vld [vmem:[%s4 + $0x10] sm:$0xff]
  %v1056 = vld [vmem:[%s4 + $0x18] sm:$0xff]
  %v1057 = vld [vmem:[%s4 + $0x20] sm:$0xff]
  %v1058 = vld [vmem:[%s4 + $0x28] sm:$0xff]
  %v1059 = vld [vmem:[%s4 + $0x30] sm:$0xff]
  %v1060 = vld [vmem:[%s4 + $0x38] sm:$0xff]
  %v1061 = vld [vmem:[%s4 + $0x40] sm:$0xff]
  %v1062 = vld [vmem:[%s4 + $0x48] sm:$0xff]
  %v1063 = vld [vmem:[%s4 + $0x50] sm:$0xff]
  %v1064 = vld [vmem:[%s4 + $0x58] sm:$0xff]
  %v1065 = vld [vmem:[%s4 + $0x60] sm:$0xff]
  %v1066 = vld [vmem:[%s4 + $0x68] sm:$0xff]
  %v1067 = vld [vmem:[%s4 + $0x70] sm:$0xff]
  %v1068 = vld [vmem:[%s4 + $0x78] sm:$0xff]
  %v1069 = vld [vmem:[%s4 + $0x80] sm:$0xff]
  %v1070 = vld [vmem:[%s4 + $0x88] sm:$0xff]
  %v1071 = vld [vmem:[%s4 + $0x90] sm:$0xff]
  %v1072 = vld [vmem:[%s4 + $0x98] sm:$0xff]
  %v1073 = vld [vmem:[%s4 + $0xa0] sm:$0xff]
  %v1074 = vld [vmem:[%s4 + $0xa8] sm:$0xff]
  %v1075 = vld [vmem:[%s4 + $0xb0] sm:$0xff]
  %v1076 = vld [vmem:[%s4 + $0xb8] sm:$0xff]
  %v1077 = vld [vmem:[%s4 + $0xc0] sm:$0xff]
  %v1078 = vld [vmem:[%s4 + $0xc8] sm:$0xff]
  %v1079 = vld [vmem:[%s4 + $0xd0] sm:$0xff]
  %v1080 = vld [vmem:[%s4 + $0xd8] sm:$0xff]
  %v1081 = vld [vmem:[%s4 + $0xe0] sm:$0xff]
  %v1082 = vld [vmem:[%s4 + $0xe8] sm:$0xff]
  %v1083 = vld [vmem:[%s4 + $0xf0] sm:$0xff]
  %v1084 = vld [vmem:[%s4 + $0xf8] sm:$0xff]
  %v1085 = vld [vmem:[%s4 + $0x100] sm:$0xff]
  %v1086 = vld [vmem:[%s4 + $0x108] sm:$0xff]
  %v1087 = vld [vmem:[%s4 + $0x110] sm:$0xff]
  %v1088 = vld [vmem:[%s4 + $0x118] sm:$0xff]
  %v1089 = vld [vmem:[%s4 + $0x120] sm:$0xff]
  %v1090 = vld [vmem:[%s4 + $0x128] sm:$0xff]
  %v1091 = vld [vmem:[%s4 + $0x130] sm:$0xff]
  %v1092 = vld [vmem:[%s4 + $0x138] sm:$0xff]
  %v1093 = vld [vmem:[%s4 + $0x140] sm:$0xff]
  %v1094 = vld [vmem:[%s4 + $0x148] sm:$0xff]
  %v1095 = vld [vmem:[%s4 + $0x150] sm:$0xff]
  %v1096 = vld [vmem:[%s4 + $0x158] sm:$0xff]
  %v1097 = vld [vmem:[%s4 + $0x160] sm:$0xff]
  %v1098 = vld [vmem:[%s4 + $0x168] sm:$0xff]
  %v1099 = vld [vmem:[%s4 + $0x170] sm:$0xff]
  %v1100 = vld [vmem:[%s4 + $0x178] sm:$0xff]
  %v1101 = vld [vmem:[%s4 + $0x180] sm:$0xff]
  %v1102 = vld [vmem:[%s4 + $0x188] sm:$0xff]
  %v1103 = vld [vmem:[%s4 + $0x190] sm:$0xff]
  %v1104 = vld [vmem:[%s4 + $0x198] sm:$0xff]
  %v1105 = vld [vmem:[%s4 + $0x1a0] sm:$0xff]
  %v1106 = vld [vmem:[%s4 + $0x1a8] sm:$0xff]
  %v1107 = vld [vmem:[%s4 + $0x1b0] sm:$0xff]
  %v1108 = vld [vmem:[%s4 + $0x1b8] sm:$0xff]
  %v1109 = vld [vmem:[%s4 + $0x1c0] sm:$0xff]
  %v1110 = vld [vmem:[%s4 + $0x1c8] sm:$0xff]
  %v1111 = vld [vmem:[%s4 + $0x1d0] sm:$0xff]
  %v1112 = vld [vmem:[%s4 + $0x1d8] sm:$0xff]
  %v1113 = vld [vmem:[%s4 + $0x1e0] sm:$0xff]
  %v1114 = vld [vmem:[%s4 + $0x1e8] sm:$0xff]
  %v1115 = vld [vmem:[%s4 + $0x1f0] sm:$0xff]
  %v1116 = vld [vmem:[%s4 + $0x1f8] sm:$0xff]
  %v1117 = vld [vmem:[%s4 + $0x200] sm:$0xff]
  %v1118 = vld [vmem:[%s4 + $0x208] sm:$0xff]
  %v1119 = vld [vmem:[%s4 + $0x210] sm:$0xff]
  %v1120 = vld [vmem:[%s4 + $0x218] sm:$0xff]
  %v1121 = vld [vmem:[%s4 + $0x220] sm:$0xff]
  %v1122 = vld [vmem:[%s4 + $0x228] sm:$0xff]
  %v1123 = vld [vmem:[%s4 + $0x230] sm:$0xff]
  %v1124 = vld [vmem:[%s4 + $0x238] sm:$0xff]
  %v1125 = vld [vmem:[%s4 + $0x240] sm:$0xff]
  %v1126 = vld [vmem:[%s4 + $0x248] sm:$0xff]
  %v1127 = vld [vmem:[%s4 + $0x250] sm:$0xff]
  %v1128 = vld [vmem:[%s4 + $0x258] sm:$0xff]
  %v1129 = vld [vmem:[%s4 + $0x260] sm:$0xff]
  %v1130 = vld [vmem:[%s4 + $0x268] sm:$0xff]
  %v1131 = vld [vmem:[%s4 + $0x270] sm:$0xff]
  %v1132 = vld [vmem:[%s4 + $0x278] sm:$0xff]
  %v1133 = vld [vmem:[%s4 + $0x280] sm:$0xff]
  %v1134 = vld [vmem:[%s4 + $0x288] sm:$0xff]
  %v1135 = vld [vmem:[%s4 + $0x290] sm:$0xff]
  %v1136 = vld [vmem:[%s4 + $0x298] sm:$0xff]
  %v1137 = vld [vmem:[%s4 + $0x2a0] sm:$0xff]
  %v1138 = vld [vmem:[%s4 + $0x2a8] sm:$0xff]
  %v1139 = vld [vmem:[%s4 + $0x2b0] sm:$0xff]
  %v1140 = vld [vmem:[%s4 + $0x2b8] sm:$0xff]
  %v1141 = vld [vmem:[%s4 + $0x2c0] sm:$0xff]
  %v1142 = vld [vmem:[%s4 + $0x2c8] sm:$0xff]
  %v1143 = vld [vmem:[%s4 + $0x2d0] sm:$0xff]
  %v1144 = vld [vmem:[%s4 + $0x2d8] sm:$0xff]
  %v1145 = vld [vmem:[%s4 + $0x2e0] sm:$0xff]
  %v1146 = vld [vmem:[%s4 + $0x2e8] sm:$0xff]
  %v1147 = vld [vmem:[%s4 + $0x2f0] sm:$0xff]
  %v1148 = vld [vmem:[%s4 + $0x2f8] sm:$0xff]
  %v1149 = vld [vmem:[%s4 + $0x300] sm:$0xff]
  %v1150 = vld [vmem:[%s4 + $0x308] sm:$0xff]
  %v1151 = vld [vmem:[%s4 + $0x310] sm:$0xff]
  %v1152 = vld [vmem:[%s4 + $0x318] sm:$0xff]
  %v1153 = vld [vmem:[%s4 + $0x320] sm:$0xff]
  %v1154 = vld [vmem:[%s4 + $0x328] sm:$0xff]
  %v1155 = vld [vmem:[%s4 + $0x330] sm:$0xff]
  %v1156 = vld [vmem:[%s4 + $0x338] sm:$0xff]
  %v1157 = vld [vmem:[%s4 + $0x340] sm:$0xff]
  %v1158 = vld [vmem:[%s4 + $0x348] sm:$0xff]
  %v1159 = vld [vmem:[%s4 + $0x350] sm:$0xff]
  %v1160 = vld [vmem:[%s4 + $0x358] sm:$0xff]
  %v1161 = vld [vmem:[%s4 + $0x360] sm:$0xff]
  %v1162 = vld [vmem:[%s4 + $0x368] sm:$0xff]
  %v1163 = vld [vmem:[%s4 + $0x370] sm:$0xff]
  %v1164 = vld [vmem:[%s4 + $0x378] sm:$0xff]
  %v1165 = vld [vmem:[%s4 + $0x380] sm:$0xff]
  %v1166 = vld [vmem:[%s4 + $0x388] sm:$0xff]
  %v1167 = vld [vmem:[%s4 + $0x390] sm:$0xff]
  %v1168 = vld [vmem:[%s4 + $0x398] sm:$0xff]
  %v1169 = vld [vmem:[%s4 + $0x3a0] sm:$0xff]
  %v1170 = vld [vmem:[%s4 + $0x3a8] sm:$0xff]
  %v1171 = vld [vmem:[%s4 + $0x3b0] sm:$0xff]
  %v1172 = vld [vmem:[%s4 + $0x3b8] sm:$0xff]
  %v1173 = vld [vmem:[%s4 + $0x3c0] sm:$0xff]
  %v1174 = vld [vmem:[%s4 + $0x3c8] sm:$0xff]
  %v1175 = vld [vmem:[%s4 + $0x3d0] sm:$0xff]
  %v1176 = vld [vmem:[%s4 + $0x3d8] sm:$0xff]
  %v1177 = vld [vmem:[%s4 + $0x3e0] sm:$0xff]
  %v1178 = vld [vmem:[%s4 + $0x3e8] sm:$0xff]
  %v1179 = vld [vmem:[%s4 + $0x3f0] sm:$0xff]
  %v1180 = vld [vmem:[%s4 + $0x3f8] sm:$0xff]
  %v1309 = vunpack.c.l.b16 %v1053
  %v1310 = vunpack.c.h.b16 %v1053
  %v1311 = vunpack.c.l.b16 %v1054
  %v1312 = vunpack.c.h.b16 %v1054
  %v1313 = vunpack.c.l.b16 %v1055
  %v1314 = vunpack.c.h.b16 %v1055
  %v1315 = vunpack.c.l.b16 %v1056
  %v1316 = vunpack.c.h.b16 %v1056
  %v1317 = vunpack.c.l.b16 %v1057
  %v1318 = vunpack.c.h.b16 %v1057
  %v1319 = vunpack.c.l.b16 %v1058
  %v1320 = vunpack.c.h.b16 %v1058
  %v1321 = vunpack.c.l.b16 %v1059
  %v1322 = vunpack.c.h.b16 %v1059
  %v1323 = vunpack.c.l.b16 %v1060
  %v1324 = vunpack.c.h.b16 %v1060
  %v1325 = vunpack.c.l.b16 %v1061
  %v1326 = vunpack.c.h.b16 %v1061
  %v1327 = vunpack.c.l.b16 %v1062
  %v1328 = vunpack.c.h.b16 %v1062
  %v1329 = vunpack.c.l.b16 %v1063
  %v1330 = vunpack.c.h.b16 %v1063
  %v1331 = vunpack.c.l.b16 %v1064
  %v1332 = vunpack.c.h.b16 %v1064
  %v1333 = vunpack.c.l.b16 %v1065
  %v1334 = vunpack.c.h.b16 %v1065
  %v1335 = vunpack.c.l.b16 %v1066
  %v1336 = vunpack.c.h.b16 %v1066
  %v1337 = vunpack.c.l.b16 %v1067
  %v1338 = vunpack.c.h.b16 %v1067
  %v1339 = vunpack.c.l.b16 %v1068
  %v1340 = vunpack.c.h.b16 %v1068
  %v1341 = vunpack.c.l.b16 %v1069
  %v1342 = vunpack.c.h.b16 %v1069
  %v1343 = vunpack.c.l.b16 %v1070
  %v1344 = vunpack.c.h.b16 %v1070
  %v1345 = vunpack.c.l.b16 %v1071
  %v1346 = vunpack.c.h.b16 %v1071
  %v1347 = vunpack.c.l.b16 %v1072
  %v1348 = vunpack.c.h.b16 %v1072
  %v1349 = vunpack.c.l.b16 %v1073
  %v1350 = vunpack.c.h.b16 %v1073
  %v1351 = vunpack.c.l.b16 %v1074
  %v1352 = vunpack.c.h.b16 %v1074
  %v1353 = vunpack.c.l.b16 %v1075
  %v1354 = vunpack.c.h.b16 %v1075
  %v1355 = vunpack.c.l.b16 %v1076
  %v1356 = vunpack.c.h.b16 %v1076
  %v1357 = vunpack.c.l.b16 %v1077
  %v1358 = vunpack.c.h.b16 %v1077
  %v1359 = vunpack.c.l.b16 %v1078
  %v1360 = vunpack.c.h.b16 %v1078
  %v1361 = vunpack.c.l.b16 %v1079
  %v1362 = vunpack.c.h.b16 %v1079
  %v1363 = vunpack.c.l.b16 %v1080
  %v1364 = vunpack.c.h.b16 %v1080
  %v1365 = vunpack.c.l.b16 %v1081
  %v1366 = vunpack.c.h.b16 %v1081
  %v1367 = vunpack.c.l.b16 %v1082
  %v1368 = vunpack.c.h.b16 %v1082
  %v1369 = vunpack.c.l.b16 %v1083
  %v1370 = vunpack.c.h.b16 %v1083
  %v1371 = vunpack.c.l.b16 %v1084
  %v1372 = vunpack.c.h.b16 %v1084
  %v1373 = vunpack.c.l.b16 %v1085
  %v1374 = vunpack.c.h.b16 %v1085
  %v1375 = vunpack.c.l.b16 %v1086
  %v1376 = vunpack.c.h.b16 %v1086
  %v1377 = vunpack.c.l.b16 %v1087
  %v1378 = vunpack.c.h.b16 %v1087
  %v1379 = vunpack.c.l.b16 %v1088
  %v1380 = vunpack.c.h.b16 %v1088
  %v1381 = vunpack.c.l.b16 %v1089
  %v1382 = vunpack.c.h.b16 %v1089
  %v1383 = vunpack.c.l.b16 %v1090
  %v1384 = vunpack.c.h.b16 %v1090
  %v1385 = vunpack.c.l.b16 %v1091
  %v1386 = vunpack.c.h.b16 %v1091
  %v1387 = vunpack.c.l.b16 %v1092
  %v1388 = vunpack.c.h.b16 %v1092
  %v1389 = vunpack.c.l.b16 %v1093
  %v1390 = vunpack.c.h.b16 %v1093
  %v1391 = vunpack.c.l.b16 %v1094
  %v1392 = vunpack.c.h.b16 %v1094
  %v1393 = vunpack.c.l.b16 %v1095
  %v1394 = vunpack.c.h.b16 %v1095
  %v1395 = vunpack.c.l.b16 %v1096
  %v1396 = vunpack.c.h.b16 %v1096
  %v1397 = vunpack.c.l.b16 %v1097
  %v1398 = vunpack.c.h.b16 %v1097
  %v1399 = vunpack.c.l.b16 %v1098
  %v1400 = vunpack.c.h.b16 %v1098
  %v1401 = vunpack.c.l.b16 %v1099
  %v1402 = vunpack.c.h.b16 %v1099
  %v1403 = vunpack.c.l.b16 %v1100
  %v1404 = vunpack.c.h.b16 %v1100
  %v1405 = vunpack.c.l.b16 %v1101
  %v1406 = vunpack.c.h.b16 %v1101
  %v1407 = vunpack.c.l.b16 %v1102
  %v1408 = vunpack.c.h.b16 %v1102
  %v1409 = vunpack.c.l.b16 %v1103
  %v1410 = vunpack.c.h.b16 %v1103
  %v1411 = vunpack.c.l.b16 %v1104
  %v1412 = vunpack.c.h.b16 %v1104
  %v1413 = vunpack.c.l.b16 %v1105
  %v1414 = vunpack.c.h.b16 %v1105
  %v1415 = vunpack.c.l.b16 %v1106
  %v1416 = vunpack.c.h.b16 %v1106
  %v1417 = vunpack.c.l.b16 %v1107
  %v1418 = vunpack.c.h.b16 %v1107
  %v1419 = vunpack.c.l.b16 %v1108
  %v1420 = vunpack.c.h.b16 %v1108
  %v1421 = vunpack.c.l.b16 %v1109
  %v1422 = vunpack.c.h.b16 %v1109
  %v1423 = vunpack.c.l.b16 %v1110
  %v1424 = vunpack.c.h.b16 %v1110
  %v1425 = vunpack.c.l.b16 %v1111
  %v1426 = vunpack.c.h.b16 %v1111
  %v1427 = vunpack.c.l.b16 %v1112
  %v1428 = vunpack.c.h.b16 %v1112
  %v1429 = vunpack.c.l.b16 %v1113
  %v1430 = vunpack.c.h.b16 %v1113
  %v1431 = vunpack.c.l.b16 %v1114
  %v1432 = vunpack.c.h.b16 %v1114
  %v1433 = vunpack.c.l.b16 %v1115
  %v1434 = vunpack.c.h.b16 %v1115
  %v1435 = vunpack.c.l.b16 %v1116
  %v1436 = vunpack.c.h.b16 %v1116
  %v1437 = vunpack.c.l.b16 %v1117
  %v1438 = vunpack.c.h.b16 %v1117
  %v1439 = vunpack.c.l.b16 %v1118
  %v1440 = vunpack.c.h.b16 %v1118
  %v1441 = vunpack.c.l.b16 %v1119
  %v1442 = vunpack.c.h.b16 %v1119
  %v1443 = vunpack.c.l.b16 %v1120
  %v1444 = vunpack.c.h.b16 %v1120
  %v1445 = vunpack.c.l.b16 %v1121
  %v1446 = vunpack.c.h.b16 %v1121
  %v1447 = vunpack.c.l.b16 %v1122
  %v1448 = vunpack.c.h.b16 %v1122
  %v1449 = vunpack.c.l.b16 %v1123
  %v1450 = vunpack.c.h.b16 %v1123
  %v1451 = vunpack.c.l.b16 %v1124
  %v1452 = vunpack.c.h.b16 %v1124
  %v1453 = vunpack.c.l.b16 %v1125
  %v1454 = vunpack.c.h.b16 %v1125
  %v1455 = vunpack.c.l.b16 %v1126
  %v1456 = vunpack.c.h.b16 %v1126
  %v1457 = vunpack.c.l.b16 %v1127
  %v1458 = vunpack.c.h.b16 %v1127
  %v1459 = vunpack.c.l.b16 %v1128
  %v1460 = vunpack.c.h.b16 %v1128
  %v1461 = vunpack.c.l.b16 %v1129
  %v1462 = vunpack.c.h.b16 %v1129
  %v1463 = vunpack.c.l.b16 %v1130
  %v1464 = vunpack.c.h.b16 %v1130
  %v1465 = vunpack.c.l.b16 %v1131
  %v1466 = vunpack.c.h.b16 %v1131
  %v1467 = vunpack.c.l.b16 %v1132
  %v1468 = vunpack.c.h.b16 %v1132
  %v1469 = vunpack.c.l.b16 %v1133
  %v1470 = vunpack.c.h.b16 %v1133
  %v1471 = vunpack.c.l.b16 %v1134
  %v1472 = vunpack.c.h.b16 %v1134
  %v1473 = vunpack.c.l.b16 %v1135
  %v1474 = vunpack.c.h.b16 %v1135
  %v1475 = vunpack.c.l.b16 %v1136
  %v1476 = vunpack.c.h.b16 %v1136
  %v1477 = vunpack.c.l.b16 %v1137
  %v1478 = vunpack.c.h.b16 %v1137
  %v1479 = vunpack.c.l.b16 %v1138
  %v1480 = vunpack.c.h.b16 %v1138
  %v1481 = vunpack.c.l.b16 %v1139
  %v1482 = vunpack.c.h.b16 %v1139
  %v1483 = vunpack.c.l.b16 %v1140
  %v1484 = vunpack.c.h.b16 %v1140
  %v1485 = vunpack.c.l.b16 %v1141
  %v1486 = vunpack.c.h.b16 %v1141
  %v1487 = vunpack.c.l.b16 %v1142
  %v1488 = vunpack.c.h.b16 %v1142
  %v1489 = vunpack.c.l.b16 %v1143
  %v1490 = vunpack.c.h.b16 %v1143
  %v1491 = vunpack.c.l.b16 %v1144
  %v1492 = vunpack.c.h.b16 %v1144
  %v1493 = vunpack.c.l.b16 %v1145
  %v1494 = vunpack.c.h.b16 %v1145
  %v1495 = vunpack.c.l.b16 %v1146
  %v1496 = vunpack.c.h.b16 %v1146
  %v1497 = vunpack.c.l.b16 %v1147
  %v1498 = vunpack.c.h.b16 %v1147
  %v1499 = vunpack.c.l.b16 %v1148
  %v1500 = vunpack.c.h.b16 %v1148
  %v1501 = vunpack.c.l.b16 %v1149
  %v1502 = vunpack.c.h.b16 %v1149
  %v1503 = vunpack.c.l.b16 %v1150
  %v1504 = vunpack.c.h.b16 %v1150
  %v1505 = vunpack.c.l.b16 %v1151
  %v1506 = vunpack.c.h.b16 %v1151
  %v1507 = vunpack.c.l.b16 %v1152
  %v1508 = vunpack.c.h.b16 %v1152
  %v1509 = vunpack.c.l.b16 %v1153
  %v1510 = vunpack.c.h.b16 %v1153
  %v1511 = vunpack.c.l.b16 %v1154
  %v1512 = vunpack.c.h.b16 %v1154
  %v1513 = vunpack.c.l.b16 %v1155
  %v1514 = vunpack.c.h.b16 %v1155
  %v1515 = vunpack.c.l.b16 %v1156
  %v1516 = vunpack.c.h.b16 %v1156
  %v1517 = vunpack.c.l.b16 %v1157
  %v1518 = vunpack.c.h.b16 %v1157
  %v1519 = vunpack.c.l.b16 %v1158
  %v1520 = vunpack.c.h.b16 %v1158
  %v1521 = vunpack.c.l.b16 %v1159
  %v1522 = vunpack.c.h.b16 %v1159
  %v1523 = vunpack.c.l.b16 %v1160
  %v1524 = vunpack.c.h.b16 %v1160
  %v1525 = vunpack.c.l.b16 %v1161
  %v1526 = vunpack.c.h.b16 %v1161
  %v1527 = vunpack.c.l.b16 %v1162
  %v1528 = vunpack.c.h.b16 %v1162
  %v1529 = vunpack.c.l.b16 %v1163
  %v1530 = vunpack.c.h.b16 %v1163
  %v1531 = vunpack.c.l.b16 %v1164
  %v1532 = vunpack.c.h.b16 %v1164
  %v1533 = vunpack.c.l.b16 %v1165
  %v1534 = vunpack.c.h.b16 %v1165
  %v1535 = vunpack.c.l.b16 %v1166
  %v1536 = vunpack.c.h.b16 %v1166
  %v1537 = vunpack.c.l.b16 %v1167
  %v1538 = vunpack.c.h.b16 %v1167
  %v1539 = vunpack.c.l.b16 %v1168
  %v1540 = vunpack.c.h.b16 %v1168
  %v1541 = vunpack.c.l.b16 %v1169
  %v1542 = vunpack.c.h.b16 %v1169
  %v1543 = vunpack.c.l.b16 %v1170
  %v1544 = vunpack.c.h.b16 %v1170
  %v1545 = vunpack.c.l.b16 %v1171
  %v1546 = vunpack.c.h.b16 %v1171
  %v1547 = vunpack.c.l.b16 %v1172
  %v1548 = vunpack.c.h.b16 %v1172
  %v1549 = vunpack.c.l.b16 %v1173
  %v1550 = vunpack.c.h.b16 %v1173
  %v1551 = vunpack.c.l.b16 %v1174
  %v1552 = vunpack.c.h.b16 %v1174
  %v1553 = vunpack.c.l.b16 %v1175
  %v1554 = vunpack.c.h.b16 %v1175
  %v1555 = vunpack.c.l.b16 %v1176
  %v1556 = vunpack.c.h.b16 %v1176
  %v1557 = vunpack.c.l.b16 %v1177
  %v1558 = vunpack.c.h.b16 %v1177
  %v1559 = vunpack.c.l.b16 %v1178
  %v1560 = vunpack.c.h.b16 %v1178
  %v1561 = vunpack.c.l.b16 %v1179
  %v1562 = vunpack.c.h.b16 %v1179
  %v1563 = vunpack.c.l.b16 %v1180
  %v1564 = vunpack.c.h.b16 %v1180
  %v1565 = vpack.c.b16 %v1313, %v1309
  %v1566 = vpack.c.b16 %v1314, %v1310
  %v1567 = vpack.c.b16 %v1315, %v1311
  %v1568 = vpack.c.b16 %v1316, %v1312
  %v1569 = vpack.c.b16 %v1321, %v1317
  %v1570 = vpack.c.b16 %v1322, %v1318
  %v1571 = vpack.c.b16 %v1323, %v1319
  %v1572 = vpack.c.b16 %v1324, %v1320
  %v1573 = vpack.c.b16 %v1329, %v1325
  %v1574 = vpack.c.b16 %v1330, %v1326
  %v1575 = vpack.c.b16 %v1331, %v1327
  %v1576 = vpack.c.b16 %v1332, %v1328
  %v1577 = vpack.c.b16 %v1337, %v1333
  %v1578 = vpack.c.b16 %v1338, %v1334
  %v1579 = vpack.c.b16 %v1339, %v1335
  %v1580 = vpack.c.b16 %v1340, %v1336
  %v1581 = vpack.c.b16 %v1345, %v1341
  %v1582 = vpack.c.b16 %v1346, %v1342
  %v1583 = vpack.c.b16 %v1347, %v1343
  %v1584 = vpack.c.b16 %v1348, %v1344
  %v1585 = vpack.c.b16 %v1353, %v1349
  %v1586 = vpack.c.b16 %v1354, %v1350
  %v1587 = vpack.c.b16 %v1355, %v1351
  %v1588 = vpack.c.b16 %v1356, %v1352
  %v1589 = vpack.c.b16 %v1361, %v1357
  %v1590 = vpack.c.b16 %v1362, %v1358
  %v1591 = vpack.c.b16 %v1363, %v1359
  %v1592 = vpack.c.b16 %v1364, %v1360
  %v1593 = vpack.c.b16 %v1369, %v1365
  %v1594 = vpack.c.b16 %v1370, %v1366
  %v1595 = vpack.c.b16 %v1371, %v1367
  %v1596 = vpack.c.b16 %v1372, %v1368
  %v1597 = vpack.c.b16 %v1377, %v1373
  %v1598 = vpack.c.b16 %v1378, %v1374
  %v1599 = vpack.c.b16 %v1379, %v1375
  %v1600 = vpack.c.b16 %v1380, %v1376
  %v1601 = vpack.c.b16 %v1385, %v1381
  %v1602 = vpack.c.b16 %v1386, %v1382
  %v1603 = vpack.c.b16 %v1387, %v1383
  %v1604 = vpack.c.b16 %v1388, %v1384
  %v1605 = vpack.c.b16 %v1393, %v1389
  %v1606 = vpack.c.b16 %v1394, %v1390
  %v1607 = vpack.c.b16 %v1395, %v1391
  %v1608 = vpack.c.b16 %v1396, %v1392
  %v1609 = vpack.c.b16 %v1401, %v1397
  %v1610 = vpack.c.b16 %v1402, %v1398
  %v1611 = vpack.c.b16 %v1403, %v1399
  %v1612 = vpack.c.b16 %v1404, %v1400
  %v1613 = vpack.c.b16 %v1409, %v1405
  %v1614 = vpack.c.b16 %v1410, %v1406
  %v1615 = vpack.c.b16 %v1411, %v1407
  %v1616 = vpack.c.b16 %v1412, %v1408
  %v1617 = vpack.c.b16 %v1417, %v1413
  %v1618 = vpack.c.b16 %v1418, %v1414
  %v1619 = vpack.c.b16 %v1419, %v1415
  %v1620 = vpack.c.b16 %v1420, %v1416
  %v1621 = vpack.c.b16 %v1425, %v1421
  %v1622 = vpack.c.b16 %v1426, %v1422
  %v1623 = vpack.c.b16 %v1427, %v1423
  %v1624 = vpack.c.b16 %v1428, %v1424
  %v1625 = vpack.c.b16 %v1433, %v1429
  %v1626 = vpack.c.b16 %v1434, %v1430
  %v1627 = vpack.c.b16 %v1435, %v1431
  %v1628 = vpack.c.b16 %v1436, %v1432
  %v1629 = vpack.c.b16 %v1441, %v1437
  %v1630 = vpack.c.b16 %v1442, %v1438
  %v1631 = vpack.c.b16 %v1443, %v1439
  %v1632 = vpack.c.b16 %v1444, %v1440
  %v1633 = vpack.c.b16 %v1449, %v1445
  %v1634 = vpack.c.b16 %v1450, %v1446
  %v1635 = vpack.c.b16 %v1451, %v1447
  %v1636 = vpack.c.b16 %v1452, %v1448
  %v1637 = vpack.c.b16 %v1457, %v1453
  %v1638 = vpack.c.b16 %v1458, %v1454
  %v1639 = vpack.c.b16 %v1459, %v1455
  %v1640 = vpack.c.b16 %v1460, %v1456
  %v1641 = vpack.c.b16 %v1465, %v1461
  %v1642 = vpack.c.b16 %v1466, %v1462
  %v1643 = vpack.c.b16 %v1467, %v1463
  %v1644 = vpack.c.b16 %v1468, %v1464
  %v1645 = vpack.c.b16 %v1473, %v1469
  %v1646 = vpack.c.b16 %v1474, %v1470
  %v1647 = vpack.c.b16 %v1475, %v1471
  %v1648 = vpack.c.b16 %v1476, %v1472
  %v1649 = vpack.c.b16 %v1481, %v1477
  %v1650 = vpack.c.b16 %v1482, %v1478
  %v1651 = vpack.c.b16 %v1483, %v1479
  %v1652 = vpack.c.b16 %v1484, %v1480
  %v1653 = vpack.c.b16 %v1489, %v1485
  %v1654 = vpack.c.b16 %v1490, %v1486
  %v1655 = vpack.c.b16 %v1491, %v1487
  %v1656 = vpack.c.b16 %v1492, %v1488
  %v1657 = vpack.c.b16 %v1497, %v1493
  %v1658 = vpack.c.b16 %v1498, %v1494
  %v1659 = vpack.c.b16 %v1499, %v1495
  %v1660 = vpack.c.b16 %v1500, %v1496
  %v1661 = vpack.c.b16 %v1505, %v1501
  %v1662 = vpack.c.b16 %v1506, %v1502
  %v1663 = vpack.c.b16 %v1507, %v1503
  %v1664 = vpack.c.b16 %v1508, %v1504
  %v1665 = vpack.c.b16 %v1513, %v1509
  %v1666 = vpack.c.b16 %v1514, %v1510
  %v1667 = vpack.c.b16 %v1515, %v1511
  %v1668 = vpack.c.b16 %v1516, %v1512
  %v1669 = vpack.c.b16 %v1521, %v1517
  %v1670 = vpack.c.b16 %v1522, %v1518
  %v1671 = vpack.c.b16 %v1523, %v1519
  %v1672 = vpack.c.b16 %v1524, %v1520
  %v1673 = vpack.c.b16 %v1529, %v1525
  %v1674 = vpack.c.b16 %v1530, %v1526
  %v1675 = vpack.c.b16 %v1531, %v1527
  %v1676 = vpack.c.b16 %v1532, %v1528
  %v1677 = vpack.c.b16 %v1537, %v1533
  %v1678 = vpack.c.b16 %v1538, %v1534
  %v1679 = vpack.c.b16 %v1539, %v1535
  %v1680 = vpack.c.b16 %v1540, %v1536
  %v1681 = vpack.c.b16 %v1545, %v1541
  %v1682 = vpack.c.b16 %v1546, %v1542
  %v1683 = vpack.c.b16 %v1547, %v1543
  %v1684 = vpack.c.b16 %v1548, %v1544
  %v1685 = vpack.c.b16 %v1553, %v1549
  %v1686 = vpack.c.b16 %v1554, %v1550
  %v1687 = vpack.c.b16 %v1555, %v1551
  %v1688 = vpack.c.b16 %v1556, %v1552
  %v1689 = vpack.c.b16 %v1561, %v1557
  %v1690 = vpack.c.b16 %v1562, %v1558
  %v1691 = vpack.c.b16 %v1563, %v1559
  %v1692 = vpack.c.b16 %v1564, %v1560
  %1821 = vmatprep.subr.bf16.mxu0 %v1594
  %1822 = vmatpush1.bf16.msra.mxu0 %v1593
  %1823 = vmatprep.subr.bf16.mxu0 %v1590
  %1824 = vmatpush1.bf16.msra.mxu0 %v1589
  %1825 = vmatprep.subr.bf16.mxu0 %v1586
  %1826 = vmatpush1.bf16.msra.mxu0 %v1585
  %1827 = vmatprep.subr.bf16.mxu0 %v1582
  %1828 = vmatpush1.bf16.msra.mxu0 %v1581
  %1829 = vmatprep.subr.bf16.mxu0 %v1578
  %1830 = vmatpush1.bf16.msra.mxu0 %v1577
  %1831 = vmatprep.subr.bf16.mxu0 %v1574
  %1832 = vmatpush1.bf16.msra.mxu0 %v1573
  %1833 = vmatprep.subr.bf16.mxu0 %v1570
  %1834 = vmatpush1.bf16.msra.mxu0 %v1569
  %1835 = vmatprep.subr.bf16.mxu0 %v1566
  %1836 = vmatpush1.bf16.msra.mxu0 %v1565
  %1837 = vmatprep.subr.bf16.mxu0 %v1626
  %1838 = vmatpush2.bf16.msra.mxu0 %v1625
  %1839 = vmatprep.subr.bf16.mxu0 %v1622
  %1840 = vmatpush2.bf16.msra.mxu0 %v1621
  %1841 = vmatprep.subr.bf16.mxu0 %v1618
  %1842 = vmatpush2.bf16.msra.mxu0 %v1617
  %1843 = vmatprep.subr.bf16.mxu0 %v1614
  %1844 = vmatpush2.bf16.msra.mxu0 %v1613
  %1845 = vmatprep.subr.bf16.mxu0 %v1610
  %1846 = vmatpush2.bf16.msra.mxu0 %v1609
  %1847 = vmatprep.subr.bf16.mxu0 %v1606
  %1848 = vmatpush2.bf16.msra.mxu0 %v1605
  %1849 = vmatprep.subr.bf16.mxu0 %v1602
  %1850 = vmatpush2.bf16.msra.mxu0 %v1601
  %1851 = vmatprep.subr.bf16.mxu0 %v1598
  %1852 = vmatpush2.bf16.msra.mxu0 %v1597
  %1853 = vmatprep.mubr.bf16.mxu0 %v1050
  %1854 = vmatmul.mubr.bf16.gmra.mxu0 %v1049
  %v1855 = vpop.f32.mrf.mxu0
  %v1856 = vadd.f32 0.0, %v1855
  %v1857 = vpop.f32.mrf.mxu0
  %v1858 = vadd.f32 0.0, %v1857
  %v1859 = vpop.f32.mrf.mxu0
  %v1860 = vadd.f32 0.0, %v1859
  %v1861 = vpop.f32.mrf.mxu0
  %v1862 = vadd.f32 0.0, %v1861
  %1863 = vdwg.mxu0
  %1864 = vmatprep.subr.bf16.mxu0 %v1658
  %1865 = vmatpush1.bf16.msra.mxu0 %v1657
  %1866 = vmatprep.subr.bf16.mxu0 %v1654
  %1867 = vmatpush1.bf16.msra.mxu0 %v1653
  %1868 = vmatprep.subr.bf16.mxu0 %v1650
  %1869 = vmatpush1.bf16.msra.mxu0 %v1649
  %1870 = vmatprep.subr.bf16.mxu0 %v1646
  %1871 = vmatpush1.bf16.msra.mxu0 %v1645
  %1872 = vmatprep.subr.bf16.mxu0 %v1642
  %1873 = vmatpush1.bf16.msra.mxu0 %v1641
  %1874 = vmatprep.subr.bf16.mxu0 %v1638
  %1875 = vmatpush1.bf16.msra.mxu0 %v1637
  %1876 = vmatprep.subr.bf16.mxu0 %v1634
  %1877 = vmatpush1.bf16.msra.mxu0 %v1633
  %1878 = vmatprep.subr.bf16.mxu0 %v1630
  %1879 = vmatpush1.bf16.msra.mxu0 %v1629
  %1880 = vmatprep.subr.bf16.mxu0 %v1690
  %1881 = vmatpush2.bf16.msra.mxu0 %v1689
  %1882 = vmatprep.subr.bf16.mxu0 %v1686
  %1883 = vmatpush2.bf16.msra.mxu0 %v1685
  %1884 = vmatprep.subr.bf16.mxu0 %v1682
  %1885 = vmatpush2.bf16.msra.mxu0 %v1681
  %1886 = vmatprep.subr.bf16.mxu0 %v1678
  %1887 = vmatpush2.bf16.msra.mxu0 %v1677
  %1888 = vmatprep.subr.bf16.mxu0 %v1674
  %1889 = vmatpush2.bf16.msra.mxu0 %v1673
  %1890 = vmatprep.subr.bf16.mxu0 %v1670
  %1891 = vmatpush2.bf16.msra.mxu0 %v1669
  %1892 = vmatprep.subr.bf16.mxu0 %v1666
  %1893 = vmatpush2.bf16.msra.mxu0 %v1665
  %1894 = vmatprep.subr.bf16.mxu0 %v1662
  %1895 = vmatpush2.bf16.msra.mxu0 %v1661
  %1896 = vmatprep.mubr.bf16.mxu0 %v1052
  %1897 = vmatmul.mubr.bf16.gmra.mxu0 %v1051
  %v1898 = vpop.f32.mrf.mxu0
  %v1899 = vadd.f32 %v1856, %v1898
  %v1900 = vpop.f32.mrf.mxu0
  %v1901 = vadd.f32 %v1858, %v1900
  %v1902 = vpop.f32.mrf.mxu0
  %v1903 = vadd.f32 %v1860, %v1902
  %v1904 = vpop.f32.mrf.mxu0
  %v1905 = vadd.f32 %v1862, %v1904
  %1906 = vdwg.mxu0
  %1907 = vmatprep.subr.bf16.mxu0 %v1596
  %1908 = vmatpush1.bf16.msra.mxu0 %v1595
  %1909 = vmatprep.subr.bf16.mxu0 %v1592
  %1910 = vmatpush1.bf16.msra.mxu0 %v1591
  %1911 = vmatprep.subr.bf16.mxu0 %v1588
  %1912 = vmatpush1.bf16.msra.mxu0 %v1587
  %1913 = vmatprep.subr.bf16.mxu0 %v1584
  %1914 = vmatpush1.bf16.msra.mxu0 %v1583
  %1915 = vmatprep.subr.bf16.mxu0 %v1580
  %1916 = vmatpush1.bf16.msra.mxu0 %v1579
  %1917 = vmatprep.subr.bf16.mxu0 %v1576
  %1918 = vmatpush1.bf16.msra.mxu0 %v1575
  %1919 = vmatprep.subr.bf16.mxu0 %v1572
  %1920 = vmatpush1.bf16.msra.mxu0 %v1571
  %1921 = vmatprep.subr.bf16.mxu0 %v1568
  %1922 = vmatpush1.bf16.msra.mxu0 %v1567
  %1923 = vmatprep.subr.bf16.mxu0 %v1628
  %1924 = vmatpush2.bf16.msra.mxu0 %v1627
  %1925 = vmatprep.subr.bf16.mxu0 %v1624
  %1926 = vmatpush2.bf16.msra.mxu0 %v1623
  %1927 = vmatprep.subr.bf16.mxu0 %v1620
  %1928 = vmatpush2.bf16.msra.mxu0 %v1619
  %1929 = vmatprep.subr.bf16.mxu0 %v1616
  %1930 = vmatpush2.bf16.msra.mxu0 %v1615
  %1931 = vmatprep.subr.bf16.mxu0 %v1612
  %1932 = vmatpush2.bf16.msra.mxu0 %v1611
  %1933 = vmatprep.subr.bf16.mxu0 %v1608
  %1934 = vmatpush2.bf16.msra.mxu0 %v1607
  %1935 = vmatprep.subr.bf16.mxu0 %v1604
  %1936 = vmatpush2.bf16.msra.mxu0 %v1603
  %1937 = vmatprep.subr.bf16.mxu0 %v1600
  %1938 = vmatpush2.bf16.msra.mxu0 %v1599
  %1939 = vmatprep.mubr.bf16.mxu0 %v1050
  %1940 = vmatmul.mubr.bf16.gmra.mxu0 %v1049
  %v1941 = vpop.f32.mrf.mxu0
  %v1942 = vadd.f32 0.0, %v1941
  %v1943 = vpop.f32.mrf.mxu0
  %v1944 = vadd.f32 0.0, %v1943
  %v1945 = vpop.f32.mrf.mxu0
  %v1946 = vadd.f32 0.0, %v1945
  %v1947 = vpop.f32.mrf.mxu0
  %v1948 = vadd.f32 0.0, %v1947
  %1949 = vdwg.mxu0
  %1950 = vmatprep.subr.bf16.mxu0 %v1660
  %1951 = vmatpush1.bf16.msra.mxu0 %v1659
  %1952 = vmatprep.subr.bf16.mxu0 %v1656
  %1953 = vmatpush1.bf16.msra.mxu0 %v1655
  %1954 = vmatprep.subr.bf16.mxu0 %v1652
  %1955 = vmatpush1.bf16.msra.mxu0 %v1651
  %1956 = vmatprep.subr.bf16.mxu0 %v1648
  %1957 = vmatpush1.bf16.msra.mxu0 %v1647
  %1958 = vmatprep.subr.bf16.mxu0 %v1644
  %1959 = vmatpush1.bf16.msra.mxu0 %v1643
  %1960 = vmatprep.subr.bf16.mxu0 %v1640
  %1961 = vmatpush1.bf16.msra.mxu0 %v1639
  %1962 = vmatprep.subr.bf16.mxu0 %v1636
  %1963 = vmatpush1.bf16.msra.mxu0 %v1635
  %1964 = vmatprep.subr.bf16.mxu0 %v1632
  %1965 = vmatpush1.bf16.msra.mxu0 %v1631
  %1966 = vmatprep.subr.bf16.mxu0 %v1692
  %1967 = vmatpush2.bf16.msra.mxu0 %v1691
  %1968 = vmatprep.subr.bf16.mxu0 %v1688
  %1969 = vmatpush2.bf16.msra.mxu0 %v1687
  %1970 = vmatprep.subr.bf16.mxu0 %v1684
  %1971 = vmatpush2.bf16.msra.mxu0 %v1683
  %1972 = vmatprep.subr.bf16.mxu0 %v1680
  %1973 = vmatpush2.bf16.msra.mxu0 %v1679
  %1974 = vmatprep.subr.bf16.mxu0 %v1676
  %1975 = vmatpush2.bf16.msra.mxu0 %v1675
  %1976 = vmatprep.subr.bf16.mxu0 %v1672
  %1977 = vmatpush2.bf16.msra.mxu0 %v1671
  %1978 = vmatprep.subr.bf16.mxu0 %v1668
  %1979 = vmatpush2.bf16.msra.mxu0 %v1667
  %1980 = vmatprep.subr.bf16.mxu0 %v1664
  %1981 = vmatpush2.bf16.msra.mxu0 %v1663
  %1982 = vmatprep.mubr.bf16.mxu0 %v1052
  %1983 = vmatmul.mubr.bf16.gmra.mxu0 %v1051
  %v1984 = vpop.f32.mrf.mxu0
  %v1985 = vadd.f32 %v1942, %v1984
  %v1986 = vpop.f32.mrf.mxu0
  %v1987 = vadd.f32 %v1944, %v1986
  %v1988 = vpop.f32.mrf.mxu0
  %v1989 = vadd.f32 %v1946, %v1988
  %v1990 = vpop.f32.mrf.mxu0
  %v1991 = vadd.f32 %v1948, %v1990
  %1992 = vdwg.mxu0
  %v1993 = vmul.f32 %v1899, %v1899
  %v1994 = vmul.f32 %v1901, %v1901
  %v1995 = vmul.f32 %v1903, %v1903
  %v1996 = vmul.f32 %v1905, %v1905
  %v1997 = vmul.f32 %v1985, %v1985
  %v1998 = vmul.f32 %v1987, %v1987
  %v1999 = vmul.f32 %v1989, %v1989
  %v2000 = vmul.f32 %v1991, %v1991
  %v2001 = vadd.f32 %v1993, %v1997
  %v2002 = vadd.f32 %v1994, %v1998
  %v2003 = vadd.f32 %v1995, %v1999
  %v2004 = vadd.f32 %v1996, %v2000
  %2005 = vst [vmem:[%s5] sm:$0xff] %v2001
  %2006 = vst [vmem:[%s5 + $0x8] sm:$0xff] %v2002
  %2007 = vst [vmem:[%s5 + $0x10] sm:$0xff] %v2003
  %2008 = vst [vmem:[%s5 + $0x18] sm:$0xff] %v2004
  %v2010 = vlaneseq
  %v2011 = vshrl.u32 %v2010, 7
  %v2012 = vsub.s32 0, %v2011
  %v2013 = vrot.slane %v37, %v2012
  %v2014 = vlaneseq
  %v2015 = vshrl.u32 %v2014, 7
  %v2016 = vsub.s32 1, %v2015
  %v2017 = vrot.slane %v37, %v2016
  %v2018 = vlaneseq
  %v2019 = vshrl.u32 %v2018, 7
  %v2020 = vsub.s32 2, %v2019
  %v2021 = vrot.slane %v37, %v2020
  %v2022 = vlaneseq
  %v2023 = vshrl.u32 %v2022, 7
  %v2024 = vsub.s32 3, %v2023
  %v2025 = vrot.slane %v37, %v2024
  %v2030 = vmul.f32 %v1041, %v2013
  %v2031 = vmul.f32 %v1042, %v2017
  %v2032 = vmul.f32 %v1043, %v2021
  %v2033 = vmul.f32 %v1044, %v2025
  %v2034 = vmul.f32 %v1045, %v2013
  %v2035 = vmul.f32 %v1046, %v2017
  %v2036 = vmul.f32 %v1047, %v2021
  %v2037 = vmul.f32 %v1048, %v2025
  %v2038 = vadd.f32 %v2030, %v2031
  %v2039 = vadd.f32 %v2038, %v2032
  %v2040 = vadd.f32 %v2039, %v2033
  %2041 = vadd.xlane.f32.xlu0 %v2040
  %v2042 = vpop.xlane.xlu0 %2041
  %v2043 = vadd.f32 %v2034, %v2035
  %v2044 = vadd.f32 %v2043, %v2036
  %v2045 = vadd.f32 %v2044, %v2037
  %2046 = vadd.xlane.f32.xlu0 %v2045
  %v2047 = vpop.xlane.xlu0 %2046
  %v2048 = vmul.f32 %v2042, %v2042
  %v2049 = vmul.f32 %v2047, %v2047
  %vm2050 = vcmask 7168
  %2051 = vst.msk [vmem:[%s6] sm:$0xff] %vm2050, %v2048
  %2052 = vst.msk [vmem:[%s6 + $0x8] sm:$0xff] %vm2050, %v2049
  // Predicated region
  $region22: #{a_call__.2} parent=0 // pred_check
    _
  $region23: #{a_call__.2} parent=0 // pred_check_branch
    %2054 = sbr.rel (0) target = $region25
  $region24: #{a_call__.2} parent=0 // pred_region
    _
  $region25: #{a_call__.2} parent=0 // pred_fallthru
    _
  // Predicated region
  $region26: #{a_call__.2} parent=0 // pred_check
    _
  $region27: #{a_call__.2} parent=0 // pred_check_branch
    %2056 = sbr.rel (0) target = $region29
  $region28: #{a_call__.2} parent=0 // pred_region
    _
  $region29: #{a_call__.2} parent=0 // pred_fallthru
    _
  // Predicated region
  $region30: #{a_call__.2} parent=0 // pred_check
    _
  $region31: #{a_call__.2} parent=0 // pred_check_branch
    %2058 = sbr.rel (0) target = $region33
  $region32: #{a_call__.2} parent=0 // pred_region
    _
  $region33: #{a_call__.2} parent=0 // pred_fallthru
    _
  // Predicated region
  $region34: #{a_call__.2} parent=0 // pred_check
    _
  $region35: #{a_call__.2} parent=0 // pred_check_branch
    %2060 = sbr.rel (0) target = $region37
  $region36: #{a_call__.2} parent=0 // pred_region
    _
  $region37: #{a_call__.2} parent=0 // pred_fallthru
    _

// kernel: a_call__.3
$region0: #{a_call__.3}
  #allocation0 [shape = 'u32[]', space=smem, size = 0x4, offset = 0x4, fixed_abs, tag = 'smem constant byte address 0x4 - core index']
  #allocation1 [shape = 'u32[144,128]{1,0:T(1,128)}', space=vmem, size = 0x12000, scoped, tag = 'internal scratch']
  %s0 = inlined_call_operand.vmem [shape: f32[16,256], index: 0, kind: input, shape index: {}]
  %s1 = inlined_call_operand.vmem [shape: f32[16,1], index: 1, kind: input, shape index: {}]
  %s2 = inlined_call_operand.vmem [shape: f32[16,1], index: 2, kind: input, shape index: {}]
  %s3 = inlined_call_operand.vmem [shape: f32[1,256], index: 3, kind: input, shape index: {}]
  %s4 = inlined_call_operand.vmem [shape: f32[1,256], index: 4, kind: input, shape index: {}]
  %s5 = inlined_call_operand.vmem [shape: f32[1,256], index: 5, kind: input, shape index: {}]
  %s6 = inlined_call_operand.vmem [shape: bf16[256,256], index: 6, kind: input, shape index: {}]
  %s7 = inlined_call_operand.vmem [shape: bf16[256,256], index: 7, kind: input, shape index: {}]
  %s8 = inlined_call_operand.vmem [shape: f32[16,256], index: 8, kind: output, shape index: {0}]
  %s9 = inlined_call_operand.vmem [shape: f32[16,1], index: 9, kind: output, shape index: {1}]
  %10 = xla_tuple %s8, %s9
  %s11 = sld [smem:[#allocation0]]
  $region50: #{a_call__.3} parent=0
    _
  %s13 = ssub.s32 1, %s11
  %s14 = scalar_select 0, %s13, %s11
  // Predicated region
  $region2: #{a_call__.3} parent=0 // pred_check
    _
  $region3: #{a_call__.3} parent=0 // pred_check_branch
    %16 = sbr.rel (0) target = $region5
  $region4: #{a_call__.3} parent=0 // pred_region
    _
  $region5: #{a_call__.3} parent=0 // pred_fallthru
    _
  // Predicated region
  $region6: #{a_call__.3} parent=0 // pred_check
    _
  $region7: #{a_call__.3} parent=0 // pred_check_branch
    %18 = sbr.rel (0) target = $region9
  $region8: #{a_call__.3} parent=0 // pred_region
    _
  $region9: #{a_call__.3} parent=0 // pred_fallthru
    _
  // Predicated region
  $region10: #{a_call__.3} parent=0 // pred_check
    _
  $region11: #{a_call__.3} parent=0 // pred_check_branch
    %20 = sbr.rel (0) target = $region13
  $region12: #{a_call__.3} parent=0 // pred_region
    _
  $region13: #{a_call__.3} parent=0 // pred_fallthru
    _
  // Predicated region
  $region14: #{a_call__.3} parent=0 // pred_check
    _
  $region15: #{a_call__.3} parent=0 // pred_check_branch
    %22 = sbr.rel (0) target = $region17
  $region16: #{a_call__.3} parent=0 // pred_region
    _
  $region17: #{a_call__.3} parent=0 // pred_fallthru
    _
  // Predicated region
  $region18: #{a_call__.3} parent=0 // pred_check
    _
  $region19: #{a_call__.3} parent=0 // pred_check_branch
    %24 = sbr.rel (0) target = $region21
  $region20: #{a_call__.3} parent=0 // pred_region
    _
  $region21: #{a_call__.3} parent=0 // pred_fallthru
    _
  // Predicated region
  $region22: #{a_call__.3} parent=0 // pred_check
    _
  $region23: #{a_call__.3} parent=0 // pred_check_branch
    %26 = sbr.rel (0) target = $region25
  $region24: #{a_call__.3} parent=0 // pred_region
    _
  $region25: #{a_call__.3} parent=0 // pred_fallthru
    _
  // Predicated region
  $region26: #{a_call__.3} parent=0 // pred_check
    _
  $region27: #{a_call__.3} parent=0 // pred_check_branch
    %28 = sbr.rel (0) target = $region29
  $region28: #{a_call__.3} parent=0 // pred_region
    _
  $region29: #{a_call__.3} parent=0 // pred_fallthru
    _
  // Predicated region
  $region30: #{a_call__.3} parent=0 // pred_check
    _
  $region31: #{a_call__.3} parent=0 // pred_check_branch
    %30 = sbr.rel (0) target = $region33
  $region32: #{a_call__.3} parent=0 // pred_region
    _
  $region33: #{a_call__.3} parent=0 // pred_fallthru
    _
  %v31 = vld [vmem:[%s0] sm:$0xff]
  %v32 = vld [vmem:[%s0 + $0x8] sm:$0xff]
  %v33 = vld [vmem:[%s0 + $0x10] sm:$0xff]
  %v34 = vld [vmem:[%s0 + $0x18] sm:$0xff]
  %v35 = vmax.f32 %v31, 0.0
  %v36 = vmax.f32 %v32, 0.0
  %v37 = vmax.f32 %v33, 0.0
  %v38 = vmax.f32 %v34, 0.0
  %v39 = vadd.f32 %v35, 1.1920929e-07
  %v40 = vadd.f32 %v36, 1.1920929e-07
  %v41 = vadd.f32 %v37, 1.1920929e-07
  %v42 = vadd.f32 %v38, 1.1920929e-07
  %v43 = vlog2.pop %v39
  %v44 = vmul.f32 %v43, 0.6931472
  %v45 = vlog2.pop %v40
  %v46 = vmul.f32 %v45, 0.6931472
  %v47 = vlog2.pop %v41
  %v48 = vmul.f32 %v47, 0.6931472
  %v49 = vlog2.pop %v42
  %v50 = vmul.f32 %v49, 0.6931472
  %v51 = vld [vmem:[%s1] sm:$0xff]
  %v52 = vld [vmem:[%s1 + $0x8] sm:$0xff]
  %v53 = vmax.f32 %v51, 0.0
  %v54 = vmax.f32 %v52, 0.0
  %v55 = vadd.f32 %v53, 1.1920929e-07
  %v56 = vadd.f32 %v54, 1.1920929e-07
  %v57 = vlog2.pop %v55
  %v58 = vmul.f32 %v57, 0.6931472
  %v59 = vlog2.pop %v56
  %v60 = vmul.f32 %v59, 0.6931472
  %v61 = vld [vmem:[%s4] sm:$0x3]
  %v62 = vld [vmem:[%s5] sm:$0x3]
  %v63 = vpack.c.bf16 %v48, %v44
  %v64 = vpack.c.bf16 %v50, %v46
  %v65 = vld [vmem:[%s6] sm:$0xff]
  %v66 = vld [vmem:[%s6 + $0x8] sm:$0xff]
  %v67 = vld [vmem:[%s6 + $0x10] sm:$0xff]
  %v68 = vld [vmem:[%s6 + $0x18] sm:$0xff]
  %v69 = vld [vmem:[%s6 + $0x20] sm:$0xff]
  %v70 = vld [vmem:[%s6 + $0x28] sm:$0xff]
  %v71 = vld [vmem:[%s6 + $0x30] sm:$0xff]
  %v72 = vld [vmem:[%s6 + $0x38] sm:$0xff]
  %v73 = vld [vmem:[%s6 + $0x40] sm:$0xff]
  %v74 = vld [vmem:[%s6 + $0x48] sm:$0xff]
  %v75 = vld [vmem:[%s6 + $0x50] sm:$0xff]
  %v76 = vld [vmem:[%s6 + $0x58] sm:$0xff]
  %v77 = vld [vmem:[%s6 + $0x60] sm:$0xff]
  %v78 = vld [vmem:[%s6 + $0x68] sm:$0xff]
  %v79 = vld [vmem:[%s6 + $0x70] sm:$0xff]
  %v80 = vld [vmem:[%s6 + $0x78] sm:$0xff]
  %v81 = vld [vmem:[%s6 + $0x80] sm:$0xff]
  %v82 = vld [vmem:[%s6 + $0x88] sm:$0xff]
  %v83 = vld [vmem:[%s6 + $0x90] sm:$0xff]
  %v84 = vld [vmem:[%s6 + $0x98] sm:$0xff]
  %v85 = vld [vmem:[%s6 + $0xa0] sm:$0xff]
  %v86 = vld [vmem:[%s6 + $0xa8] sm:$0xff]
  %v87 = vld [vmem:[%s6 + $0xb0] sm:$0xff]
  %v88 = vld [vmem:[%s6 + $0xb8] sm:$0xff]
  %v89 = vld [vmem:[%s6 + $0xc0] sm:$0xff]
  %v90 = vld [vmem:[%s6 + $0xc8] sm:$0xff]
  %v91 = vld [vmem:[%s6 + $0xd0] sm:$0xff]
  %v92 = vld [vmem:[%s6 + $0xd8] sm:$0xff]
  %v93 = vld [vmem:[%s6 + $0xe0] sm:$0xff]
  %v94 = vld [vmem:[%s6 + $0xe8] sm:$0xff]
  %v95 = vld [vmem:[%s6 + $0xf0] sm:$0xff]
  %v96 = vld [vmem:[%s6 + $0xf8] sm:$0xff]
  %v97 = vmul.f32 %v58, 0.001953125
  %v98 = vmul.f32 %v60, 0.001953125
  %100 = vset.pattern.permute.xlu0 0
  %101 = vperm.xlu0 %100, %v97
  %v102 = vpop.permute.xlu0 %101
  %105 = vset.pattern.permute.xlu0 0
  %106 = vperm.xlu0 %105, %v98
  %v107 = vpop.permute.xlu0 %106
  %v110 = vlaneseq
  %v111 = vshrl.u32 %v110, 7
  %v112 = vsub.s32 0, %v111
  %v113 = vrot.slane %v61, %v112
  %v114 = vlaneseq
  %v115 = vshrl.u32 %v114, 7
  %v116 = vsub.s32 1, %v115
  %v117 = vrot.slane %v61, %v116
  %v120 = vmul.f32 %v102, %v113
  %v121 = vmul.f32 %v102, %v117
  %v122 = vmul.f32 %v107, %v113
  %v123 = vmul.f32 %v107, %v117
  %v156 = vunpack.c.l.b16 %v65
  %v157 = vunpack.c.h.b16 %v65
  %v158 = vunpack.c.l.b16 %v66
  %v159 = vunpack.c.h.b16 %v66
  %v160 = vunpack.c.l.b16 %v67
  %v161 = vunpack.c.h.b16 %v67
  %v162 = vunpack.c.l.b16 %v68
  %v163 = vunpack.c.h.b16 %v68
  %v164 = vunpack.c.l.b16 %v69
  %v165 = vunpack.c.h.b16 %v69
  %v166 = vunpack.c.l.b16 %v70
  %v167 = vunpack.c.h.b16 %v70
  %v168 = vunpack.c.l.b16 %v71
  %v169 = vunpack.c.h.b16 %v71
  %v170 = vunpack.c.l.b16 %v72
  %v171 = vunpack.c.h.b16 %v72
  %v172 = vunpack.c.l.b16 %v73
  %v173 = vunpack.c.h.b16 %v73
  %v174 = vunpack.c.l.b16 %v74
  %v175 = vunpack.c.h.b16 %v74
  %v176 = vunpack.c.l.b16 %v75
  %v177 = vunpack.c.h.b16 %v75
  %v178 = vunpack.c.l.b16 %v76
  %v179 = vunpack.c.h.b16 %v76
  %v180 = vunpack.c.l.b16 %v77
  %v181 = vunpack.c.h.b16 %v77
  %v182 = vunpack.c.l.b16 %v78
  %v183 = vunpack.c.h.b16 %v78
  %v184 = vunpack.c.l.b16 %v79
  %v185 = vunpack.c.h.b16 %v79
  %v186 = vunpack.c.l.b16 %v80
  %v187 = vunpack.c.h.b16 %v80
  %v188 = vunpack.c.l.b16 %v81
  %v189 = vunpack.c.h.b16 %v81
  %v190 = vunpack.c.l.b16 %v82
  %v191 = vunpack.c.h.b16 %v82
  %v192 = vunpack.c.l.b16 %v83
  %v193 = vunpack.c.h.b16 %v83
  %v194 = vunpack.c.l.b16 %v84
  %v195 = vunpack.c.h.b16 %v84
  %v196 = vunpack.c.l.b16 %v85
  %v197 = vunpack.c.h.b16 %v85
  %v198 = vunpack.c.l.b16 %v86
  %v199 = vunpack.c.h.b16 %v86
  %v200 = vunpack.c.l.b16 %v87
  %v201 = vunpack.c.h.b16 %v87
  %v202 = vunpack.c.l.b16 %v88
  %v203 = vunpack.c.h.b16 %v88
  %v204 = vunpack.c.l.b16 %v89
  %v205 = vunpack.c.h.b16 %v89
  %v206 = vunpack.c.l.b16 %v90
  %v207 = vunpack.c.h.b16 %v90
  %v208 = vunpack.c.l.b16 %v91
  %v209 = vunpack.c.h.b16 %v91
  %v210 = vunpack.c.l.b16 %v92
  %v211 = vunpack.c.h.b16 %v92
  %v212 = vunpack.c.l.b16 %v93
  %v213 = vunpack.c.h.b16 %v93
  %v214 = vunpack.c.l.b16 %v94
  %v215 = vunpack.c.h.b16 %v94
  %v216 = vunpack.c.l.b16 %v95
  %v217 = vunpack.c.h.b16 %v95
  %v218 = vunpack.c.l.b16 %v96
  %v219 = vunpack.c.h.b16 %v96
  %v220 = vpack.c.b16 %v158, %v156
  %v221 = vpack.c.b16 %v159, %v157
  %v222 = vpack.c.b16 %v162, %v160
  %v223 = vpack.c.b16 %v163, %v161
  %v224 = vpack.c.b16 %v166, %v164
  %v225 = vpack.c.b16 %v167, %v165
  %v226 = vpack.c.b16 %v170, %v168
  %v227 = vpack.c.b16 %v171, %v169
  %v228 = vpack.c.b16 %v174, %v172
  %v229 = vpack.c.b16 %v175, %v173
  %v230 = vpack.c.b16 %v178, %v176
  %v231 = vpack.c.b16 %v179, %v177
  %v232 = vpack.c.b16 %v182, %v180
  %v233 = vpack.c.b16 %v183, %v181
  %v234 = vpack.c.b16 %v186, %v184
  %v235 = vpack.c.b16 %v187, %v185
  %v236 = vpack.c.b16 %v190, %v188
  %v237 = vpack.c.b16 %v191, %v189
  %v238 = vpack.c.b16 %v194, %v192
  %v239 = vpack.c.b16 %v195, %v193
  %v240 = vpack.c.b16 %v198, %v196
  %v241 = vpack.c.b16 %v199, %v197
  %v242 = vpack.c.b16 %v202, %v200
  %v243 = vpack.c.b16 %v203, %v201
  %v244 = vpack.c.b16 %v206, %v204
  %v245 = vpack.c.b16 %v207, %v205
  %v246 = vpack.c.b16 %v210, %v208
  %v247 = vpack.c.b16 %v211, %v209
  %v248 = vpack.c.b16 %v214, %v212
  %v249 = vpack.c.b16 %v215, %v213
  %v250 = vpack.c.b16 %v218, %v216
  %v251 = vpack.c.b16 %v219, %v217
  %284 = vmatprep.subr.bf16.mxu0 %v235
  %285 = vmatpush1.bf16.msra.mxu0 %v234
  %286 = vmatprep.subr.bf16.mxu0 %v233
  %287 = vmatpush1.bf16.msra.mxu0 %v232
  %288 = vmatprep.subr.bf16.mxu0 %v231
  %289 = vmatpush1.bf16.msra.mxu0 %v230
  %290 = vmatprep.subr.bf16.mxu0 %v229
  %291 = vmatpush1.bf16.msra.mxu0 %v228
  %292 = vmatprep.subr.bf16.mxu0 %v227
  %293 = vmatpush1.bf16.msra.mxu0 %v226
  %294 = vmatprep.subr.bf16.mxu0 %v225
  %295 = vmatpush1.bf16.msra.mxu0 %v224
  %296 = vmatprep.subr.bf16.mxu0 %v223
  %297 = vmatpush1.bf16.msra.mxu0 %v222
  %298 = vmatprep.subr.bf16.mxu0 %v221
  %299 = vmatpush1.bf16.msra.mxu0 %v220
  %300 = vmatprep.subr.bf16.mxu0 %v251
  %301 = vmatpush2.bf16.msra.mxu0 %v250
  %302 = vmatprep.subr.bf16.mxu0 %v249
  %303 = vmatpush2.bf16.msra.mxu0 %v248
  %304 = vmatprep.subr.bf16.mxu0 %v247
  %305 = vmatpush2.bf16.msra.mxu0 %v246
  %306 = vmatprep.subr.bf16.mxu0 %v245
  %307 = vmatpush2.bf16.msra.mxu0 %v244
  %308 = vmatprep.subr.bf16.mxu0 %v243
  %309 = vmatpush2.bf16.msra.mxu0 %v242
  %310 = vmatprep.subr.bf16.mxu0 %v241
  %311 = vmatpush2.bf16.msra.mxu0 %v240
  %312 = vmatprep.subr.bf16.mxu0 %v239
  %313 = vmatpush2.bf16.msra.mxu0 %v238
  %314 = vmatprep.subr.bf16.mxu0 %v237
  %315 = vmatpush2.bf16.msra.mxu0 %v236
  %316 = vmatprep.mubr.bf16.mxu0 %v64
  %317 = vmatmul.mubr.bf16.gmra.mxu0 %v63
  %v318 = vpop.f32.mrf.mxu0
  %v319 = vadd.f32 %v120, %v318
  %v320 = vpop.f32.mrf.mxu0
  %v321 = vadd.f32 %v121, %v320
  %v322 = vpop.f32.mrf.mxu0
  %v323 = vadd.f32 %v122, %v322
  %v324 = vpop.f32.mrf.mxu0
  %v325 = vadd.f32 %v123, %v324
  %326 = vdwg.mxu0
  %v328 = vlaneseq
  %v329 = vshrl.u32 %v328, 7
  %v330 = vsub.s32 0, %v329
  %v331 = vrot.slane %v62, %v330
  %v332 = vlaneseq
  %v333 = vshrl.u32 %v332, 7
  %v334 = vsub.s32 1, %v333
  %v335 = vrot.slane %v62, %v334
  %v338 = vmul.f32 %v44, %v331
  %v339 = vmul.f32 %v46, %v335
  %v340 = vmul.f32 %v48, %v331
  %v341 = vmul.f32 %v50, %v335
  %v342 = vadd.f32 %v338, %v339
  %343 = vadd.xlane.f32.xlu0 %v342
  %v344 = vpop.xlane.xlu0 %343
  %v345 = vadd.f32 %v340, %v341
  %346 = vadd.xlane.f32.xlu0 %v345
  %v347 = vpop.xlane.xlu0 %346
  %v348 = vadd.f32 %v344, %v58
  %v349 = vadd.f32 %v347, %v60
  %v350 = vmul.f32 %v348, 0.001953125
  %v351 = vmul.f32 %v349, 0.001953125
  %v352 = vld [vmem:[%s2] sm:$0xff]
  %v353 = vld [vmem:[%s2 + $0x8] sm:$0xff]
  %v354 = vld [vmem:[%s3] sm:$0x3]
  %356 = vset.pattern.permute.xlu0 0
  %357 = vperm.xlu0 %356, %v352
  %v358 = vpop.permute.xlu0 %357
  %361 = vset.pattern.permute.xlu0 0
  %362 = vperm.xlu0 %361, %v353
  %v363 = vpop.permute.xlu0 %362
  %v366 = vlaneseq
  %v367 = vshrl.u32 %v366, 7
  %v368 = vsub.s32 0, %v367
  %v369 = vrot.slane %v354, %v368
  %v370 = vlaneseq
  %v371 = vshrl.u32 %v370, 7
  %v372 = vsub.s32 1, %v371
  %v373 = vrot.slane %v354, %v372
  %v376 = vmul.f32 %v358, %v369
  %v377 = vmul.f32 %v358, %v373
  %v378 = vmul.f32 %v363, %v369
  %v379 = vmul.f32 %v363, %v373
  %v380 = vmul.f32 %v376, 3.1415927
  %v381 = vmul.f32 %v377, 3.1415927
  %v382 = vmul.f32 %v378, 3.1415927
  %v383 = vmul.f32 %v379, 3.1415927
  %v384 = vand.u32 2147483647, %v380
  %vm385 = vcmp.le.f32.partialorder %v384, 0.7853982
  %vm386 = vcmp.lt.s32.totalorder %v380, 0
  %v387 = vand.u32 %v380, 2139095040
  %v388 = vshrl.u32 %v387, 23
  %v389 = vsub.s32 %v388, 127
  %v390 = vand.u32 2147483647, %v380
  %v391 = vand.u32 %v390, 8388607
  %v392 = vor.u32 %v391, 8388608
  %v393 = vsub.s32 0, %v392
  %v394 = vadd.s32 %v389, 1
  %vm395 = vcmp.gt.s32.totalorder %v394, 0
  %v396 = vsel %vm395, %v394, 0
  %v397 = vshrl.u32 %v396, 5
  %v398 = vand.u32 %v396, 31
  %v399 = vsub.s32 32, %v398
  %v400 = vshrl.u32 683565275, %v399
  %v401 = vshll.u32 683565275, %v398
  %v402 = vshrl.u32 2475754826, %v399
  %v403 = vor.u32 %v401, %v402
  %v404 = vshll.u32 2475754826, %v398
  %v405 = vshrl.u32 2131351028, %v399
  %v406 = vor.u32 %v404, %v405
  %v407 = vshll.u32 2131351028, %v398
  %v408 = vshrl.u32 2102212464, %v399
  %v409 = vor.u32 %v407, %v408
  %v410 = vshll.u32 2102212464, %v398
  %v411 = vshrl.u32 920167782, %v399
  %v412 = vor.u32 %v410, %v411
  %v413 = vshll.u32 920167782, %v398
  %v414 = vshrl.u32 1326507024, %v399
  %v415 = vor.u32 %v413, %v414
  %vm416 = vcmp.lt.s32.totalorder %v397, 1
  %vm417 = vcmp.lt.s32.totalorder %v397, 2
  %vm418 = vcmp.lt.s32.totalorder %v397, 3
  %vm419 = vcmp.lt.s32.totalorder %v397, 4
  %v420 = vsel %vm416, %v400, %v403
  %v421 = vsel %vm419, %v409, 2102212464
  %v422 = vsel %vm418, %v406, %v421
  %v423 = vsel %vm417, %v420, %v422
  %v424 = vsel %vm416, %v403, %v406
  %v425 = vsel %vm419, %v412, 920167782
  %v426 = vsel %vm418, %v409, %v425
  %v427 = vsel %vm417, %v424, %v426
  %v428 = vsel %vm416, %v406, %v409
  %v429 = vsel %vm419, %v415, 1326507024
  %v430 = vsel %vm418, %v412, %v429
  %v431 = vsel %vm417, %v428, %v430
  %v432 = vshll.u32 %v392, 8
  %v433 = vmul.u32.u64.compose %v432, %v431
  %v434 = vextract.low.u32 %v433
  %v435 = vextract.high.u32 %v433
  %v436 = vmul.u32.u64.compose %v432, %v427
  %v437 = vextract.low.u32 %v436
  %v438 = vextract.high.u32 %v436
  %v439 = vmul.u32 %v432, %v423
  %v440 = vadd.s32 %v435, %v437
  %vm441 = vc.u32 %v435, %v437
  %v442 = vadd.s32 %v438, 1
  %v443 = vsel %vm441, %v442, %v438
  %v444 = vadd.s32 %v439, %v443
  %v445 = vadd.s32 %v444, 536870912
  %v446 = vshrl.u32 %v445, 30
  %v447 = vshll.u32 %v446, 30
  %v448 = vsub.s32 %v444, %v447
  %vm449 = vcmp.lt.s32.totalorder %v448, 0
  %v450 = vsub.s32 0, %v448
  %v451 = vsel %vm449, %v450, %v448
  %v452 = vclz %v451
  %v453 = vsub.s32 %v452, 2
  %vm454 = vcmp.gt.s32.totalorder 0, %v453
  %v455 = vsel %vm454, 0, %v453
  %v456 = vsub.s32 32, %v455
  %v457 = vshll.u32 %v448, %v455
  %v458 = vshrl.u32 %v440, %v456
  %v459 = vor.u32 %v457, %v458
  %v460 = vsub.s32 4294967266, %v455
  %v461 = vadd.s32 %v460, 127
  %v462 = vshll.u32 %v461, 23
  %v463 = vor.u32 4788187, %v462
  %v464 = vand.u32 2147483647, %v463
  %v466 = vcvt.s32.f32 %v459
  %v467 = vmul.f32 %v466, %v464
  %v468 = vxor.u32 %v467, 2147483648
  %v469 = vsel %vm386, %v468, %v467
  %v470 = vsub.s32 4, %v446
  %v471 = vsel %vm386, %v470, %v446
  %v472 = vsel %vm385, %v380, %v469
  %v473 = vsel %vm385, 0, %v471
  %v474 = vcosq.f32.pop %v472
  %v475 = vsinq.f32.pop %v472
  %vm476 = vweird.f32 %v380
  %v477 = vadd.s32 %v473, 3
  %v478 = vand.u32 %v477, 3
  %vm479 = vcmp.lt.s32.totalorder %v478, 2
  %vm480 = vcmp.eq.s32.totalorder %v478, 0
  %v481 = vxor.u32 %v475, 2147483648
  %v482 = vsel %vm480, %v474, %v481
  %vm483 = vcmp.eq.s32.totalorder %v478, 2
  %v484 = vxor.u32 %v474, 2147483648
  %v485 = vsel %vm483, %v484, %v475
  %v486 = vsel %vm479, %v482, %v485
  %v487 = vsel %vm476, nan, %v486
  %v488 = vand.u32 2147483647, %v381
  %vm489 = vcmp.le.f32.partialorder %v488, 0.7853982
  %vm490 = vcmp.lt.s32.totalorder %v381, 0
  %v491 = vand.u32 %v381, 2139095040
  %v492 = vshrl.u32 %v491, 23
  %v493 = vsub.s32 %v492, 127
  %v494 = vand.u32 2147483647, %v381
  %v495 = vand.u32 %v494, 8388607
  %v496 = vor.u32 %v495, 8388608
  %v497 = vsub.s32 0, %v496
  %v498 = vadd.s32 %v493, 1
  %vm499 = vcmp.gt.s32.totalorder %v498, 0
  %v500 = vsel %vm499, %v498, 0
  %v501 = vshrl.u32 %v500, 5
  %v502 = vand.u32 %v500, 31
  %v503 = vsub.s32 32, %v502
  %v504 = vshrl.u32 683565275, %v503
  %v505 = vshll.u32 683565275, %v502
  %v506 = vshrl.u32 2475754826, %v503
  %v507 = vor.u32 %v505, %v506
  %v508 = vshll.u32 2475754826, %v502
  %v509 = vshrl.u32 2131351028, %v503
  %v510 = vor.u32 %v508, %v509
  %v511 = vshll.u32 2131351028, %v502
  %v512 = vshrl.u32 2102212464, %v503
  %v513 = vor.u32 %v511, %v512
  %v514 = vshll.u32 2102212464, %v502
  %v515 = vshrl.u32 920167782, %v503
  %v516 = vor.u32 %v514, %v515
  %v517 = vshll.u32 920167782, %v502
  %v518 = vshrl.u32 1326507024, %v503
  %v519 = vor.u32 %v517, %v518
  %vm520 = vcmp.lt.s32.totalorder %v501, 1
  %vm521 = vcmp.lt.s32.totalorder %v501, 2
  %vm522 = vcmp.lt.s32.totalorder %v501, 3
  %vm523 = vcmp.lt.s32.totalorder %v501, 4
  %v524 = vsel %vm520, %v504, %v507
  %v525 = vsel %vm523, %v513, 2102212464
  %v526 = vsel %vm522, %v510, %v525
  %v527 = vsel %vm521, %v524, %v526
  %v528 = vsel %vm520, %v507, %v510
  %v529 = vsel %vm523, %v516, 920167782
  %v530 = vsel %vm522, %v513, %v529
  %v531 = vsel %vm521, %v528, %v530
  %v532 = vsel %vm520, %v510, %v513
  %v533 = vsel %vm523, %v519, 1326507024
  %v534 = vsel %vm522, %v516, %v533
  %v535 = vsel %vm521, %v532, %v534
  %v536 = vshll.u32 %v496, 8
  %v537 = vmul.u32.u64.compose %v536, %v535
  %v538 = vextract.low.u32 %v537
  %v539 = vextract.high.u32 %v537
  %v540 = vmul.u32.u64.compose %v536, %v531
  %v541 = vextract.low.u32 %v540
  %v542 = vextract.high.u32 %v540
  %v543 = vmul.u32 %v536, %v527
  %v544 = vadd.s32 %v539, %v541
  %vm545 = vc.u32 %v539, %v541
  %v546 = vadd.s32 %v542, 1
  %v547 = vsel %vm545, %v546, %v542
  %v548 = vadd.s32 %v543, %v547
  %v549 = vadd.s32 %v548, 536870912
  %v550 = vshrl.u32 %v549, 30
  %v551 = vshll.u32 %v550, 30
  %v552 = vsub.s32 %v548, %v551
  %vm553 = vcmp.lt.s32.totalorder %v552, 0
  %v554 = vsub.s32 0, %v552
  %v555 = vsel %vm553, %v554, %v552
  %v556 = vclz %v555
  %v557 = vsub.s32 %v556, 2
  %vm558 = vcmp.gt.s32.totalorder 0, %v557
  %v559 = vsel %vm558, 0, %v557
  %v560 = vsub.s32 32, %v559
  %v561 = vshll.u32 %v552, %v559
  %v562 = vshrl.u32 %v544, %v560
  %v563 = vor.u32 %v561, %v562
  %v564 = vsub.s32 4294967266, %v559
  %v565 = vadd.s32 %v564, 127
  %v566 = vshll.u32 %v565, 23
  %v567 = vor.u32 4788187, %v566
  %v568 = vand.u32 2147483647, %v567
  %v570 = vcvt.s32.f32 %v563
  %v571 = vmul.f32 %v570, %v568
  %v572 = vxor.u32 %v571, 2147483648
  %v573 = vsel %vm490, %v572, %v571
  %v574 = vsub.s32 4, %v550
  %v575 = vsel %vm490, %v574, %v550
  %v576 = vsel %vm489, %v381, %v573
  %v577 = vsel %vm489, 0, %v575
  %v578 = vcosq.f32.pop %v576
  %v579 = vsinq.f32.pop %v576
  %vm580 = vweird.f32 %v381
  %v581 = vadd.s32 %v577, 3
  %v582 = vand.u32 %v581, 3
  %vm583 = vcmp.lt.s32.totalorder %v582, 2
  %vm584 = vcmp.eq.s32.totalorder %v582, 0
  %v585 = vxor.u32 %v579, 2147483648
  %v586 = vsel %vm584, %v578, %v585
  %vm587 = vcmp.eq.s32.totalorder %v582, 2
  %v588 = vxor.u32 %v578, 2147483648
  %v589 = vsel %vm587, %v588, %v579
  %v590 = vsel %vm583, %v586, %v589
  %v591 = vsel %vm580, nan, %v590
  %v592 = vand.u32 2147483647, %v382
  %vm593 = vcmp.le.f32.partialorder %v592, 0.7853982
  %vm594 = vcmp.lt.s32.totalorder %v382, 0
  %v595 = vand.u32 %v382, 2139095040
  %v596 = vshrl.u32 %v595, 23
  %v597 = vsub.s32 %v596, 127
  %v598 = vand.u32 2147483647, %v382
  %v599 = vand.u32 %v598, 8388607
  %v600 = vor.u32 %v599, 8388608
  %v601 = vsub.s32 0, %v600
  %v602 = vadd.s32 %v597, 1
  %vm603 = vcmp.gt.s32.totalorder %v602, 0
  %v604 = vsel %vm603, %v602, 0
  %v605 = vshrl.u32 %v604, 5
  %v606 = vand.u32 %v604, 31
  %v607 = vsub.s32 32, %v606
  %v608 = vshrl.u32 683565275, %v607
  %v609 = vshll.u32 683565275, %v606
  %v610 = vshrl.u32 2475754826, %v607
  %v611 = vor.u32 %v609, %v610
  %v612 = vshll.u32 2475754826, %v606
  %v613 = vshrl.u32 2131351028, %v607
  %v614 = vor.u32 %v612, %v613
  %v615 = vshll.u32 2131351028, %v606
  %v616 = vshrl.u32 2102212464, %v607
  %v617 = vor.u32 %v615, %v616
  %v618 = vshll.u32 2102212464, %v606
  %v619 = vshrl.u32 920167782, %v607
  %v620 = vor.u32 %v618, %v619
  %v621 = vshll.u32 920167782, %v606
  %v622 = vshrl.u32 1326507024, %v607
  %v623 = vor.u32 %v621, %v622
  %vm624 = vcmp.lt.s32.totalorder %v605, 1
  %vm625 = vcmp.lt.s32.totalorder %v605, 2
  %vm626 = vcmp.lt.s32.totalorder %v605, 3
  %vm627 = vcmp.lt.s32.totalorder %v605, 4
  %v628 = vsel %vm624, %v608, %v611
  %v629 = vsel %vm627, %v617, 2102212464
  %v630 = vsel %vm626, %v614, %v629
  %v631 = vsel %vm625, %v628, %v630
  %v632 = vsel %vm624, %v611, %v614
  %v633 = vsel %vm627, %v620, 920167782
  %v634 = vsel %vm626, %v617, %v633
  %v635 = vsel %vm625, %v632, %v634
  %v636 = vsel %vm624, %v614, %v617
  %v637 = vsel %vm627, %v623, 1326507024
  %v638 = vsel %vm626, %v620, %v637
  %v639 = vsel %vm625, %v636, %v638
  %v640 = vshll.u32 %v600, 8
  %v641 = vmul.u32.u64.compose %v640, %v639
  %v642 = vextract.low.u32 %v641
  %v643 = vextract.high.u32 %v641
  %v644 = vmul.u32.u64.compose %v640, %v635
  %v645 = vextract.low.u32 %v644
  %v646 = vextract.high.u32 %v644
  %v647 = vmul.u32 %v640, %v631
  %v648 = vadd.s32 %v643, %v645
  %vm649 = vc.u32 %v643, %v645
  %v650 = vadd.s32 %v646, 1
  %v651 = vsel %vm649, %v650, %v646
  %v652 = vadd.s32 %v647, %v651
  %v653 = vadd.s32 %v652, 536870912
  %v654 = vshrl.u32 %v653, 30
  %v655 = vshll.u32 %v654, 30
  %v656 = vsub.s32 %v652, %v655
  %vm657 = vcmp.lt.s32.totalorder %v656, 0
  %v658 = vsub.s32 0, %v656
  %v659 = vsel %vm657, %v658, %v656
  %v660 = vclz %v659
  %v661 = vsub.s32 %v660, 2
  %vm662 = vcmp.gt.s32.totalorder 0, %v661
  %v663 = vsel %vm662, 0, %v661
  %v664 = vsub.s32 32, %v663
  %v665 = vshll.u32 %v656, %v663
  %v666 = vshrl.u32 %v648, %v664
  %v667 = vor.u32 %v665, %v666
  %v668 = vsub.s32 4294967266, %v663
  %v669 = vadd.s32 %v668, 127
  %v670 = vshll.u32 %v669, 23
  %v671 = vor.u32 4788187, %v670
  %v672 = vand.u32 2147483647, %v671
  %v674 = vcvt.s32.f32 %v667
  %v675 = vmul.f32 %v674, %v672
  %v676 = vxor.u32 %v675, 2147483648
  %v677 = vsel %vm594, %v676, %v675
  %v678 = vsub.s32 4, %v654
  %v679 = vsel %vm594, %v678, %v654
  %v680 = vsel %vm593, %v382, %v677
  %v681 = vsel %vm593, 0, %v679
  %v682 = vcosq.f32.pop %v680
  %v683 = vsinq.f32.pop %v680
  %vm684 = vweird.f32 %v382
  %v685 = vadd.s32 %v681, 3
  %v686 = vand.u32 %v685, 3
  %vm687 = vcmp.lt.s32.totalorder %v686, 2
  %vm688 = vcmp.eq.s32.totalorder %v686, 0
  %v689 = vxor.u32 %v683, 2147483648
  %v690 = vsel %vm688, %v682, %v689
  %vm691 = vcmp.eq.s32.totalorder %v686, 2
  %v692 = vxor.u32 %v682, 2147483648
  %v693 = vsel %vm691, %v692, %v683
  %v694 = vsel %vm687, %v690, %v693
  %v695 = vsel %vm684, nan, %v694
  %v696 = vand.u32 2147483647, %v383
  %vm697 = vcmp.le.f32.partialorder %v696, 0.7853982
  %vm698 = vcmp.lt.s32.totalorder %v383, 0
  %v699 = vand.u32 %v383, 2139095040
  %v700 = vshrl.u32 %v699, 23
  %v701 = vsub.s32 %v700, 127
  %v702 = vand.u32 2147483647, %v383
  %v703 = vand.u32 %v702, 8388607
  %v704 = vor.u32 %v703, 8388608
  %v705 = vsub.s32 0, %v704
  %v706 = vadd.s32 %v701, 1
  %vm707 = vcmp.gt.s32.totalorder %v706, 0
  %v708 = vsel %vm707, %v706, 0
  %v709 = vshrl.u32 %v708, 5
  %v710 = vand.u32 %v708, 31
  %v711 = vsub.s32 32, %v710
  %v712 = vshrl.u32 683565275, %v711
  %v713 = vshll.u32 683565275, %v710
  %v714 = vshrl.u32 2475754826, %v711
  %v715 = vor.u32 %v713, %v714
  %v716 = vshll.u32 2475754826, %v710
  %v717 = vshrl.u32 2131351028, %v711
  %v718 = vor.u32 %v716, %v717
  %v719 = vshll.u32 2131351028, %v710
  %v720 = vshrl.u32 2102212464, %v711
  %v721 = vor.u32 %v719, %v720
  %v722 = vshll.u32 2102212464, %v710
  %v723 = vshrl.u32 920167782, %v711
  %v724 = vor.u32 %v722, %v723
  %v725 = vshll.u32 920167782, %v710
  %v726 = vshrl.u32 1326507024, %v711
  %v727 = vor.u32 %v725, %v726
  %vm728 = vcmp.lt.s32.totalorder %v709, 1
  %vm729 = vcmp.lt.s32.totalorder %v709, 2
  %vm730 = vcmp.lt.s32.totalorder %v709, 3
  %vm731 = vcmp.lt.s32.totalorder %v709, 4
  %v732 = vsel %vm728, %v712, %v715
  %v733 = vsel %vm731, %v721, 2102212464
  %v734 = vsel %vm730, %v718, %v733
  %v735 = vsel %vm729, %v732, %v734
  %v736 = vsel %vm728, %v715, %v718
  %v737 = vsel %vm731, %v724, 920167782
  %v738 = vsel %vm730, %v721, %v737
  %v739 = vsel %vm729, %v736, %v738
  %v740 = vsel %vm728, %v718, %v721
  %v741 = vsel %vm731, %v727, 1326507024
  %v742 = vsel %vm730, %v724, %v741
  %v743 = vsel %vm729, %v740, %v742
  %v744 = vshll.u32 %v704, 8
  %v745 = vmul.u32.u64.compose %v744, %v743
  %v746 = vextract.low.u32 %v745
  %v747 = vextract.high.u32 %v745
  %v748 = vmul.u32.u64.compose %v744, %v739
  %v749 = vextract.low.u32 %v748
  %v750 = vextract.high.u32 %v748
  %v751 = vmul.u32 %v744, %v735
  %v752 = vadd.s32 %v747, %v749
  %vm753 = vc.u32 %v747, %v749
  %v754 = vadd.s32 %v750, 1
  %v755 = vsel %vm753, %v754, %v750
  %v756 = vadd.s32 %v751, %v755
  %v757 = vadd.s32 %v756, 536870912
  %v758 = vshrl.u32 %v757, 30
  %v759 = vshll.u32 %v758, 30
  %v760 = vsub.s32 %v756, %v759
  %vm761 = vcmp.lt.s32.totalorder %v760, 0
  %v762 = vsub.s32 0, %v760
  %v763 = vsel %vm761, %v762, %v760
  %v764 = vclz %v763
  %v765 = vsub.s32 %v764, 2
  %vm766 = vcmp.gt.s32.totalorder 0, %v765
  %v767 = vsel %vm766, 0, %v765
  %v768 = vsub.s32 32, %v767
  %v769 = vshll.u32 %v760, %v767
  %v770 = vshrl.u32 %v752, %v768
  %v771 = vor.u32 %v769, %v770
  %v772 = vsub.s32 4294967266, %v767
  %v773 = vadd.s32 %v772, 127
  %v774 = vshll.u32 %v773, 23
  %v775 = vor.u32 4788187, %v774
  %v776 = vand.u32 2147483647, %v775
  %v778 = vcvt.s32.f32 %v771
  %v779 = vmul.f32 %v778, %v776
  %v780 = vxor.u32 %v779, 2147483648
  %v781 = vsel %vm698, %v780, %v779
  %v782 = vsub.s32 4, %v758
  %v783 = vsel %vm698, %v782, %v758
  %v784 = vsel %vm697, %v383, %v781
  %v785 = vsel %vm697, 0, %v783
  %v786 = vcosq.f32.pop %v784
  %v787 = vsinq.f32.pop %v784
  %vm788 = vweird.f32 %v383
  %v789 = vadd.s32 %v785, 3
  %v790 = vand.u32 %v789, 3
  %vm791 = vcmp.lt.s32.totalorder %v790, 2
  %vm792 = vcmp.eq.s32.totalorder %v790, 0
  %v793 = vxor.u32 %v787, 2147483648
  %v794 = vsel %vm792, %v786, %v793
  %vm795 = vcmp.eq.s32.totalorder %v790, 2
  %v796 = vxor.u32 %v786, 2147483648
  %v797 = vsel %vm795, %v796, %v787
  %v798 = vsel %vm791, %v794, %v797
  %v799 = vsel %vm788, nan, %v798
  %vm800 = vcmp.eq.f32.partialorder %v354, 0.0
  %v801 = vsel %vm800, 1, 0
  %v802 = vlaneseq
  %v803 = vshrl.u32 %v802, 7
  %v804 = vsub.s32 0, %v803
  %v805 = vrot.slane %v801, %v804
  %v806 = vlaneseq
  %v807 = vshrl.u32 %v806, 7
  %v808 = vsub.s32 1, %v807
  %v809 = vrot.slane %v801, %v808
  %vm810 = vcmp.eq.s32.totalorder %v805, 1
  %vm811 = vcmp.eq.s32.totalorder %v809, 1
  %v812 = vsel %vm810, 1.0, %v380
  %v813 = vsel %vm811, 1.0, %v381
  %v814 = vsel %vm810, 1.0, %v382
  %v815 = vsel %vm811, 1.0, %v383
  %v816 = vrcp.pop %v812
  %v817 = vmul.f32 %v487, %v816
  %v818 = vrcp.pop %v813
  %v819 = vmul.f32 %v591, %v818
  %v820 = vrcp.pop %v814
  %v821 = vmul.f32 %v695, %v820
  %v822 = vrcp.pop %v815
  %v823 = vmul.f32 %v799, %v822
  %v824 = vsel %vm810, 1.0, %v817
  %v825 = vsel %vm811, 1.0, %v819
  %v826 = vsel %vm810, 1.0, %v821
  %v827 = vsel %vm811, 1.0, %v823
  %v828 = vmul.f32 %v487, %v487
  %v829 = vmul.f32 %v591, %v591
  %v830 = vmul.f32 %v695, %v695
  %v831 = vmul.f32 %v799, %v799
  %v832 = vmul.f32 %v828, -0.6
  %v833 = vmul.f32 %v829, -0.6
  %v834 = vmul.f32 %v830, -0.6
  %v835 = vmul.f32 %v831, -0.6
  %v836 = vsub.f32 1.0, %v832
  %v837 = vsub.f32 1.0, %v833
  %v838 = vsub.f32 1.0, %v834
  %v839 = vsub.f32 1.0, %v835
  %v840 = vmul.f32 %v352, 0.032
  %v841 = vmul.f32 %v353, 0.032
  %v842 = vmul.f32 %v840, 3.1415927
  %v843 = vmul.f32 %v841, 3.1415927
  %v844 = vand.u32 2147483647, %v842
  %vm845 = vcmp.le.f32.partialorder %v844, 0.7853982
  %vm846 = vcmp.lt.s32.totalorder %v842, 0
  %v847 = vand.u32 %v842, 2139095040
  %v848 = vshrl.u32 %v847, 23
  %v849 = vsub.s32 %v848, 127
  %v850 = vand.u32 2147483647, %v842
  %v851 = vand.u32 %v850, 8388607
  %v852 = vor.u32 %v851, 8388608
  %v853 = vsub.s32 0, %v852
  %v854 = vadd.s32 %v849, 1
  %vm855 = vcmp.gt.s32.totalorder %v854, 0
  %v856 = vsel %vm855, %v854, 0
  %v857 = vshrl.u32 %v856, 5
  %v858 = vand.u32 %v856, 31
  %v859 = vsub.s32 32, %v858
  %v860 = vshrl.u32 683565275, %v859
  %v861 = vshll.u32 683565275, %v858
  %v862 = vshrl.u32 2475754826, %v859
  %v863 = vor.u32 %v861, %v862
  %v864 = vshll.u32 2475754826, %v858
  %v865 = vshrl.u32 2131351028, %v859
  %v866 = vor.u32 %v864, %v865
  %v867 = vshll.u32 2131351028, %v858
  %v868 = vshrl.u32 2102212464, %v859
  %v869 = vor.u32 %v867, %v868
  %v870 = vshll.u32 2102212464, %v858
  %v871 = vshrl.u32 920167782, %v859
  %v872 = vor.u32 %v870, %v871
  %v873 = vshll.u32 920167782, %v858
  %v874 = vshrl.u32 1326507024, %v859
  %v875 = vor.u32 %v873, %v874
  %vm876 = vcmp.lt.s32.totalorder %v857, 1
  %vm877 = vcmp.lt.s32.totalorder %v857, 2
  %vm878 = vcmp.lt.s32.totalorder %v857, 3
  %vm879 = vcmp.lt.s32.totalorder %v857, 4
  %v880 = vsel %vm876, %v860, %v863
  %v881 = vsel %vm879, %v869, 2102212464
  %v882 = vsel %vm878, %v866, %v881
  %v883 = vsel %vm877, %v880, %v882
  %v884 = vsel %vm876, %v863, %v866
  %v885 = vsel %vm879, %v872, 920167782
  %v886 = vsel %vm878, %v869, %v885
  %v887 = vsel %vm877, %v884, %v886
  %v888 = vsel %vm876, %v866, %v869
  %v889 = vsel %vm879, %v875, 1326507024
  %v890 = vsel %vm878, %v872, %v889
  %v891 = vsel %vm877, %v888, %v890
  %v892 = vshll.u32 %v852, 8
  %v893 = vmul.u32.u64.compose %v892, %v891
  %v894 = vextract.low.u32 %v893
  %v895 = vextract.high.u32 %v893
  %v896 = vmul.u32.u64.compose %v892, %v887
  %v897 = vextract.low.u32 %v896
  %v898 = vextract.high.u32 %v896
  %v899 = vmul.u32 %v892, %v883
  %v900 = vadd.s32 %v895, %v897
  %vm901 = vc.u32 %v895, %v897
  %v902 = vadd.s32 %v898, 1
  %v903 = vsel %vm901, %v902, %v898
  %v904 = vadd.s32 %v899, %v903
  %v905 = vadd.s32 %v904, 536870912
  %v906 = vshrl.u32 %v905, 30
  %v907 = vshll.u32 %v906, 30
  %v908 = vsub.s32 %v904, %v907
  %vm909 = vcmp.lt.s32.totalorder %v908, 0
  %v910 = vsub.s32 0, %v908
  %v911 = vsel %vm909, %v910, %v908
  %v912 = vclz %v911
  %v913 = vsub.s32 %v912, 2
  %vm914 = vcmp.gt.s32.totalorder 0, %v913
  %v915 = vsel %vm914, 0, %v913
  %v916 = vsub.s32 32, %v915
  %v917 = vshll.u32 %v908, %v915
  %v918 = vshrl.u32 %v900, %v916
  %v919 = vor.u32 %v917, %v918
  %v920 = vsub.s32 4294967266, %v915
  %v921 = vadd.s32 %v920, 127
  %v922 = vshll.u32 %v921, 23
  %v923 = vor.u32 4788187, %v922
  %v924 = vand.u32 2147483647, %v923
  %v926 = vcvt.s32.f32 %v919
  %v927 = vmul.f32 %v926, %v924
  %v928 = vxor.u32 %v927, 2147483648
  %v929 = vsel %vm846, %v928, %v927
  %v930 = vsub.s32 4, %v906
  %v931 = vsel %vm846, %v930, %v906
  %v932 = vsel %vm845, %v842, %v929
  %v933 = vsel %vm845, 0, %v931
  %v934 = vcosq.f32.pop %v932
  %v935 = vsinq.f32.pop %v932
  %vm936 = vweird.f32 %v842
  %v937 = vadd.s32 %v933, 3
  %v938 = vand.u32 %v937, 3
  %vm939 = vcmp.lt.s32.totalorder %v938, 2
  %vm940 = vcmp.eq.s32.totalorder %v938, 0
  %v941 = vxor.u32 %v935, 2147483648
  %v942 = vsel %vm940, %v934, %v941
  %vm943 = vcmp.eq.s32.totalorder %v938, 2
  %v944 = vxor.u32 %v934, 2147483648
  %v945 = vsel %vm943, %v944, %v935
  %v946 = vsel %vm939, %v942, %v945
  %v947 = vsel %vm936, nan, %v946
  %v948 = vand.u32 2147483647, %v843
  %vm949 = vcmp.le.f32.partialorder %v948, 0.7853982
  %vm950 = vcmp.lt.s32.totalorder %v843, 0
  %v951 = vand.u32 %v843, 2139095040
  %v952 = vshrl.u32 %v951, 23
  %v953 = vsub.s32 %v952, 127
  %v954 = vand.u32 2147483647, %v843
  %v955 = vand.u32 %v954, 8388607
  %v956 = vor.u32 %v955, 8388608
  %v957 = vsub.s32 0, %v956
  %v958 = vadd.s32 %v953, 1
  %vm959 = vcmp.gt.s32.totalorder %v958, 0
  %v960 = vsel %vm959, %v958, 0
  %v961 = vshrl.u32 %v960, 5
  %v962 = vand.u32 %v960, 31
  %v963 = vsub.s32 32, %v962
  %v964 = vshrl.u32 683565275, %v963
  %v965 = vshll.u32 683565275, %v962
  %v966 = vshrl.u32 2475754826, %v963
  %v967 = vor.u32 %v965, %v966
  %v968 = vshll.u32 2475754826, %v962
  %v969 = vshrl.u32 2131351028, %v963
  %v970 = vor.u32 %v968, %v969
  %v971 = vshll.u32 2131351028, %v962
  %v972 = vshrl.u32 2102212464, %v963
  %v973 = vor.u32 %v971, %v972
  %v974 = vshll.u32 2102212464, %v962
  %v975 = vshrl.u32 920167782, %v963
  %v976 = vor.u32 %v974, %v975
  %v977 = vshll.u32 920167782, %v962
  %v978 = vshrl.u32 1326507024, %v963
  %v979 = vor.u32 %v977, %v978
  %vm980 = vcmp.lt.s32.totalorder %v961, 1
  %vm981 = vcmp.lt.s32.totalorder %v961, 2
  %vm982 = vcmp.lt.s32.totalorder %v961, 3
  %vm983 = vcmp.lt.s32.totalorder %v961, 4
  %v984 = vsel %vm980, %v964, %v967
  %v985 = vsel %vm983, %v973, 2102212464
  %v986 = vsel %vm982, %v970, %v985
  %v987 = vsel %vm981, %v984, %v986
  %v988 = vsel %vm980, %v967, %v970
  %v989 = vsel %vm983, %v976, 920167782
  %v990 = vsel %vm982, %v973, %v989
  %v991 = vsel %vm981, %v988, %v990
  %v992 = vsel %vm980, %v970, %v973
  %v993 = vsel %vm983, %v979, 1326507024
  %v994 = vsel %vm982, %v976, %v993
  %v995 = vsel %vm981, %v992, %v994
  %v996 = vshll.u32 %v956, 8
  %v997 = vmul.u32.u64.compose %v996, %v995
  %v998 = vextract.low.u32 %v997
  %v999 = vextract.high.u32 %v997
  %v1000 = vmul.u32.u64.compose %v996, %v991
  %v1001 = vextract.low.u32 %v1000
  %v1002 = vextract.high.u32 %v1000
  %v1003 = vmul.u32 %v996, %v987
  %v1004 = vadd.s32 %v999, %v1001
  %vm1005 = vc.u32 %v999, %v1001
  %v1006 = vadd.s32 %v1002, 1
  %v1007 = vsel %vm1005, %v1006, %v1002
  %v1008 = vadd.s32 %v1003, %v1007
  %v1009 = vadd.s32 %v1008, 536870912
  %v1010 = vshrl.u32 %v1009, 30
  %v1011 = vshll.u32 %v1010, 30
  %v1012 = vsub.s32 %v1008, %v1011
  %vm1013 = vcmp.lt.s32.totalorder %v1012, 0
  %v1014 = vsub.s32 0, %v1012
  %v1015 = vsel %vm1013, %v1014, %v1012
  %v1016 = vclz %v1015
  %v1017 = vsub.s32 %v1016, 2
  %vm1018 = vcmp.gt.s32.totalorder 0, %v1017
  %v1019 = vsel %vm1018, 0, %v1017
  %v1020 = vsub.s32 32, %v1019
  %v1021 = vshll.u32 %v1012, %v1019
  %v1022 = vshrl.u32 %v1004, %v1020
  %v1023 = vor.u32 %v1021, %v1022
  %v1024 = vsub.s32 4294967266, %v1019
  %v1025 = vadd.s32 %v1024, 127
  %v1026 = vshll.u32 %v1025, 23
  %v1027 = vor.u32 4788187, %v1026
  %v1028 = vand.u32 2147483647, %v1027
  %v1030 = vcvt.s32.f32 %v1023
  %v1031 = vmul.f32 %v1030, %v1028
  %v1032 = vxor.u32 %v1031, 2147483648
  %v1033 = vsel %vm950, %v1032, %v1031
  %v1034 = vsub.s32 4, %v1010
  %v1035 = vsel %vm950, %v1034, %v1010
  %v1036 = vsel %vm949, %v843, %v1033
  %v1037 = vsel %vm949, 0, %v1035
  %v1038 = vcosq.f32.pop %v1036
  %v1039 = vsinq.f32.pop %v1036
  %vm1040 = vweird.f32 %v843
  %v1041 = vadd.s32 %v1037, 3
  %v1042 = vand.u32 %v1041, 3
  %vm1043 = vcmp.lt.s32.totalorder %v1042, 2
  %vm1044 = vcmp.eq.s32.totalorder %v1042, 0
  %v1045 = vxor.u32 %v1039, 2147483648
  %v1046 = vsel %vm1044, %v1038, %v1045
  %vm1047 = vcmp.eq.s32.totalorder %v1042, 2
  %v1048 = vxor.u32 %v1038, 2147483648
  %v1049 = vsel %vm1047, %v1048, %v1039
  %v1050 = vsel %vm1043, %v1046, %v1049
  %v1051 = vsel %vm1040, nan, %v1050
  %v1052 = vrcp.pop %v842
  %v1053 = vmul.f32 %v947, %v1052
  %v1054 = vrcp.pop %v843
  %v1055 = vmul.f32 %v1051, %v1054
  %v1056 = vmul.f32 %v947, %v947
  %v1057 = vmul.f32 %v1051, %v1051
  %v1058 = vmul.f32 %v1056, -0.6
  %v1059 = vmul.f32 %v1057, -0.6
  %v1060 = vsub.f32 1.0, %v1058
  %v1061 = vsub.f32 1.0, %v1059
  %v1062 = vmul.f32 %v319, %v824
  %v1063 = vmul.f32 %v321, %v825
  %v1064 = vmul.f32 %v323, %v826
  %v1065 = vmul.f32 %v325, %v827
  %v1066 = vmul.f32 %v1062, %v836
  %v1067 = vmul.f32 %v1063, %v837
  %v1068 = vmul.f32 %v1064, %v838
  %v1069 = vmul.f32 %v1065, %v839
  %v1070 = vmul.f32 %v350, %v1053
  %v1071 = vmul.f32 %v351, %v1055
  %v1072 = vmul.f32 %v1070, %v1060
  %v1073 = vmul.f32 %v1071, %v1061
  %v1074 = vpack.c.bf16 %v1068, %v1066
  %v1075 = vpack.c.bf16 %v1069, %v1067
  %v1076 = vld [vmem:[%s7] sm:$0xff]
  %v1077 = vld [vmem:[%s7 + $0x8] sm:$0xff]
  %v1078 = vld [vmem:[%s7 + $0x10] sm:$0xff]
  %v1079 = vld [vmem:[%s7 + $0x18] sm:$0xff]
  %v1080 = vld [vmem:[%s7 + $0x20] sm:$0xff]
  %v1081 = vld [vmem:[%s7 + $0x28] sm:$0xff]
  %v1082 = vld [vmem:[%s7 + $0x30] sm:$0xff]
  %v1083 = vld [vmem:[%s7 + $0x38] sm:$0xff]
  %v1084 = vld [vmem:[%s7 + $0x40] sm:$0xff]
  %v1085 = vld [vmem:[%s7 + $0x48] sm:$0xff]
  %v1086 = vld [vmem:[%s7 + $0x50] sm:$0xff]
  %v1087 = vld [vmem:[%s7 + $0x58] sm:$0xff]
  %v1088 = vld [vmem:[%s7 + $0x60] sm:$0xff]
  %v1089 = vld [vmem:[%s7 + $0x68] sm:$0xff]
  %v1090 = vld [vmem:[%s7 + $0x70] sm:$0xff]
  %v1091 = vld [vmem:[%s7 + $0x78] sm:$0xff]
  %v1092 = vld [vmem:[%s7 + $0x80] sm:$0xff]
  %v1093 = vld [vmem:[%s7 + $0x88] sm:$0xff]
  %v1094 = vld [vmem:[%s7 + $0x90] sm:$0xff]
  %v1095 = vld [vmem:[%s7 + $0x98] sm:$0xff]
  %v1096 = vld [vmem:[%s7 + $0xa0] sm:$0xff]
  %v1097 = vld [vmem:[%s7 + $0xa8] sm:$0xff]
  %v1098 = vld [vmem:[%s7 + $0xb0] sm:$0xff]
  %v1099 = vld [vmem:[%s7 + $0xb8] sm:$0xff]
  %v1100 = vld [vmem:[%s7 + $0xc0] sm:$0xff]
  %v1101 = vld [vmem:[%s7 + $0xc8] sm:$0xff]
  %v1102 = vld [vmem:[%s7 + $0xd0] sm:$0xff]
  %v1103 = vld [vmem:[%s7 + $0xd8] sm:$0xff]
  %v1104 = vld [vmem:[%s7 + $0xe0] sm:$0xff]
  %v1105 = vld [vmem:[%s7 + $0xe8] sm:$0xff]
  %v1106 = vld [vmem:[%s7 + $0xf0] sm:$0xff]
  %v1107 = vld [vmem:[%s7 + $0xf8] sm:$0xff]
  %1109 = vset.pattern.permute.xlu0 0
  %1110 = vperm.xlu0 %1109, %v1072
  %v1111 = vpop.permute.xlu0 %1110
  %1114 = vset.pattern.permute.xlu0 0
  %1115 = vperm.xlu0 %1114, %v1073
  %v1116 = vpop.permute.xlu0 %1115
  %v1118 = vmul.f32 %v1111, %v113
  %v1119 = vmul.f32 %v1111, %v117
  %v1120 = vmul.f32 %v1116, %v113
  %v1121 = vmul.f32 %v1116, %v117
  %v1154 = vunpack.c.l.b16 %v1076
  %v1155 = vunpack.c.h.b16 %v1076
  %v1156 = vunpack.c.l.b16 %v1077
  %v1157 = vunpack.c.h.b16 %v1077
  %v1158 = vunpack.c.l.b16 %v1078
  %v1159 = vunpack.c.h.b16 %v1078
  %v1160 = vunpack.c.l.b16 %v1079
  %v1161 = vunpack.c.h.b16 %v1079
  %v1162 = vunpack.c.l.b16 %v1080
  %v1163 = vunpack.c.h.b16 %v1080
  %v1164 = vunpack.c.l.b16 %v1081
  %v1165 = vunpack.c.h.b16 %v1081
  %v1166 = vunpack.c.l.b16 %v1082
  %v1167 = vunpack.c.h.b16 %v1082
  %v1168 = vunpack.c.l.b16 %v1083
  %v1169 = vunpack.c.h.b16 %v1083
  %v1170 = vunpack.c.l.b16 %v1084
  %v1171 = vunpack.c.h.b16 %v1084
  %v1172 = vunpack.c.l.b16 %v1085
  %v1173 = vunpack.c.h.b16 %v1085
  %v1174 = vunpack.c.l.b16 %v1086
  %v1175 = vunpack.c.h.b16 %v1086
  %v1176 = vunpack.c.l.b16 %v1087
  %v1177 = vunpack.c.h.b16 %v1087
  %v1178 = vunpack.c.l.b16 %v1088
  %v1179 = vunpack.c.h.b16 %v1088
  %v1180 = vunpack.c.l.b16 %v1089
  %v1181 = vunpack.c.h.b16 %v1089
  %v1182 = vunpack.c.l.b16 %v1090
  %v1183 = vunpack.c.h.b16 %v1090
  %v1184 = vunpack.c.l.b16 %v1091
  %v1185 = vunpack.c.h.b16 %v1091
  %v1186 = vunpack.c.l.b16 %v1092
  %v1187 = vunpack.c.h.b16 %v1092
  %v1188 = vunpack.c.l.b16 %v1093
  %v1189 = vunpack.c.h.b16 %v1093
  %v1190 = vunpack.c.l.b16 %v1094
  %v1191 = vunpack.c.h.b16 %v1094
  %v1192 = vunpack.c.l.b16 %v1095
  %v1193 = vunpack.c.h.b16 %v1095
  %v1194 = vunpack.c.l.b16 %v1096
  %v1195 = vunpack.c.h.b16 %v1096
  %v1196 = vunpack.c.l.b16 %v1097
  %v1197 = vunpack.c.h.b16 %v1097
  %v1198 = vunpack.c.l.b16 %v1098
  %v1199 = vunpack.c.h.b16 %v1098
  %v1200 = vunpack.c.l.b16 %v1099
  %v1201 = vunpack.c.h.b16 %v1099
  %v1202 = vunpack.c.l.b16 %v1100
  %v1203 = vunpack.c.h.b16 %v1100
  %v1204 = vunpack.c.l.b16 %v1101
  %v1205 = vunpack.c.h.b16 %v1101
  %v1206 = vunpack.c.l.b16 %v1102
  %v1207 = vunpack.c.h.b16 %v1102
  %v1208 = vunpack.c.l.b16 %v1103
  %v1209 = vunpack.c.h.b16 %v1103
  %v1210 = vunpack.c.l.b16 %v1104
  %v1211 = vunpack.c.h.b16 %v1104
  %v1212 = vunpack.c.l.b16 %v1105
  %v1213 = vunpack.c.h.b16 %v1105
  %v1214 = vunpack.c.l.b16 %v1106
  %v1215 = vunpack.c.h.b16 %v1106
  %v1216 = vunpack.c.l.b16 %v1107
  %v1217 = vunpack.c.h.b16 %v1107
  %v1218 = vpack.c.b16 %v1156, %v1154
  %v1219 = vpack.c.b16 %v1157, %v1155
  %v1220 = vpack.c.b16 %v1160, %v1158
  %v1221 = vpack.c.b16 %v1161, %v1159
  %v1222 = vpack.c.b16 %v1164, %v1162
  %v1223 = vpack.c.b16 %v1165, %v1163
  %v1224 = vpack.c.b16 %v1168, %v1166
  %v1225 = vpack.c.b16 %v1169, %v1167
  %v1226 = vpack.c.b16 %v1172, %v1170
  %v1227 = vpack.c.b16 %v1173, %v1171
  %v1228 = vpack.c.b16 %v1176, %v1174
  %v1229 = vpack.c.b16 %v1177, %v1175
  %v1230 = vpack.c.b16 %v1180, %v1178
  %v1231 = vpack.c.b16 %v1181, %v1179
  %v1232 = vpack.c.b16 %v1184, %v1182
  %v1233 = vpack.c.b16 %v1185, %v1183
  %v1234 = vpack.c.b16 %v1188, %v1186
  %v1235 = vpack.c.b16 %v1189, %v1187
  %v1236 = vpack.c.b16 %v1192, %v1190
  %v1237 = vpack.c.b16 %v1193, %v1191
  %v1238 = vpack.c.b16 %v1196, %v1194
  %v1239 = vpack.c.b16 %v1197, %v1195
  %v1240 = vpack.c.b16 %v1200, %v1198
  %v1241 = vpack.c.b16 %v1201, %v1199
  %v1242 = vpack.c.b16 %v1204, %v1202
  %v1243 = vpack.c.b16 %v1205, %v1203
  %v1244 = vpack.c.b16 %v1208, %v1206
  %v1245 = vpack.c.b16 %v1209, %v1207
  %v1246 = vpack.c.b16 %v1212, %v1210
  %v1247 = vpack.c.b16 %v1213, %v1211
  %v1248 = vpack.c.b16 %v1216, %v1214
  %v1249 = vpack.c.b16 %v1217, %v1215
  %1282 = vmatprep.subr.bf16.mxu0 %v1233
  %1283 = vmatpush1.bf16.msra.mxu0 %v1232
  %1284 = vmatprep.subr.bf16.mxu0 %v1231
  %1285 = vmatpush1.bf16.msra.mxu0 %v1230
  %1286 = vmatprep.subr.bf16.mxu0 %v1229
  %1287 = vmatpush1.bf16.msra.mxu0 %v1228
  %1288 = vmatprep.subr.bf16.mxu0 %v1227
  %1289 = vmatpush1.bf16.msra.mxu0 %v1226
  %1290 = vmatprep.subr.bf16.mxu0 %v1225
  %1291 = vmatpush1.bf16.msra.mxu0 %v1224
  %1292 = vmatprep.subr.bf16.mxu0 %v1223
  %1293 = vmatpush1.bf16.msra.mxu0 %v1222
  %1294 = vmatprep.subr.bf16.mxu0 %v1221
  %1295 = vmatpush1.bf16.msra.mxu0 %v1220
  %1296 = vmatprep.subr.bf16.mxu0 %v1219
  %1297 = vmatpush1.bf16.msra.mxu0 %v1218
  %1298 = vmatprep.subr.bf16.mxu0 %v1249
  %1299 = vmatpush2.bf16.msra.mxu0 %v1248
  %1300 = vmatprep.subr.bf16.mxu0 %v1247
  %1301 = vmatpush2.bf16.msra.mxu0 %v1246
  %1302 = vmatprep.subr.bf16.mxu0 %v1245
  %1303 = vmatpush2.bf16.msra.mxu0 %v1244
  %1304 = vmatprep.subr.bf16.mxu0 %v1243
  %1305 = vmatpush2.bf16.msra.mxu0 %v1242
  %1306 = vmatprep.subr.bf16.mxu0 %v1241
  %1307 = vmatpush2.bf16.msra.mxu0 %v1240
  %1308 = vmatprep.subr.bf16.mxu0 %v1239
  %1309 = vmatpush2.bf16.msra.mxu0 %v1238
  %1310 = vmatprep.subr.bf16.mxu0 %v1237
  %1311 = vmatpush2.bf16.msra.mxu0 %v1236
  %1312 = vmatprep.subr.bf16.mxu0 %v1235
  %1313 = vmatpush2.bf16.msra.mxu0 %v1234
  %1314 = vmatprep.mubr.bf16.mxu0 %v1075
  %1315 = vmatmul.mubr.bf16.gmra.mxu0 %v1074
  %v1316 = vpop.f32.mrf.mxu0
  %v1317 = vadd.f32 %v1118, %v1316
  %v1318 = vpop.f32.mrf.mxu0
  %v1319 = vadd.f32 %v1119, %v1318
  %v1320 = vpop.f32.mrf.mxu0
  %v1321 = vadd.f32 %v1120, %v1320
  %v1322 = vpop.f32.mrf.mxu0
  %v1323 = vadd.f32 %v1121, %v1322
  %1324 = vdwg.mxu0
  %1325 = vst [vmem:[%s8] sm:$0xff] %v1317
  %1326 = vst [vmem:[%s8 + $0x8] sm:$0xff] %v1319
  %1327 = vst [vmem:[%s8 + $0x10] sm:$0xff] %v1321
  %1328 = vst [vmem:[%s8 + $0x18] sm:$0xff] %v1323
  %v1329 = vmul.f32 %v1066, %v331
  %v1330 = vmul.f32 %v1067, %v335
  %v1331 = vmul.f32 %v1068, %v331
  %v1332 = vmul.f32 %v1069, %v335
  %v1333 = vadd.f32 %v1329, %v1330
  %1334 = vadd.xlane.f32.xlu0 %v1333
  %v1335 = vpop.xlane.xlu0 %1334
  %v1336 = vadd.f32 %v1331, %v1332
  %1337 = vadd.xlane.f32.xlu0 %v1336
  %v1338 = vpop.xlane.xlu0 %1337
  %v1339 = vadd.f32 %v1335, %v1072
  %v1340 = vadd.f32 %v1338, %v1073
  %vm1341 = vcmask 7168
  %1342 = vst.msk [vmem:[%s9] sm:$0xff] %vm1341, %v1339
  %1343 = vst.msk [vmem:[%s9 + $0x8] sm:$0xff] %vm1341, %v1340
  // Predicated region
  $region34: #{a_call__.3} parent=0 // pred_check
    _
  $region35: #{a_call__.3} parent=0 // pred_check_branch
    %1345 = sbr.rel (0) target = $region37
  $region36: #{a_call__.3} parent=0 // pred_region
    _
  $region37: #{a_call__.3} parent=0 // pred_fallthru
    _
  // Predicated region
  $region38: #{a_call__.3} parent=0 // pred_check
    _
  $region39: #{a_call__.3} parent=0 // pred_check_branch
    %1347 = sbr.rel (0) target = $region41
  $region40: #{a_call__.3} parent=0 // pred_region
    _
  $region41: #{a_call__.3} parent=0 // pred_fallthru
    _
  // Predicated region
  $region42: #{a_call__.3} parent=0 // pred_check
    _
  $region43: #{a_call__.3} parent=0 // pred_check_branch
    %1349 = sbr.rel (0) target = $region45
  $region44: #{a_call__.3} parent=0 // pred_region
    _
  $region45: #{a_call__.3} parent=0 // pred_fallthru
    _
  // Predicated region
  $region46: #{a_call__.3} parent=0 // pred_check
    _
  $region47: #{a_call__.3} parent=0 // pred_check_branch
    %1351 = sbr.rel (0) target = $region49
  $region48: #{a_call__.3} parent=0 // pred_region
    _
  $region49: #{a_call__.3} parent=0 // pred_fallthru
    _

</llo_original>
